<compile_context>
chip_gen: v7x
topology: tpu7x:2x2x1
jax: 0.10.0
libtpu: 0.0.40
codegen_flags: <defaults>
</compile_context>

<pallas_src>
import numpy as np
import jax
import jax.numpy as jnp
from jax.experimental import pallas as pl
from jax.experimental.pallas import tpu as pltpu


def decoder_block_kernel(x_ref, xh_ref, w1_ref, t1_ref, wa_ref, wb_ref,
                         t2_ref, w3_ref, t3_ref, o_ref):
    _, TH, W, Cin = x_ref.shape
    C = w1_ref.shape[1]          # (padded) Cmid
    Cout = w3_ref.shape[1]       # (padded) Cout
    M = TH * W
    f32 = jnp.float32
    bf16 = jnp.bfloat16

    w1 = w1_ref[...]
    t1 = t1_ref[...]

    # ---- conv1 (1x1, BN1 scale folded into w1) + ReLU -----------------------
    x = x_ref[0].reshape(M, Cin)                                    # bf16
    h1 = jnp.dot(x, w1, preferred_element_type=f32)
    h1 = jnp.maximum(h1 + t1, 0.0).astype(bf16)                     # (M, C)

    # halo: conv1 of the first row of the next row-tile.  Rows below the image
    # contribute nothing to the transposed conv, so zero the halo on the last
    # tile.  (Mask must be applied to h1h, not to x: zero input rows still
    # produce relu(t1) != 0.)  The last-tile matmul-skip via pl.when was
    # skipped on purpose: it needs a ref to write into and saves ~1/TH of one
    # conv1 on a single grid step.
    is_last = pl.program_id(1) == pl.num_programs(1) - 1
    xh = xh_ref[0, 0]                                               # (W, Cin)
    h1h = jnp.dot(xh, w1, preferred_element_type=f32)
    h1h = jnp.maximum(h1h + t1, 0.0)
    h1h = jnp.where(is_last, 0.0, h1h).astype(bf16)                 # (W, C)

    # row-shifted activation: value at (i+1, j); last W rows come from the halo
    # (no VMEM scratch round trip).
    h1_dn = jnp.concatenate([h1[W:], h1h], axis=0)                  # (M, C)

    # ---- ConvTranspose2d(3x3, s=2, p=1, op=1): two wide MXU matmuls ---------
    # BN2 scale is already folded into the wa/wb columns.
    m1 = jnp.dot(h1, wa_ref[...], preferred_element_type=f32)       # (M, 6C)
    m2 = jnp.dot(h1_dn, wb_ref[...], preferred_element_type=f32)    # (M, 3C)

    def shift_col(t):
        # value at (i, j+1); the j == W-1 column (outside the image) becomes 0.
        kc = t.shape[-1]
        t3 = t.reshape(TH, W, kc)
        z = jnp.zeros((TH, 1, kc), t.dtype)
        return jnp.concatenate([t3[:, 1:, :], z], axis=1).reshape(M, kc)

    # parity assembly (ee = even out-row / even out-col, etc.)
    ee = m1[:, 0 * C:1 * C]
    eo = m1[:, 1 * C:2 * C] + shift_col(m1[:, 4 * C:5 * C])
    oe = m1[:, 2 * C:3 * C] + m2[:, 0 * C:1 * C]
    oo = (m1[:, 3 * C:4 * C] + m2[:, 1 * C:2 * C]
          + shift_col(m1[:, 5 * C:6 * C] + m2[:, 2 * C:3 * C]))

    # ---- BN2 shift + ReLU, conv3 (1x1, BN3 scale folded), BN3 shift + ReLU --
    t2 = t2_ref[...]
    t3 = t3_ref[...]
    w3 = w3_ref[...]

    def head(p):
        a = jnp.maximum(p + t2, 0.0).astype(bf16)
        y = jnp.dot(a, w3, preferred_element_type=f32)
        return jnp.maximum(y + t3, 0.0).astype(bf16).reshape(TH, W, Cout)

    # store each parity straight into its (row-parity, col-parity) slot of the
    # output block (1, TH, 2, W, 2*Cout): dim 2 = output-row parity, lane
    # halves = output-column parity.  Lane-dense (Cout padded to 128) and no
    # concatenate temp; stored as bf16.
    o_ref[0, :, 0, :, :Cout] = head(ee)
    o_ref[0, :, 0, :, Cout:] = head(eo)
    o_ref[0, :, 1, :, :Cout] = head(oe)
    o_ref[0, :, 1, :, Cout:] = head(oo)


def decoder_block(x_nchw, params, *, tile_h=16, nchw_out=False):
    """DecoderBlock forward.  Input is NCHW (PyTorch layout); the result is
    returned in NHWC bf16 by default (identical values; set nchw_out=True for
    a drop-in NCHW layout at the cost of one extra transpose pass)."""
    w1, t1, wa, wb, t2, w3, t3 = (params["w1"], params["t1"], params["wa"],
                                  params["wb"], params["t2"], params["w3"],
                                  params["t3"])
    n_filters = params["n_filters"]
    N, Cin, H, W = x_nchw.shape
    Cmid = w1.shape[1]
    Cout = w3.shape[1]

    # largest divisor of H <= tile_h (never silently fall back to TH == H).
    TH = max(d for d in range(1, min(tile_h, H) + 1) if H % d == 0)
    nR = H // TH   # keep nR >= 2 on v7x (2 TensorCores) whenever H allows it

    # NCHW -> NHWC; bf16 MXU operands (accumulation stays f32 in-kernel).
    x = jnp.transpose(x_nchw, (0, 2, 3, 1)).astype(jnp.bfloat16)

    # halo rows: the first row of the next row-tile (dummy zeros for the last
    # tile; the kernel masks that tile's halo anyway).
    xh = jnp.concatenate(
        [x[:, TH::TH, :, :], jnp.zeros((N, 1, W, Cin), x.dtype)], axis=1)

    out_packed = pl.pallas_call(
        decoder_block_kernel,
        out_shape=jax.ShapeDtypeStruct((N, H, 2, W, 2 * Cout), jnp.bfloat16),
        grid=(N, nR),
        in_specs=[
            pl.BlockSpec((1, TH, W, Cin), lambda n, r: (n, r, 0, 0)),
            pl.BlockSpec((1, 1, W, Cin), lambda n, r: (n, r, 0, 0)),
            pl.BlockSpec((Cin, Cmid), lambda n, r: (0, 0)),
            pl.BlockSpec((1, Cmid), lambda n, r: (0, 0)),
            pl.BlockSpec((Cmid, 6 * Cmid), lambda n, r: (0, 0)),
            pl.BlockSpec((Cmid, 3 * Cmid), lambda n, r: (0, 0)),
            pl.BlockSpec((1, Cmid), lambda n, r: (0, 0)),
            pl.BlockSpec((Cmid, Cout), lambda n, r: (0, 0)),
            pl.BlockSpec((1, Cout), lambda n, r: (0, 0)),
        ],
        out_specs=pl.BlockSpec((1, TH, 2, W, 2 * Cout),
                               lambda n, r: (n, r, 0, 0, 0)),
        compiler_params=pltpu.CompilerParams(
            dimension_semantics=("parallel", "parallel"),
            vmem_limit_bytes=48 * 1024 * 1024,   # fits v7x's 64 MiB/TC
        ),
    )(x, xh, w1, t1, wa, wb, t2, w3, t3)

    # Free de-interleave: (N, H, 2, W, 2*Cout) is already output-row-major with
    # column parity packed on lanes, so one row-major reshape yields NHWC.
    out = out_packed.reshape(N, 2 * H, 2 * W, Cout)
    if Cout != n_filters:             # drop lane padding (small blocks only)
        out = out[..., :n_filters]
    if nchw_out:
        out = jnp.transpose(out, (0, 3, 1, 2))
    return out


def _round_up(n, m):
    return ((n + m - 1) // m) * m


def _pad_to(a, shape):
    return jnp.pad(a, [(0, s - d) for d, s in zip(a.shape, shape)])


def init_params(key, in_channels, n_filters, *, lane=128):
    Cmid = in_channels // 4
    eps = 1e-5
    ks = jax.random.split(key, 12)
    # PyTorch param shapes:
    W1 = 0.1 * jax.random.normal(ks[0], (Cmid, in_channels), jnp.float32)   # conv1 [out,in,1,1]
    b1 = 0.1 * jax.random.normal(ks[1], (Cmid,), jnp.float32)
    g1 = 1.0 + 0.1 * jax.random.normal(ks[2], (Cmid,), jnp.float32)
    be1 = 0.1 * jax.random.normal(ks[3], (Cmid,), jnp.float32)
    Wt = 0.1 * jax.random.normal(ks[4], (Cmid, Cmid, 3, 3), jnp.float32)    # deconv [in,out,kh,kw]
    b2 = 0.1 * jax.random.normal(ks[5], (Cmid,), jnp.float32)
    g2 = 1.0 + 0.1 * jax.random.normal(ks[6], (Cmid,), jnp.float32)
    be2 = 0.1 * jax.random.normal(ks[7], (Cmid,), jnp.float32)
    W3 = 0.1 * jax.random.normal(ks[8], (n_filters, Cmid), jnp.float32)     # conv3 [out,in,1,1]
    b3 = 0.1 * jax.random.normal(ks[9], (n_filters,), jnp.float32)
    g3 = 1.0 + 0.1 * jax.random.normal(ks[10], (n_filters,), jnp.float32)
    be3 = 0.1 * jax.random.normal(ks[11], (n_filters,), jnp.float32)

    raw = dict(W1=W1, b1=b1, g1=g1, be1=be1, Wt=Wt, b2=b2, g2=g2, be2=be2,
               W3=W3, b3=b3, g3=g3, be3=be3, eps=eps)

    # TODO(synk): eval-mode BatchNorm fold only; pass real running stats here.
    def fold(g, be, b, running_mean=0.0, running_var=1.0):
        s = g / jnp.sqrt(running_var + eps)
        return s, be + s * (b - running_mean)

    s1, t1 = fold(g1, be1, b1)
    s2, t2 = fold(g2, be2, b2)
    s3, t3 = fold(g3, be3, b3)

    # zero-pad channel dims to lane multiples so small (shallow) blocks get
    # lane-dense MXU passes and unmasked stores; padded channels are exactly
    # zero through the whole pipeline and are sliced off in the wrapper.
    Cp = _round_up(Cmid, lane)
    Op = _round_up(n_filters, lane)

    bf16 = jnp.bfloat16
    f32 = jnp.float32

    # tap order matches the kernel's parity assembly:
    #   wa: contributions from h1[i, j]      -> [W11|W12|W21|W22|W10|W20]
    #   wb: contributions from h1[i+1, j]    -> [W01|W02|W00]
    taps_a = [(1, 1), (1, 2), (2, 1), (2, 2), (1, 0), (2, 0)]
    taps_b = [(0, 1), (0, 2), (0, 0)]
    wa = jnp.concatenate([_pad_to(Wt[:, :, ky, kx] * s2[None, :], (Cp, Cp))
                          for ky, kx in taps_a], axis=1).astype(bf16)
    wb = jnp.concatenate([_pad_to(Wt[:, :, ky, kx] * s2[None, :], (Cp, Cp))
                          for ky, kx in taps_b], axis=1).astype(bf16)

    params = dict(
        w1=_pad_to(W1.T * s1[None, :], (in_channels, Cp)).astype(bf16),   # s1 folded
        t1=_pad_to(t1[None, :], (1, Cp)).astype(f32),
        wa=wa, wb=wb,
        t2=_pad_to(t2[None, :], (1, Cp)).astype(f32),
        w3=_pad_to(W3.T * s3[None, :], (Cp, Op)).astype(bf16),            # s3 folded
        t3=_pad_to(t3[None, :], (1, Op)).astype(f32),
        n_filters=n_filters,
    )
    return params, raw


def reference_forward(x_nchw, raw):
    """Pure numpy reference of the PyTorch forward (eval-mode BN)."""
    x = np.asarray(x_nchw, np.float32)
    eps = raw["eps"]

    def bn(h, g, be):
        return np.asarray(g)[None, :, None, None] * h / np.sqrt(1.0 + eps) \
            + np.asarray(be)[None, :, None, None]

    relu = lambda h: np.maximum(h, 0.0)

    h = np.einsum("nchw,oc->nohw", x, np.asarray(raw["W1"])) \
        + np.asarray(raw["b1"])[None, :, None, None]
    h = relu(bn(h, raw["g1"], raw["be1"]))

    Wt = np.asarray(raw["Wt"])
    N, Ci, H, W = h.shape
    Co = Wt.shape[1]
    out = np.zeros((N, Co, 2 * H, 2 * W), np.float32)
    for ky in range(3):
        for kx in range(3):
            contrib = np.einsum("nihw,io->nohw", h, Wt[:, :, ky, kx])
            for iy in range(H):
                oy = 2 * iy - 1 + ky
                if not (0 <= oy < 2 * H):
                    continue
                for ix in range(W):
                    ox = 2 * ix - 1 + kx
                    if not (0 <= ox < 2 * W):
                        continue
                    out[:, :, oy, ox] += contrib[:, :, iy, ix]
    out = out + np.asarray(raw["b2"])[None, :, None, None]
    h = relu(bn(out, raw["g2"], raw["be2"]))

    h = np.einsum("nchw,oc->nohw", h, np.asarray(raw["W3"])) \
        + np.asarray(raw["b3"])[None, :, None, None]
    h = relu(bn(h, raw["g3"], raw["be3"]))
    return h


if __name__ == "__main__":
    in_channels, n_filters = 16, 8
    N, H, W = 2, 16, 16

    key = jax.random.PRNGKey(0)
    kx, kp = jax.random.split(key)
    x = jax.random.normal(kx, (N, in_channels, H, W), jnp.float32)  # NCHW like PyTorch
    params, raw = init_params(kp, in_channels, n_filters)

    out = decoder_block(x, params)                  # NHWC bf16 (fast path)
    out = jax.block_until_ready(out)
    assert out.shape == (N, 2 * H, 2 * W, n_filters)

    ref = reference_forward(x, raw)                 # NCHW f32
    ref_nhwc = np.transpose(ref, (0, 2, 3, 1))
    out_f32 = np.asarray(out.astype(jnp.float32))
    # bf16 MXU operands + bf16 output storage -> loosened tolerance.
    np.testing.assert_allclose(out_f32, ref_nhwc, rtol=5e-2, atol=5e-2)

    print("KERNEL_OK")
</pallas_src>

<mosaic_0001>
module attributes {stable_mosaic.version = 11 : i64} {
  func.func @decoder_block_kernel(%arg0: i32, %arg1: i32, %arg2: memref<1x16x16x16xbf16, #tpu.memory_space<vmem>>, %arg3: memref<1x1x16x16xbf16, #tpu.memory_space<vmem>>, %arg4: memref<16x128xbf16, #tpu.memory_space<vmem>>, %arg5: memref<1x128xf32, #tpu.memory_space<vmem>>, %arg6: memref<128x768xbf16, #tpu.memory_space<vmem>>, %arg7: memref<128x384xbf16, #tpu.memory_space<vmem>>, %arg8: memref<1x128xf32, #tpu.memory_space<vmem>>, %arg9: memref<128x128xbf16, #tpu.memory_space<vmem>>, %arg10: memref<1x128xf32, #tpu.memory_space<vmem>>, %arg11: memref<1x16x2x16x256xbf16, #tpu.memory_space<vmem>>) attributes {dimension_semantics = [#tpu.dimension_semantics<parallel>, #tpu.dimension_semantics<parallel>], iteration_bounds = array<i64: 2, 1>, scalar_prefetch = 0 : i64, scratch_operands = 0 : i64, tpu.core_type = #tpu.core_type<tc>, window_params = [{transform_indices = @transform_0, window_bounds = array<i64: 1, 16, 16, 16>}, {transform_indices = @transform_1, window_bounds = array<i64: 1, 1, 16, 16>}, {pipeline_mode = #tpu.pipeline_mode<synchronous>, transform_indices = @transform_2, window_bounds = array<i64: 16, 128>}, {pipeline_mode = #tpu.pipeline_mode<synchronous>, transform_indices = @transform_3, window_bounds = array<i64: 1, 128>}, {pipeline_mode = #tpu.pipeline_mode<synchronous>, transform_indices = @transform_4, window_bounds = array<i64: 128, 768>}, {pipeline_mode = #tpu.pipeline_mode<synchronous>, transform_indices = @transform_5, window_bounds = array<i64: 128, 384>}, {pipeline_mode = #tpu.pipeline_mode<synchronous>, transform_indices = @transform_6, window_bounds = array<i64: 1, 128>}, {pipeline_mode = #tpu.pipeline_mode<synchronous>, transform_indices = @transform_7, window_bounds = array<i64: 128, 128>}, {pipeline_mode = #tpu.pipeline_mode<synchronous>, transform_indices = @transform_8, window_bounds = array<i64: 1, 128>}, {transform_indices = @transform_9, window_bounds = array<i64: 1, 16, 2, 16, 256>}]} {
    %c0 = arith.constant 0 : index
    %c0_0 = arith.constant 0 : index
    %0 = vector.load %arg4[%c0, %c0_0] : memref<16x128xbf16, #tpu.memory_space<vmem>>, vector<16x128xbf16>
    %c0_1 = arith.constant 0 : index
    %c0_2 = arith.constant 0 : index
    %1 = vector.load %arg5[%c0_1, %c0_2] : memref<1x128xf32, #tpu.memory_space<vmem>>, vector<1x128xf32>
    %c0_3 = arith.constant 0 : index
    %c0_4 = arith.constant 0 : index
    %c0_5 = arith.constant 0 : index
    %c0_6 = arith.constant 0 : index
    %2 = vector.load %arg2[%c0_3, %c0_4, %c0_5, %c0_6] : memref<1x16x16x16xbf16, #tpu.memory_space<vmem>>, vector<1x16x16x16xbf16>
    %3 = vector.shape_cast %2 : vector<1x16x16x16xbf16> to vector<16x16x16xbf16>
    %4 = vector.shape_cast %3 : vector<16x16x16xbf16> to vector<256x16xbf16>
    %cst = arith.constant dense<0.000000e+00> : vector<256x128xf32>
    %5 = tpu.matmul %4, %0, %cst {dimension_numbers = #tpu.dot_dimension_numbers<[1], [0], [0], [1], [0, 0, 1, 1], [], []>} : vector<256x16xbf16>, vector<16x128xbf16>, vector<256x128xf32> -> vector<256x128xf32>
    %6 = vector.broadcast %1 : vector<1x128xf32> to vector<256x128xf32>
    %7 = arith.addf %5, %6 : vector<256x128xf32>
    %cst_7 = arith.constant 0.000000e+00 : f32
    %8 = vector.broadcast %cst_7 : f32 to vector<256x128xf32>
    %9 = arith.maximumf %7, %8 : vector<256x128xf32>
    %10 = arith.truncf %9 : vector<256x128xf32> to vector<256x128xbf16>
    %c0_i32 = arith.constant 0 : i32
    %11 = arith.cmpi eq, %arg1, %c0_i32 : i32
    %c0_8 = arith.constant 0 : index
    %c0_9 = arith.constant 0 : index
    %c0_10 = arith.constant 0 : index
    %c0_11 = arith.constant 0 : index
    %12 = vector.load %arg3[%c0_8, %c0_9, %c0_10, %c0_11] : memref<1x1x16x16xbf16, #tpu.memory_space<vmem>>, vector<1x1x16x16xbf16>
    %13 = vector.shape_cast %12 : vector<1x1x16x16xbf16> to vector<16x16xbf16>
    %cst_12 = arith.constant dense<0.000000e+00> : vector<16x128xf32>
    %14 = tpu.matmul %13, %0, %cst_12 {dimension_numbers = #tpu.dot_dimension_numbers<[1], [0], [0], [1], [0, 0, 1, 1], [], []>} : vector<16x16xbf16>, vector<16x128xbf16>, vector<16x128xf32> -> vector<16x128xf32>
    %15 = vector.broadcast %1 : vector<1x128xf32> to vector<16x128xf32>
    %16 = arith.addf %14, %15 : vector<16x128xf32>
    %cst_13 = arith.constant 0.000000e+00 : f32
    %17 = vector.broadcast %cst_13 : f32 to vector<16x128xf32>
    %18 = arith.maximumf %16, %17 : vector<16x128xf32>
    %cst_14 = arith.constant 0.000000e+00 : f32
    %19 = vector.broadcast %cst_14 : f32 to vector<16x128xf32>
    %20 = arith.select %11, %19, %18 : vector<16x128xf32>
    %21 = arith.truncf %20 : vector<16x128xf32> to vector<16x128xbf16>
    %22 = vector.extract_strided_slice %10 {offsets = [16, 0], sizes = [240, 128], strides = [1, 1]} : vector<256x128xbf16> to vector<240x128xbf16>
    %23 = tpu.concatenate %22, %21 in 0 : vector<240x128xbf16>, vector<16x128xbf16> -> vector<256x128xbf16>
    %c0_15 = arith.constant 0 : index
    %c0_16 = arith.constant 0 : index
    %24 = vector.load %arg6[%c0_15, %c0_16] : memref<128x768xbf16, #tpu.memory_space<vmem>>, vector<128x768xbf16>
    %cst_17 = arith.constant dense<0.000000e+00> : vector<256x768xf32>
    %25 = tpu.matmul %10, %24, %cst_17 {dimension_numbers = #tpu.dot_dimension_numbers<[1], [0], [0], [1], [0, 0, 1, 1], [], []>} : vector<256x128xbf16>, vector<128x768xbf16>, vector<256x768xf32> -> vector<256x768xf32>
    %c0_18 = arith.constant 0 : index
    %c0_19 = arith.constant 0 : index
    %26 = vector.load %arg7[%c0_18, %c0_19] : memref<128x384xbf16, #tpu.memory_space<vmem>>, vector<128x384xbf16>
    %cst_20 = arith.constant dense<0.000000e+00> : vector<256x384xf32>
    %27 = tpu.matmul %23, %26, %cst_20 {dimension_numbers = #tpu.dot_dimension_numbers<[1], [0], [0], [1], [0, 0, 1, 1], [], []>} : vector<256x128xbf16>, vector<128x384xbf16>, vector<256x384xf32> -> vector<256x384xf32>
    %28 = vector.extract_strided_slice %25 {offsets = [0, 0], sizes = [256, 128], strides = [1, 1]} : vector<256x768xf32> to vector<256x128xf32>
    %29 = vector.extract_strided_slice %25 {offsets = [0, 128], sizes = [256, 128], strides = [1, 1]} : vector<256x768xf32> to vector<256x128xf32>
    %30 = vector.extract_strided_slice %25 {offsets = [0, 512], sizes = [256, 128], strides = [1, 1]} : vector<256x768xf32> to vector<256x128xf32>
    %31 = vector.shape_cast %30 : vector<256x128xf32> to vector<16x16x128xf32>
    %cst_21 = arith.constant 0.000000e+00 : f32
    %32 = vector.broadcast %cst_21 : f32 to vector<16x1x128xf32>
    %33 = vector.extract_strided_slice %31 {offsets = [0, 1, 0], sizes = [16, 15, 128], strides = [1, 1, 1]} : vector<16x16x128xf32> to vector<16x15x128xf32>
    %34 = tpu.concatenate %33, %32 in 1 : vector<16x15x128xf32>, vector<16x1x128xf32> -> vector<16x16x128xf32>
    %35 = vector.shape_cast %34 : vector<16x16x128xf32> to vector<256x128xf32>
    %36 = arith.addf %29, %35 : vector<256x128xf32>
    %37 = vector.extract_strided_slice %25 {offsets = [0, 256], sizes = [256, 128], strides = [1, 1]} : vector<256x768xf32> to vector<256x128xf32>
    %38 = vector.extract_strided_slice %27 {offsets = [0, 0], sizes = [256, 128], strides = [1, 1]} : vector<256x384xf32> to vector<256x128xf32>
    %39 = arith.addf %37, %38 : vector<256x128xf32>
    %40 = vector.extract_strided_slice %25 {offsets = [0, 384], sizes = [256, 128], strides = [1, 1]} : vector<256x768xf32> to vector<256x128xf32>
    %41 = vector.extract_strided_slice %27 {offsets = [0, 128], sizes = [256, 128], strides = [1, 1]} : vector<256x384xf32> to vector<256x128xf32>
    %42 = arith.addf %40, %41 : vector<256x128xf32>
    %43 = vector.extract_strided_slice %25 {offsets = [0, 640], sizes = [256, 128], strides = [1, 1]} : vector<256x768xf32> to vector<256x128xf32>
    %44 = vector.extract_strided_slice %27 {offsets = [0, 256], sizes = [256, 128], strides = [1, 1]} : vector<256x384xf32> to vector<256x128xf32>
    %45 = arith.addf %43, %44 : vector<256x128xf32>
    %46 = vector.shape_cast %45 : vector<256x128xf32> to vector<16x16x128xf32>
    %cst_22 = arith.constant 0.000000e+00 : f32
    %47 = vector.broadcast %cst_22 : f32 to vector<16x1x128xf32>
    %48 = vector.extract_strided_slice %46 {offsets = [0, 1, 0], sizes = [16, 15, 128], strides = [1, 1, 1]} : vector<16x16x128xf32> to vector<16x15x128xf32>
    %49 = tpu.concatenate %48, %47 in 1 : vector<16x15x128xf32>, vector<16x1x128xf32> -> vector<16x16x128xf32>
    %50 = vector.shape_cast %49 : vector<16x16x128xf32> to vector<256x128xf32>
    %51 = arith.addf %42, %50 : vector<256x128xf32>
    %c0_23 = arith.constant 0 : index
    %c0_24 = arith.constant 0 : index
    %52 = vector.load %arg8[%c0_23, %c0_24] : memref<1x128xf32, #tpu.memory_space<vmem>>, vector<1x128xf32>
    %c0_25 = arith.constant 0 : index
    %c0_26 = arith.constant 0 : index
    %53 = vector.load %arg10[%c0_25, %c0_26] : memref<1x128xf32, #tpu.memory_space<vmem>>, vector<1x128xf32>
    %c0_27 = arith.constant 0 : index
    %c0_28 = arith.constant 0 : index
    %54 = vector.load %arg9[%c0_27, %c0_28] : memref<128x128xbf16, #tpu.memory_space<vmem>>, vector<128x128xbf16>
    %55 = vector.broadcast %52 : vector<1x128xf32> to vector<256x128xf32>
    %56 = arith.addf %28, %55 : vector<256x128xf32>
    %cst_29 = arith.constant 0.000000e+00 : f32
    %57 = vector.broadcast %cst_29 : f32 to vector<256x128xf32>
    %58 = arith.maximumf %56, %57 : vector<256x128xf32>
    %59 = arith.truncf %58 : vector<256x128xf32> to vector<256x128xbf16>
    %cst_30 = arith.constant dense<0.000000e+00> : vector<256x128xf32>
    %60 = tpu.matmul %59, %54, %cst_30 {dimension_numbers = #tpu.dot_dimension_numbers<[1], [0], [0], [1], [0, 0, 1, 1], [], []>} : vector<256x128xbf16>, vector<128x128xbf16>, vector<256x128xf32> -> vector<256x128xf32>
    %61 = vector.broadcast %53 : vector<1x128xf32> to vector<256x128xf32>
    %62 = arith.addf %60, %61 : vector<256x128xf32>
    %cst_31 = arith.constant 0.000000e+00 : f32
    %63 = vector.broadcast %cst_31 : f32 to vector<256x128xf32>
    %64 = arith.maximumf %62, %63 : vector<256x128xf32>
    %65 = arith.truncf %64 : vector<256x128xf32> to vector<256x128xbf16>
    %66 = vector.shape_cast %65 : vector<256x128xbf16> to vector<16x16x128xbf16>
    %c0_32 = arith.constant 0 : index
    %c0_33 = arith.constant 0 : index
    %c0_34 = arith.constant 0 : index
    %c0_35 = arith.constant 0 : index
    %c0_36 = arith.constant 0 : index
    %67 = vector.load %arg11[%c0_32, %c0_33, %c0_34, %c0_35, %c0_36] : memref<1x16x2x16x256xbf16, #tpu.memory_space<vmem>>, vector<1x16x1x16x128xbf16>
    %68 = vector.shape_cast %67 : vector<1x16x1x16x128xbf16> to vector<16x16x128xbf16>
    %69 = vector.shape_cast %66 : vector<16x16x128xbf16> to vector<1x16x1x16x128xbf16>
    tpu.vector_store %arg11[%c0_32, %c0_33, %c0_34, %c0_35, %c0_36], %69 {strides = array<i32>} : memref<1x16x2x16x256xbf16, #tpu.memory_space<vmem>>, vector<1x16x1x16x128xbf16>,
    %70 = vector.broadcast %52 : vector<1x128xf32> to vector<256x128xf32>
    %71 = arith.addf %36, %70 : vector<256x128xf32>
    %cst_37 = arith.constant 0.000000e+00 : f32
    %72 = vector.broadcast %cst_37 : f32 to vector<256x128xf32>
    %73 = arith.maximumf %71, %72 : vector<256x128xf32>
    %74 = arith.truncf %73 : vector<256x128xf32> to vector<256x128xbf16>
    %cst_38 = arith.constant dense<0.000000e+00> : vector<256x128xf32>
    %75 = tpu.matmul %74, %54, %cst_38 {dimension_numbers = #tpu.dot_dimension_numbers<[1], [0], [0], [1], [0, 0, 1, 1], [], []>} : vector<256x128xbf16>, vector<128x128xbf16>, vector<256x128xf32> -> vector<256x128xf32>
    %76 = vector.broadcast %53 : vector<1x128xf32> to vector<256x128xf32>
    %77 = arith.addf %75, %76 : vector<256x128xf32>
    %cst_39 = arith.constant 0.000000e+00 : f32
    %78 = vector.broadcast %cst_39 : f32 to vector<256x128xf32>
    %79 = arith.maximumf %77, %78 : vector<256x128xf32>
    %80 = arith.truncf %79 : vector<256x128xf32> to vector<256x128xbf16>
    %81 = vector.shape_cast %80 : vector<256x128xbf16> to vector<16x16x128xbf16>
    %c0_40 = arith.constant 0 : index
    %c0_41 = arith.constant 0 : index
    %c0_42 = arith.constant 0 : index
    %c0_43 = arith.constant 0 : index
    %c128 = arith.constant 128 : index
    %82 = vector.load %arg11[%c0_40, %c0_41, %c0_42, %c0_43, %c128] : memref<1x16x2x16x256xbf16, #tpu.memory_space<vmem>>, vector<1x16x1x16x128xbf16>
    %83 = vector.shape_cast %82 : vector<1x16x1x16x128xbf16> to vector<16x16x128xbf16>
    %84 = vector.shape_cast %81 : vector<16x16x128xbf16> to vector<1x16x1x16x128xbf16>
    tpu.vector_store %arg11[%c0_40, %c0_41, %c0_42, %c0_43, %c128], %84 {strides = array<i32>} : memref<1x16x2x16x256xbf16, #tpu.memory_space<vmem>>, vector<1x16x1x16x128xbf16>,
    %85 = vector.broadcast %52 : vector<1x128xf32> to vector<256x128xf32>
    %86 = arith.addf %39, %85 : vector<256x128xf32>
    %cst_44 = arith.constant 0.000000e+00 : f32
    %87 = vector.broadcast %cst_44 : f32 to vector<256x128xf32>
    %88 = arith.maximumf %86, %87 : vector<256x128xf32>
    %89 = arith.truncf %88 : vector<256x128xf32> to vector<256x128xbf16>
    %cst_45 = arith.constant dense<0.000000e+00> : vector<256x128xf32>
    %90 = tpu.matmul %89, %54, %cst_45 {dimension_numbers = #tpu.dot_dimension_numbers<[1], [0], [0], [1], [0, 0, 1, 1], [], []>} : vector<256x128xbf16>, vector<128x128xbf16>, vector<256x128xf32> -> vector<256x128xf32>
    %91 = vector.broadcast %53 : vector<1x128xf32> to vector<256x128xf32>
    %92 = arith.addf %90, %91 : vector<256x128xf32>
    %cst_46 = arith.constant 0.000000e+00 : f32
    %93 = vector.broadcast %cst_46 : f32 to vector<256x128xf32>
    %94 = arith.maximumf %92, %93 : vector<256x128xf32>
    %95 = arith.truncf %94 : vector<256x128xf32> to vector<256x128xbf16>
    %96 = vector.shape_cast %95 : vector<256x128xbf16> to vector<16x16x128xbf16>
    %c0_47 = arith.constant 0 : index
    %c0_48 = arith.constant 0 : index
    %c1 = arith.constant 1 : index
    %c0_49 = arith.constant 0 : index
    %c0_50 = arith.constant 0 : index
    %97 = vector.load %arg11[%c0_47, %c0_48, %c1, %c0_49, %c0_50] : memref<1x16x2x16x256xbf16, #tpu.memory_space<vmem>>, vector<1x16x1x16x128xbf16>
    %98 = vector.shape_cast %97 : vector<1x16x1x16x128xbf16> to vector<16x16x128xbf16>
    %99 = vector.shape_cast %96 : vector<16x16x128xbf16> to vector<1x16x1x16x128xbf16>
    tpu.vector_store %arg11[%c0_47, %c0_48, %c1, %c0_49, %c0_50], %99 {strides = array<i32>} : memref<1x16x2x16x256xbf16, #tpu.memory_space<vmem>>, vector<1x16x1x16x128xbf16>,
    %100 = vector.broadcast %52 : vector<1x128xf32> to vector<256x128xf32>
    %101 = arith.addf %51, %100 : vector<256x128xf32>
    %cst_51 = arith.constant 0.000000e+00 : f32
    %102 = vector.broadcast %cst_51 : f32 to vector<256x128xf32>
    %103 = arith.maximumf %101, %102 : vector<256x128xf32>
    %104 = arith.truncf %103 : vector<256x128xf32> to vector<256x128xbf16>
    %cst_52 = arith.constant dense<0.000000e+00> : vector<256x128xf32>
    %105 = tpu.matmul %104, %54, %cst_52 {dimension_numbers = #tpu.dot_dimension_numbers<[1], [0], [0], [1], [0, 0, 1, 1], [], []>} : vector<256x128xbf16>, vector<128x128xbf16>, vector<256x128xf32> -> vector<256x128xf32>
    %106 = vector.broadcast %53 : vector<1x128xf32> to vector<256x128xf32>
    %107 = arith.addf %105, %106 : vector<256x128xf32>
    %cst_53 = arith.constant 0.000000e+00 : f32
    %108 = vector.broadcast %cst_53 : f32 to vector<256x128xf32>
    %109 = arith.maximumf %107, %108 : vector<256x128xf32>
    %110 = arith.truncf %109 : vector<256x128xf32> to vector<256x128xbf16>
    %111 = vector.shape_cast %110 : vector<256x128xbf16> to vector<16x16x128xbf16>
    %c0_54 = arith.constant 0 : index
    %c0_55 = arith.constant 0 : index
    %c1_56 = arith.constant 1 : index
    %c0_57 = arith.constant 0 : index
    %c128_58 = arith.constant 128 : index
    %112 = vector.load %arg11[%c0_54, %c0_55, %c1_56, %c0_57, %c128_58] : memref<1x16x2x16x256xbf16, #tpu.memory_space<vmem>>, vector<1x16x1x16x128xbf16>
    %113 = vector.shape_cast %112 : vector<1x16x1x16x128xbf16> to vector<16x16x128xbf16>
    %114 = vector.shape_cast %111 : vector<16x16x128xbf16> to vector<1x16x1x16x128xbf16>
    tpu.vector_store %arg11[%c0_54, %c0_55, %c1_56, %c0_57, %c128_58], %114 {strides = array<i32>} : memref<1x16x2x16x256xbf16, #tpu.memory_space<vmem>>, vector<1x16x1x16x128xbf16>,
    return
  }
  func.func @transform_0(%arg0: i32, %arg1: i32) -> (i32, i32, i32, i32) {
    %c0_i32 = arith.constant 0 : i32
    %c0_i32_0 = arith.constant 0 : i32
    %c0_i32_1 = arith.constant 0 : i32
    return %arg0, %arg1, %c0_i32, %c0_i32_0 : i32, i32, i32, i32
  }
  func.func @transform_1(%arg0: i32, %arg1: i32) -> (i32, i32, i32, i32) {
    %c0_i32 = arith.constant 0 : i32
    %c0_i32_0 = arith.constant 0 : i32
    %c0_i32_1 = arith.constant 0 : i32
    return %arg0, %arg1, %c0_i32, %c0_i32_0 : i32, i32, i32, i32
  }
  func.func @transform_2(%arg0: i32, %arg1: i32) -> (i32, i32) {
    %c0_i32 = arith.constant 0 : i32
    %c0_i32_0 = arith.constant 0 : i32
    %c0_i32_1 = arith.constant 0 : i32
    return %c0_i32, %c0_i32_0 : i32, i32
  }
  func.func @transform_3(%arg0: i32, %arg1: i32) -> (i32, i32) {
    %c0_i32 = arith.constant 0 : i32
    %c0_i32_0 = arith.constant 0 : i32
    %c0_i32_1 = arith.constant 0 : i32
    return %c0_i32, %c0_i32_0 : i32, i32
  }
  func.func @transform_4(%arg0: i32, %arg1: i32) -> (i32, i32) {
    %c0_i32 = arith.constant 0 : i32
    %c0_i32_0 = arith.constant 0 : i32
    %c0_i32_1 = arith.constant 0 : i32
    return %c0_i32, %c0_i32_0 : i32, i32
  }
  func.func @transform_5(%arg0: i32, %arg1: i32) -> (i32, i32) {
    %c0_i32 = arith.constant 0 : i32
    %c0_i32_0 = arith.constant 0 : i32
    %c0_i32_1 = arith.constant 0 : i32
    return %c0_i32, %c0_i32_0 : i32, i32
  }
  func.func @transform_6(%arg0: i32, %arg1: i32) -> (i32, i32) {
    %c0_i32 = arith.constant 0 : i32
    %c0_i32_0 = arith.constant 0 : i32
    %c0_i32_1 = arith.constant 0 : i32
    return %c0_i32, %c0_i32_0 : i32, i32
  }
  func.func @transform_7(%arg0: i32, %arg1: i32) -> (i32, i32) {
    %c0_i32 = arith.constant 0 : i32
    %c0_i32_0 = arith.constant 0 : i32
    %c0_i32_1 = arith.constant 0 : i32
    return %c0_i32, %c0_i32_0 : i32, i32
  }
  func.func @transform_8(%arg0: i32, %arg1: i32) -> (i32, i32) {
    %c0_i32 = arith.constant 0 : i32
    %c0_i32_0 = arith.constant 0 : i32
    %c0_i32_1 = arith.constant 0 : i32
    return %c0_i32, %c0_i32_0 : i32, i32
  }
  func.func @transform_9(%arg0: i32, %arg1: i32) -> (i32, i32, i32, i32, i32) {
    %c0_i32 = arith.constant 0 : i32
    %c0_i32_0 = arith.constant 0 : i32
    %c0_i32_1 = arith.constant 0 : i32
    %c0_i32_2 = arith.constant 0 : i32
    return %arg0, %arg1, %c0_i32, %c0_i32_0, %c0_i32_1 : i32, i32, i32, i32, i32
  }
}

</mosaic_0001>

<llo_original>
// kernel: tpu_custom_call.1
$region0: #{tpu_custom_call.1}
  #allocation0 [shape = 'u32[]', space=smem, size = 0x4, offset = 0x4, fixed_abs, tag = 'smem constant byte address 0x4 - core index']
  #allocation1 [shape = 'u32[144,128]{1,0:T(1,128)}', space=vmem, size = 0x12000, scoped, tag = 'internal scratch']
  %s0 = inlined_call_operand.hbm [shape: bf16[2,16,16,16], index: 0, kind: input, shape index: {}]
  %s1 = inlined_call_operand.hbm [shape: bf16[2,1,16,16], index: 1, kind: input, shape index: {}]
  %s2 = inlined_call_operand.hbm [shape: bf16[16,128], index: 2, kind: input, shape index: {}]
  %s3 = inlined_call_operand.vmem [shape: f32[1,128], index: 3, kind: input, shape index: {}]
  %s4 = inlined_call_operand.hbm [shape: bf16[128,768], index: 4, kind: input, shape index: {}]
  %s5 = inlined_call_operand.hbm [shape: bf16[128,384], index: 5, kind: input, shape index: {}]
  %s6 = inlined_call_operand.vmem [shape: f32[1,128], index: 6, kind: input, shape index: {}]
  %s7 = inlined_call_operand.hbm [shape: bf16[128,128], index: 7, kind: input, shape index: {}]
  %s8 = inlined_call_operand.vmem [shape: f32[1,128], index: 8, kind: input, shape index: {}]
  %s9 = inlined_call_operand.hbm [shape: bf16[2,16,2,16,256], index: 9, kind: output, shape index: {}]
  %s10 = sld [smem:[#allocation0]]
  $region93: #{tpu_custom_call.1} parent=0
    _
  %s12 = ssub.s32 1, %s10
  %s13 = scalar_select 0, %s12, %s10
  $region1: #{tpu_custom_call.1} parent=0
    #allocation2 [shape = 'u8[131072]{0}', space=vmem, size = 0x20000, scoped, tag = 'input window, operand 0']
    #allocation3 [shape = 's32[2]{0}', space=sflag, size = 0x8, scoped, tag = 'scoped memory for tpu_custom_call.1']
    #allocation4 [shape = 's32[2]{0}', space=sflag, size = 0x8, scoped, tag = 'scoped memory for tpu_custom_call.1']
    #allocation5 [shape = 'u8[8192]{0}', space=vmem, size = 0x2000, scoped, tag = 'input window, operand 1']
    #allocation6 [shape = 's32[2]{0}', space=sflag, size = 0x8, scoped, tag = 'scoped memory for tpu_custom_call.1']
    #allocation7 [shape = 'u8[4096]{0}', space=vmem, size = 0x1000, scoped, tag = 'input window, operand 2, single buffered']
    #allocation8 [shape = 'u8[196608]{0}', space=vmem, size = 0x30000, scoped, tag = 'input window, operand 4, single buffered']
    #allocation9 [shape = 's32[1]{0}', space=sflag, size = 0x4, scoped, tag = 'scoped memory for tpu_custom_call.1']
    #allocation10 [shape = 'u8[98304]{0}', space=vmem, size = 0x18000, scoped, tag = 'input window, operand 5, single buffered']
    #allocation11 [shape = 'u8[32768]{0}', space=vmem, size = 0x8000, scoped, tag = 'input window, operand 7, single buffered']
    #allocation12 [shape = 's32[1]{0}', space=sflag, size = 0x4, scoped, tag = 'scoped memory for tpu_custom_call.1']
    #allocation13 [shape = 'u8[524288]{0}', space=vmem, size = 0x80000, scoped, tag = 'output window, operand 0']
    %14 = vsyncpa [#allocation3], 0
    %s15 = scalar_lea.sflag [#allocation3], 1
    %16 = vsyncpa %s15, 0
    %17 = vsyncpa [#allocation6], 0
    %s18 = scalar_lea.sflag [#allocation6], 1
    %19 = vsyncpa %s18, 0
    %20 = vsyncpa [#allocation9], 0
    %21 = vsyncpa [#allocation12], 0
    %22 = vsyncpa [#allocation4], 0
    %s23 = scalar_lea.sflag [#allocation4], 1
    %24 = vsyncpa %s23, 0
    loop: start=0, step=1, limit=4
    $region2: #{tpu_custom_call.1} parent=1 // loop_pre_header
      _
    $region3: #{tpu_custom_call.1} parent=1 // loop_header
      %s26 = sphi 0, %s30
      %p27 = scmp.ge.s32.totalorder %s26, 4
      %s33 = sphi 0, %s45
      %s34 = sphi 0, %s41
      %s35 = sphi 0, %s33
      %s36 = sphi 0, %s34
      %s37 = sphi 0, %s35
      %s38 = sphi 0, %s36
      %s50 = sphi 0, %s52
      %s53 = sphi 0, %s50
      %s54 = sphi 0, %s53
      %s70 = sphi 0, %s54
      %s78 = sphi 0, %s80
      %s81 = sphi 0, %s78
      %s82 = sphi 0, %s81
      %s98 = sphi 0, %s82
      %s102 = sphi 0, %s102
      %s104 = sphi 0, %s102
      %s105 = sphi 0, %s104
      %s119 = sphi 0, %s105
      %s123 = sphi 0, %s123
      %s125 = sphi 0, %s123
      %s126 = sphi 0, %s125
      %s140 = sphi 0, %s126
      %s144 = sphi 0, %s144
      %s146 = sphi 0, %s144
      %s147 = sphi 0, %s146
      %s161 = sphi 0, %s147
      %s165 = sphi 0, %s165
      %s167 = sphi 0, %s165
      %s168 = sphi 0, %s167
      %s182 = sphi 0, %s168
      %s186 = sphi 0, %s186
      %s188 = sphi 0, %s186
      %s189 = sphi 0, %s188
      %s203 = sphi 0, %s189
      %s207 = sphi 0, %s207
      %s209 = sphi 0, %s207
      %s210 = sphi 0, %s209
      %s224 = sphi 0, %s210
      %s228 = sphi 0, %s228
      %s230 = sphi 0, %s228
      %s231 = sphi 0, %s230
      %s245 = sphi 0, %s231
      %s253 = sphi 0, %s255
      %s256 = sphi 0, %s253
      %s257 = sphi 0, %s256
      %s273 = sphi 0, %s257
    $region4: #{tpu_custom_call.1} parent=1 // loop_header_branch
      %29 = sbr.rel (%p27) target = $region8
    $region5: #{tpu_custom_call.1} parent=1 // loop_body
      %s31 = ssub.s32 %s26, 1
      %s32 = ssub.s32 %s26, 2
      %s39 = sadd.s32 1, %s34
      %p40 = scmp.ge.s32.totalorder %s39, 1
      %s41 = scalar_select %p40, 0, %s39
      %s42 = sadd.s32 1, %s33
      %s43 = scalar_select %p40, %s42, %s33
      %p44 = scmp.ge.s32.totalorder %s43, 2
      %s45 = scalar_select %p44, 0, %s43
      %s46 = ssub.s32 %s33, %s45
      %s47 = ssub.s32 %s34, %s41
      %s48 = sor.u32 %s46, %s47
      %p49 = scmp.eq.s32.totalorder %s48, 0
      %s51 = sadd.s32 %s50, 1
      %s52 = scalar_select %p49, %s50, %s51
      %p55 = pneg %p49
      %p56 = scmp.eq.s32.totalorder %s26, 1
      %p57 = por %p55, %p56
      %p58 = scmp.ne.s32.totalorder %s50, %s53
      %p59 = scmp.eq.s32.totalorder %s26, 0
      %p60 = por %p58, %p59
      %p61 = scmp.ne.s32.totalorder %s50, %s53
      %p62 = scmp.eq.s32.totalorder %s31, 1
      %p63 = por %p61, %p62
      %p64 = scmp.ne.s32.totalorder %s53, %s54
      %p65 = scmp.eq.s32.totalorder %s31, 0
      %p66 = por %p64, %p65
      %p67 = scmp.ne.s32.totalorder %s53, %s54
      %p68 = scmp.eq.s32.totalorder %s32, 1
      %p69 = por %p67, %p68
      %p71 = scmp.ne.s32.totalorder %s54, %s70
      %p72 = scmp.eq.s32.totalorder %s32, 0
      %p73 = por %p71, %p72
      %s74 = ssub.s32 %s33, %s45
      %s75 = ssub.s32 %s34, %s41
      %s76 = sor.u32 %s74, %s75
      %p77 = scmp.eq.s32.totalorder %s76, 0
      %s79 = sadd.s32 %s78, 1
      %s80 = scalar_select %p77, %s78, %s79
      %p83 = pneg %p77
      %p84 = scmp.eq.s32.totalorder %s26, 1
      %p85 = por %p83, %p84
      %p86 = scmp.ne.s32.totalorder %s78, %s81
      %p87 = scmp.eq.s32.totalorder %s26, 0
      %p88 = por %p86, %p87
      %p89 = scmp.ne.s32.totalorder %s78, %s81
      %p90 = scmp.eq.s32.totalorder %s31, 1
      %p91 = por %p89, %p90
      %p92 = scmp.ne.s32.totalorder %s81, %s82
      %p93 = scmp.eq.s32.totalorder %s31, 0
      %p94 = por %p92, %p93
      %p95 = scmp.ne.s32.totalorder %s81, %s82
      %p96 = scmp.eq.s32.totalorder %s32, 1
      %p97 = por %p95, %p96
      %p99 = scmp.ne.s32.totalorder %s82, %s98
      %p100 = scmp.eq.s32.totalorder %s32, 0
      %p101 = por %p99, %p100
      %s103 = sadd.s32 %s102, 1
      %p106 = scmp.eq.s32.totalorder %s26, 1
      %p107 = scmp.ne.s32.totalorder %s102, %s104
      %p108 = scmp.eq.s32.totalorder %s26, 0
      %p109 = por %p107, %p108
      %p110 = scmp.ne.s32.totalorder %s102, %s104
      %p111 = scmp.eq.s32.totalorder %s31, 1
      %p112 = por %p110, %p111
      %p113 = scmp.ne.s32.totalorder %s104, %s105
      %p114 = scmp.eq.s32.totalorder %s31, 0
      %p115 = por %p113, %p114
      %p116 = scmp.ne.s32.totalorder %s104, %s105
      %p117 = scmp.eq.s32.totalorder %s32, 1
      %p118 = por %p116, %p117
      %p120 = scmp.ne.s32.totalorder %s105, %s119
      %p121 = scmp.eq.s32.totalorder %s32, 0
      %p122 = por %p120, %p121
      %s124 = sadd.s32 %s123, 1
      %p127 = scmp.eq.s32.totalorder %s26, 1
      %p128 = scmp.ne.s32.totalorder %s123, %s125
      %p129 = scmp.eq.s32.totalorder %s26, 0
      %p130 = por %p128, %p129
      %p131 = scmp.ne.s32.totalorder %s123, %s125
      %p132 = scmp.eq.s32.totalorder %s31, 1
      %p133 = por %p131, %p132
      %p134 = scmp.ne.s32.totalorder %s125, %s126
      %p135 = scmp.eq.s32.totalorder %s31, 0
      %p136 = por %p134, %p135
      %p137 = scmp.ne.s32.totalorder %s125, %s126
      %p138 = scmp.eq.s32.totalorder %s32, 1
      %p139 = por %p137, %p138
      %p141 = scmp.ne.s32.totalorder %s126, %s140
      %p142 = scmp.eq.s32.totalorder %s32, 0
      %p143 = por %p141, %p142
      %s145 = sadd.s32 %s144, 1
      %p148 = scmp.eq.s32.totalorder %s26, 1
      %p149 = scmp.ne.s32.totalorder %s144, %s146
      %p150 = scmp.eq.s32.totalorder %s26, 0
      %p151 = por %p149, %p150
      %p152 = scmp.ne.s32.totalorder %s144, %s146
      %p153 = scmp.eq.s32.totalorder %s31, 1
      %p154 = por %p152, %p153
      %p155 = scmp.ne.s32.totalorder %s146, %s147
      %p156 = scmp.eq.s32.totalorder %s31, 0
      %p157 = por %p155, %p156
      %p158 = scmp.ne.s32.totalorder %s146, %s147
      %p159 = scmp.eq.s32.totalorder %s32, 1
      %p160 = por %p158, %p159
      %p162 = scmp.ne.s32.totalorder %s147, %s161
      %p163 = scmp.eq.s32.totalorder %s32, 0
      %p164 = por %p162, %p163
      %s166 = sadd.s32 %s165, 1
      %p169 = scmp.eq.s32.totalorder %s26, 1
      %p170 = scmp.ne.s32.totalorder %s165, %s167
      %p171 = scmp.eq.s32.totalorder %s26, 0
      %p172 = por %p170, %p171
      %p173 = scmp.ne.s32.totalorder %s165, %s167
      %p174 = scmp.eq.s32.totalorder %s31, 1
      %p175 = por %p173, %p174
      %p176 = scmp.ne.s32.totalorder %s167, %s168
      %p177 = scmp.eq.s32.totalorder %s31, 0
      %p178 = por %p176, %p177
      %p179 = scmp.ne.s32.totalorder %s167, %s168
      %p180 = scmp.eq.s32.totalorder %s32, 1
      %p181 = por %p179, %p180
      %p183 = scmp.ne.s32.totalorder %s168, %s182
      %p184 = scmp.eq.s32.totalorder %s32, 0
      %p185 = por %p183, %p184
      %s187 = sadd.s32 %s186, 1
      %p190 = scmp.eq.s32.totalorder %s26, 1
      %p191 = scmp.ne.s32.totalorder %s186, %s188
      %p192 = scmp.eq.s32.totalorder %s26, 0
      %p193 = por %p191, %p192
      %p194 = scmp.ne.s32.totalorder %s186, %s188
      %p195 = scmp.eq.s32.totalorder %s31, 1
      %p196 = por %p194, %p195
      %p197 = scmp.ne.s32.totalorder %s188, %s189
      %p198 = scmp.eq.s32.totalorder %s31, 0
      %p199 = por %p197, %p198
      %p200 = scmp.ne.s32.totalorder %s188, %s189
      %p201 = scmp.eq.s32.totalorder %s32, 1
      %p202 = por %p200, %p201
      %p204 = scmp.ne.s32.totalorder %s189, %s203
      %p205 = scmp.eq.s32.totalorder %s32, 0
      %p206 = por %p204, %p205
      %s208 = sadd.s32 %s207, 1
      %p211 = scmp.eq.s32.totalorder %s26, 1
      %p212 = scmp.ne.s32.totalorder %s207, %s209
      %p213 = scmp.eq.s32.totalorder %s26, 0
      %p214 = por %p212, %p213
      %p215 = scmp.ne.s32.totalorder %s207, %s209
      %p216 = scmp.eq.s32.totalorder %s31, 1
      %p217 = por %p215, %p216
      %p218 = scmp.ne.s32.totalorder %s209, %s210
      %p219 = scmp.eq.s32.totalorder %s31, 0
      %p220 = por %p218, %p219
      %p221 = scmp.ne.s32.totalorder %s209, %s210
      %p222 = scmp.eq.s32.totalorder %s32, 1
      %p223 = por %p221, %p222
      %p225 = scmp.ne.s32.totalorder %s210, %s224
      %p226 = scmp.eq.s32.totalorder %s32, 0
      %p227 = por %p225, %p226
      %s229 = sadd.s32 %s228, 1
      %p232 = scmp.eq.s32.totalorder %s26, 1
      %p233 = scmp.ne.s32.totalorder %s228, %s230
      %p234 = scmp.eq.s32.totalorder %s26, 0
      %p235 = por %p233, %p234
      %p236 = scmp.ne.s32.totalorder %s228, %s230
      %p237 = scmp.eq.s32.totalorder %s31, 1
      %p238 = por %p236, %p237
      %p239 = scmp.ne.s32.totalorder %s230, %s231
      %p240 = scmp.eq.s32.totalorder %s31, 0
      %p241 = por %p239, %p240
      %p242 = scmp.ne.s32.totalorder %s230, %s231
      %p243 = scmp.eq.s32.totalorder %s32, 1
      %p244 = por %p242, %p243
      %p246 = scmp.ne.s32.totalorder %s231, %s245
      %p247 = scmp.eq.s32.totalorder %s32, 0
      %p248 = por %p246, %p247
      %s249 = ssub.s32 %s33, %s45
      %s250 = ssub.s32 %s34, %s41
      %s251 = sor.u32 %s249, %s250
      %p252 = scmp.eq.s32.totalorder %s251, 0
      %s254 = sadd.s32 %s253, 1
      %s255 = scalar_select %p252, %s253, %s254
      %p258 = pneg %p252
      %p259 = scmp.eq.s32.totalorder %s26, 1
      %p260 = por %p258, %p259
      %p261 = scmp.ne.s32.totalorder %s253, %s256
      %p262 = scmp.eq.s32.totalorder %s26, 0
      %p263 = por %p261, %p262
      %p264 = scmp.ne.s32.totalorder %s253, %s256
      %p265 = scmp.eq.s32.totalorder %s31, 1
      %p266 = por %p264, %p265
      %p267 = scmp.ne.s32.totalorder %s256, %s257
      %p268 = scmp.eq.s32.totalorder %s31, 0
      %p269 = por %p267, %p268
      %p270 = scmp.ne.s32.totalorder %s256, %s257
      %p271 = scmp.eq.s32.totalorder %s32, 1
      %p272 = por %p270, %p271
      %p274 = scmp.ne.s32.totalorder %s257, %s273
      %p275 = scmp.eq.s32.totalorder %s32, 0
      %p276 = por %p274, %p275
      %p277 = scmp.le.s32.totalorder 1, %s26
      %p278 = scmp.lt.s32.totalorder %s26, 3
      %p279 = pnand %p277, %p278
      %p280 = pneg %p279
      // Predicated region
      $region9: #{tpu_custom_call.1} parent=5 // pred_check
        _
      $region10: #{tpu_custom_call.1} parent=5 // pred_check_branch
        %282 = sbr.rel (%p279) target = $region12
      $region11: #{tpu_custom_call.1} parent=5 // pred_region
        %s283 = ssub.s32 %s26, 1
        // Predicated region
        $region13: #{tpu_custom_call.1} parent=11 // pred_check
          %p284 = pneg %p115
        $region14: #{tpu_custom_call.1} parent=11 // pred_check_branch
          %286 = sbr.rel (%p284) target = $region16
        $region15: #{tpu_custom_call.1} parent=11 // pred_region
          %s288 = ssub.s32 128, 128
          %289 = vsyncadd [#allocation6], %s288
          %s290 = sshll.u32 [#allocation7], 4
          %s291 = int_to_ptr.vmem [resolvable:$true] %s290
          %296 = dma.hbm_to_vmem [thread:$0]  %s2, 128, %s291, [#allocation6], 64, 64, 4
        $region16: #{tpu_custom_call.1} parent=11 // pred_fallthru
          _
        // Predicated region
        $region17: #{tpu_custom_call.1} parent=11 // pred_check
          %p297 = pneg %p136
        $region18: #{tpu_custom_call.1} parent=11 // pred_check_branch
          %299 = sbr.rel (%p297) target = $region20
        $region19: #{tpu_custom_call.1} parent=11 // pred_region
          _
        $region20: #{tpu_custom_call.1} parent=11 // pred_fallthru
          _
        // Predicated region
        $region21: #{tpu_custom_call.1} parent=11 // pred_check
          %p300 = pneg %p157
        $region22: #{tpu_custom_call.1} parent=11 // pred_check_branch
          %302 = sbr.rel (%p300) target = $region24
        $region23: #{tpu_custom_call.1} parent=11 // pred_region
          %s304 = ssub.s32 6144, 6144
          %305 = vsyncadd [#allocation9], %s304
          %s306 = sshll.u32 [#allocation8], 4
          %s307 = int_to_ptr.vmem [resolvable:$true] %s306
          %312 = dma.hbm_to_vmem [thread:$0]  %s4, 6144, %s307, [#allocation9], 384, 384, 24
        $region24: #{tpu_custom_call.1} parent=11 // pred_fallthru
          _
        // Predicated region
        $region25: #{tpu_custom_call.1} parent=11 // pred_check
          %p313 = pneg %p178
        $region26: #{tpu_custom_call.1} parent=11 // pred_check_branch
          %315 = sbr.rel (%p313) target = $region28
        $region27: #{tpu_custom_call.1} parent=11 // pred_region
          %s317 = ssub.s32 3072, 3072
          %318 = vsyncadd [#allocation9], %s317
          %s319 = sshll.u32 [#allocation10], 4
          %s320 = int_to_ptr.vmem [resolvable:$true] %s319
          %325 = dma.hbm_to_vmem [thread:$0]  %s5, 3072, %s320, [#allocation9], 192, 192, 12
        $region28: #{tpu_custom_call.1} parent=11 // pred_fallthru
          _
        // Predicated region
        $region29: #{tpu_custom_call.1} parent=11 // pred_check
          %p326 = pneg %p199
        $region30: #{tpu_custom_call.1} parent=11 // pred_check_branch
          %328 = sbr.rel (%p326) target = $region32
        $region31: #{tpu_custom_call.1} parent=11 // pred_region
          _
        $region32: #{tpu_custom_call.1} parent=11 // pred_fallthru
          _
        // Predicated region
        $region33: #{tpu_custom_call.1} parent=11 // pred_check
          %p329 = pneg %p220
        $region34: #{tpu_custom_call.1} parent=11 // pred_check_branch
          %331 = sbr.rel (%p329) target = $region36
        $region35: #{tpu_custom_call.1} parent=11 // pred_region
          %s333 = ssub.s32 1024, 1024
          %334 = vsyncadd [#allocation12], %s333
          %s335 = sshll.u32 [#allocation11], 4
          %s336 = int_to_ptr.vmem [resolvable:$true] %s335
          %341 = dma.hbm_to_vmem [thread:$0]  %s7, 1024, %s336, [#allocation12], 64, 64, 4
        $region36: #{tpu_custom_call.1} parent=11 // pred_fallthru
          _
        // Predicated region
        $region37: #{tpu_custom_call.1} parent=11 // pred_check
          %p342 = pneg %p241
        $region38: #{tpu_custom_call.1} parent=11 // pred_check_branch
          %344 = sbr.rel (%p342) target = $region40
        $region39: #{tpu_custom_call.1} parent=11 // pred_region
          _
        $region40: #{tpu_custom_call.1} parent=11 // pred_fallthru
          _
      $region12: #{tpu_custom_call.1} parent=5 // pred_fallthru
        _
      %p345 = scmp.lt.s32.totalorder %s26, 2
      // Predicated region
      $region41: #{tpu_custom_call.1} parent=5 // pred_check
        %p346 = pneg %p345
      $region42: #{tpu_custom_call.1} parent=5 // pred_check_branch
        %348 = sbr.rel (%p346) target = $region44
      $region43: #{tpu_custom_call.1} parent=5 // pred_region
        // Predicated region
        $region45: #{tpu_custom_call.1} parent=43 // pred_check
          %p349 = pneg %p60
        $region46: #{tpu_custom_call.1} parent=43 // pred_check_branch
          %351 = sbr.rel (%p349) target = $region48
        $region47: #{tpu_custom_call.1} parent=43 // pred_region
          %s352 = sand.u32 %s50, 1
          %s353 = scalar_lea.sflag [#allocation3], %s352
          %s354 = sand.u32 %s50, 1
          %s355 = smul.addr %s354, 128
          %s356 = scalar_lea.vmem [#allocation2], %s355
          %s357 = smul.u32 16, %s34
          %s359 = ssub.s32 2048, 2048
          %360 = vsyncadd %s353, %s359
          %s361 = smul.addr %s357, 2
          %s362 = smul.addr %s33, 32
          %s363 = sadd.s32 %s361, %s362
          %s364 = smul.addr %s363, 64
          %s365 = scalar_lea.hbm %s0, %s364
          %s366 = sshll.u32 %s356, 4
          %s367 = int_to_ptr.vmem [resolvable:$true] %s366
          %372 = dma.hbm_to_vmem [thread:$0]  %s365, 2048, %s367, %s353, 64, 64, 4
        $region48: #{tpu_custom_call.1} parent=43 // pred_fallthru
          _
        // Predicated region
        $region49: #{tpu_custom_call.1} parent=43 // pred_check
          %p373 = pneg %p88
        $region50: #{tpu_custom_call.1} parent=43 // pred_check_branch
          %375 = sbr.rel (%p373) target = $region52
        $region51: #{tpu_custom_call.1} parent=43 // pred_region
          %s376 = sand.u32 %s26, 1
          %s377 = scalar_lea.sflag [#allocation6], %s376
          %s378 = sand.u32 %s78, 1
          %s379 = smul.addr %s378, 8
          %s380 = scalar_lea.vmem [#allocation5], %s379
          %s382 = ssub.s32 128, 128
          %383 = vsyncadd %s377, %s382
          %s384 = smul.addr %s34, 2
          %s385 = smul.addr %s33, 2
          %s386 = sadd.s32 %s384, %s385
          %s387 = smul.addr %s386, 64
          %s388 = scalar_lea.hbm %s1, %s387
          %s389 = sshll.u32 %s380, 4
          %s390 = int_to_ptr.vmem [resolvable:$true] %s389
          %395 = dma.hbm_to_vmem [thread:$0]  %s388, 128, %s390, %s377, 64, 64, 4
        $region52: #{tpu_custom_call.1} parent=43 // pred_fallthru
          _
      $region44: #{tpu_custom_call.1} parent=5 // pred_fallthru
        _
      %p396 = scmp.le.s32.totalorder 1, %s26
      %p397 = scmp.lt.s32.totalorder %s26, 3
      %p398 = pnand %p396, %p397
      %p399 = pneg %p398
      // Predicated region
      $region53: #{tpu_custom_call.1} parent=5 // pred_check
        _
      $region54: #{tpu_custom_call.1} parent=5 // pred_check_branch
        %401 = sbr.rel (%p398) target = $region56
      $region55: #{tpu_custom_call.1} parent=5 // pred_region
        %s402 = ssub.s32 %s26, 1
        %s403 = sand.u32 %s53, 1
        %s404 = scalar_lea.sflag [#allocation3], %s403
        %s405 = sand.u32 %s53, 1
        %s406 = smul.addr %s405, 128
        %s407 = scalar_lea.vmem [#allocation2], %s406
        // Predicated region
        $region57: #{tpu_custom_call.1} parent=55 // pred_check
          %p408 = pneg %p66
        $region58: #{tpu_custom_call.1} parent=55 // pred_check_branch
          %410 = sbr.rel (%p408) target = $region60
        $region59: #{tpu_custom_call.1} parent=55 // pred_region
          %411 = dma.done %s404, 2048
        $region60: #{tpu_custom_call.1} parent=55 // pred_fallthru
          _
        %s412 = sand.u32 %s31, 1
        %s413 = scalar_lea.sflag [#allocation6], %s412
        %s414 = sand.u32 %s81, 1
        %s415 = smul.addr %s414, 8
        %s416 = scalar_lea.vmem [#allocation5], %s415
        // Predicated region
        $region61: #{tpu_custom_call.1} parent=55 // pred_check
          %p417 = pneg %p94
        $region62: #{tpu_custom_call.1} parent=55 // pred_check_branch
          %419 = sbr.rel (%p417) target = $region64
        $region63: #{tpu_custom_call.1} parent=55 // pred_region
          %420 = dma.done %s413, 128
        $region64: #{tpu_custom_call.1} parent=55 // pred_fallthru
          _
        // Predicated region
        $region65: #{tpu_custom_call.1} parent=55 // pred_check
          %p421 = pneg %p115
        $region66: #{tpu_custom_call.1} parent=55 // pred_check_branch
          %423 = sbr.rel (%p421) target = $region68
        $region67: #{tpu_custom_call.1} parent=55 // pred_region
          %424 = dma.done [#allocation6], 128
        $region68: #{tpu_custom_call.1} parent=55 // pred_fallthru
          _
        // Predicated region
        $region69: #{tpu_custom_call.1} parent=55 // pred_check
          %p425 = pneg %p157
        $region70: #{tpu_custom_call.1} parent=55 // pred_check_branch
          %427 = sbr.rel (%p425) target = $region72
        $region71: #{tpu_custom_call.1} parent=55 // pred_region
          %428 = dma.done [#allocation9], 6144
        $region72: #{tpu_custom_call.1} parent=55 // pred_fallthru
          _
        // Predicated region
        $region73: #{tpu_custom_call.1} parent=55 // pred_check
          %p429 = pneg %p178
        $region74: #{tpu_custom_call.1} parent=55 // pred_check_branch
          %431 = sbr.rel (%p429) target = $region76
        $region75: #{tpu_custom_call.1} parent=55 // pred_region
          %432 = dma.done [#allocation9], 3072
        $region76: #{tpu_custom_call.1} parent=55 // pred_fallthru
          _
        // Predicated region
        $region77: #{tpu_custom_call.1} parent=55 // pred_check
          %p433 = pneg %p220
        $region78: #{tpu_custom_call.1} parent=55 // pred_check_branch
          %435 = sbr.rel (%p433) target = $region80
        $region79: #{tpu_custom_call.1} parent=55 // pred_region
          %436 = dma.done [#allocation12], 1024
        $region80: #{tpu_custom_call.1} parent=55 // pred_fallthru
          _
        %s437 = sand.u32 %s53, 1
        %s438 = scalar_lea.sflag [#allocation3], %s437
        %s439 = sand.u32 %s53, 1
        %s440 = smul.addr %s439, 128
        %s441 = scalar_lea.vmem [#allocation2], %s440
        %p442 = pneg %p66
        %p443 = pneg %p63
        %s444 = sand.u32 %s31, 1
        %s445 = scalar_lea.sflag [#allocation6], %s444
        %s446 = sand.u32 %s81, 1
        %s447 = smul.addr %s446, 8
        %s448 = scalar_lea.vmem [#allocation5], %s447
        %p449 = pneg %p94
        %p450 = pneg %p91
        %p451 = pneg %p115
        %p452 = pneg %p112
        %p453 = pneg %p136
        %p454 = pneg %p133
        %p455 = pneg %p157
        %p456 = pneg %p154
        %p457 = pneg %p178
        %p458 = pneg %p175
        %p459 = pneg %p199
        %p460 = pneg %p196
        %p461 = pneg %p220
        %p462 = pneg %p217
        %p463 = pneg %p241
        %p464 = pneg %p238
        %p465 = pneg %p269
        %p466 = pneg %p266
        %s467 = sand.u32 %s256, 1
        %s468 = scalar_lea.sflag [#allocation4], %s467
        %s469 = sand.u32 %s256, 1
        %s470 = smul.addr %s469, 512
        %s471 = scalar_lea.vmem [#allocation13], %s470
        %s472 = smul.u32 16, %s36
        %s473 = smul.u32 16, %s36
        %v475 = vld [vmem:[#allocation7] sm:$0xf]
        %v476 = vld [vmem:[#allocation7 + $0x4] sm:$0xf]
        %v477 = vld [vmem:[%s3] sm:$0x1]
        %v478 = vld [vmem:[%s407] sm:$0xf]
        %v479 = vld [vmem:[%s407 + $0x4] sm:$0xf]
        %v480 = vld [vmem:[%s407 + $0x8] sm:$0xf]
        %v481 = vld [vmem:[%s407 + $0xc] sm:$0xf]
        %v482 = vld [vmem:[%s407 + $0x10] sm:$0xf]
        %v483 = vld [vmem:[%s407 + $0x14] sm:$0xf]
        %v484 = vld [vmem:[%s407 + $0x18] sm:$0xf]
        %v485 = vld [vmem:[%s407 + $0x1c] sm:$0xf]
        %v486 = vld [vmem:[%s407 + $0x20] sm:$0xf]
        %v487 = vld [vmem:[%s407 + $0x24] sm:$0xf]
        %v488 = vld [vmem:[%s407 + $0x28] sm:$0xf]
        %v489 = vld [vmem:[%s407 + $0x2c] sm:$0xf]
        %v490 = vld [vmem:[%s407 + $0x30] sm:$0xf]
        %v491 = vld [vmem:[%s407 + $0x34] sm:$0xf]
        %v492 = vld [vmem:[%s407 + $0x38] sm:$0xf]
        %v493 = vld [vmem:[%s407 + $0x3c] sm:$0xf]
        %v494 = vld [vmem:[%s407 + $0x40] sm:$0xf]
        %v495 = vld [vmem:[%s407 + $0x44] sm:$0xf]
        %v496 = vld [vmem:[%s407 + $0x48] sm:$0xf]
        %v497 = vld [vmem:[%s407 + $0x4c] sm:$0xf]
        %v498 = vld [vmem:[%s407 + $0x50] sm:$0xf]
        %v499 = vld [vmem:[%s407 + $0x54] sm:$0xf]
        %v500 = vld [vmem:[%s407 + $0x58] sm:$0xf]
        %v501 = vld [vmem:[%s407 + $0x5c] sm:$0xf]
        %v502 = vld [vmem:[%s407 + $0x60] sm:$0xf]
        %v503 = vld [vmem:[%s407 + $0x64] sm:$0xf]
        %v504 = vld [vmem:[%s407 + $0x68] sm:$0xf]
        %v505 = vld [vmem:[%s407 + $0x6c] sm:$0xf]
        %v506 = vld [vmem:[%s407 + $0x70] sm:$0xf]
        %v507 = vld [vmem:[%s407 + $0x74] sm:$0xf]
        %v508 = vld [vmem:[%s407 + $0x78] sm:$0xf]
        %v509 = vld [vmem:[%s407 + $0x7c] sm:$0xf]
        %v511 = vlaneseq
        %v512 = vshrl.u32 %v511, 7
        %v513 = vsub.s32 0, %v512
        %v514 = vrot.slane %v477, %v513
        %v548 = vunpack.c.l.b16 %v478
        %v549 = vunpack.c.l.b16 %v479
        %v550 = vunpack.c.l.b16 %v480
        %v551 = vunpack.c.l.b16 %v481
        %v552 = vunpack.c.l.b16 %v482
        %v553 = vunpack.c.l.b16 %v483
        %v554 = vunpack.c.l.b16 %v484
        %v555 = vunpack.c.l.b16 %v485
        %v556 = vunpack.c.l.b16 %v486
        %v557 = vunpack.c.l.b16 %v487
        %v558 = vunpack.c.l.b16 %v488
        %v559 = vunpack.c.l.b16 %v489
        %v560 = vunpack.c.l.b16 %v490
        %v561 = vunpack.c.l.b16 %v491
        %v562 = vunpack.c.l.b16 %v492
        %v563 = vunpack.c.l.b16 %v493
        %v564 = vunpack.c.l.b16 %v494
        %v565 = vunpack.c.l.b16 %v495
        %v566 = vunpack.c.l.b16 %v496
        %v567 = vunpack.c.l.b16 %v497
        %v568 = vunpack.c.l.b16 %v498
        %v569 = vunpack.c.l.b16 %v499
        %v570 = vunpack.c.l.b16 %v500
        %v571 = vunpack.c.l.b16 %v501
        %v572 = vunpack.c.l.b16 %v502
        %v573 = vunpack.c.l.b16 %v503
        %v574 = vunpack.c.l.b16 %v504
        %v575 = vunpack.c.l.b16 %v505
        %v576 = vunpack.c.l.b16 %v506
        %v577 = vunpack.c.l.b16 %v507
        %v578 = vunpack.c.l.b16 %v508
        %v579 = vunpack.c.l.b16 %v509
        %v580 = vpack.c.b16 %v549, %v548
        %v581 = vpack.c.b16 %v551, %v550
        %v582 = vpack.c.b16 %v553, %v552
        %v583 = vpack.c.b16 %v555, %v554
        %v584 = vpack.c.b16 %v557, %v556
        %v585 = vpack.c.b16 %v559, %v558
        %v586 = vpack.c.b16 %v561, %v560
        %v587 = vpack.c.b16 %v563, %v562
        %v588 = vpack.c.b16 %v565, %v564
        %v589 = vpack.c.b16 %v567, %v566
        %v590 = vpack.c.b16 %v569, %v568
        %v591 = vpack.c.b16 %v571, %v570
        %v592 = vpack.c.b16 %v573, %v572
        %v593 = vpack.c.b16 %v575, %v574
        %v594 = vpack.c.b16 %v577, %v576
        %v595 = vpack.c.b16 %v579, %v578
        %v598 = vunpack.c.l.b16 %v475
        %v599 = vunpack.c.l.b16 %v476
        %v600 = vpack.c.b16 %v599, %v598
        %vm602 = vcmask 130048
        %v604 = vsel %vm602, %v580, 0
        %v607 = vsel %vm602, %v581, 0
        %v610 = vsel %vm602, %v582, 0
        %v613 = vsel %vm602, %v583, 0
        %v616 = vsel %vm602, %v584, 0
        %v619 = vsel %vm602, %v585, 0
        %v622 = vsel %vm602, %v586, 0
        %v625 = vsel %vm602, %v587, 0
        %v628 = vsel %vm602, %v588, 0
        %v631 = vsel %vm602, %v589, 0
        %v634 = vsel %vm602, %v590, 0
        %v637 = vsel %vm602, %v591, 0
        %v640 = vsel %vm602, %v592, 0
        %v643 = vsel %vm602, %v593, 0
        %v646 = vsel %vm602, %v594, 0
        %v649 = vsel %vm602, %v595, 0
        %651 = vmatprep.subr.bf16.mxu0 0
        %652 = vmatpush1.bf16.msra.mxu0 %v600
        %653 = vmatprep.subr.bf16.mxu0 0
        %654 = vmatpush1.bf16.msra.mxu0 0
        %655 = vmatprep.subr.bf16.mxu0 0
        %656 = vmatpush1.bf16.msra.mxu0 0
        %657 = vmatprep.subr.bf16.mxu0 0
        %658 = vmatpush1.bf16.msra.mxu0 0
        %659 = vmatprep.subr.bf16.mxu0 0
        %660 = vmatpush1.bf16.msra.mxu0 0
        %661 = vmatprep.subr.bf16.mxu0 0
        %662 = vmatpush1.bf16.msra.mxu0 0
        %663 = vmatprep.subr.bf16.mxu0 0
        %664 = vmatpush1.bf16.msra.mxu0 0
        %665 = vmatprep.subr.bf16.mxu0 0
        %666 = vmatpush1.bf16.msra.mxu0 0
        %667 = vmatprep.subr.bf16.mxu0 0
        %668 = vmatpush1.bf16.msra.mxu0 0
        %669 = vmatprep.subr.bf16.mxu0 0
        %670 = vmatpush1.bf16.msra.mxu0 0
        %671 = vmatprep.subr.bf16.mxu0 0
        %672 = vmatpush1.bf16.msra.mxu0 0
        %673 = vmatprep.subr.bf16.mxu0 0
        %674 = vmatpush1.bf16.msra.mxu0 0
        %675 = vmatprep.subr.bf16.mxu0 0
        %676 = vmatpush1.bf16.msra.mxu0 0
        %677 = vmatprep.subr.bf16.mxu0 0
        %678 = vmatpush1.bf16.msra.mxu0 0
        %679 = vmatprep.subr.bf16.mxu0 0
        %680 = vmatpush1.bf16.msra.mxu0 0
        %681 = vmatprep.subr.bf16.mxu0 0
        %682 = vmatpush1.bf16.msra.mxu0 0
        %683 = vmatprep.mubr.bf16.mxu0 0
        %684 = vmatmul.mubr.bf16.gmra.mrb[0].mxu0 %v604
        %v685 = vpop.f32.mrb[0].mxu0
        %v686 = vadd.f32 %v514, %v685
        %v687 = vpop.f32.mrb[0].mxu0
        %v688 = vpop.f32.mrb[0].mxu0
        %v689 = vadd.f32 %v514, %v688
        %v690 = vpop.f32.mrb[0].mxu0
        %691 = vmatprep.mubr.bf16.mxu0 0
        %692 = vmatmul.mubr.bf16.gmra.mrb[0].mxu0 %v607
        %v693 = vpop.f32.mrb[0].mxu0
        %v694 = vadd.f32 %v514, %v693
        %v695 = vpop.f32.mrb[0].mxu0
        %v696 = vpop.f32.mrb[0].mxu0
        %v697 = vadd.f32 %v514, %v696
        %v698 = vpop.f32.mrb[0].mxu0
        %699 = vmatprep.mubr.bf16.mxu0 0
        %700 = vmatmul.mubr.bf16.gmra.mrb[0].mxu0 %v610
        %v701 = vpop.f32.mrb[0].mxu0
        %v702 = vadd.f32 %v514, %v701
        %v703 = vpop.f32.mrb[0].mxu0
        %v704 = vpop.f32.mrb[0].mxu0
        %v705 = vadd.f32 %v514, %v704
        %v706 = vpop.f32.mrb[0].mxu0
        %707 = vmatprep.mubr.bf16.mxu0 0
        %708 = vmatmul.mubr.bf16.gmra.mrb[0].mxu0 %v613
        %v709 = vpop.f32.mrb[0].mxu0
        %v710 = vadd.f32 %v514, %v709
        %v711 = vpop.f32.mrb[0].mxu0
        %v712 = vpop.f32.mrb[0].mxu0
        %v713 = vadd.f32 %v514, %v712
        %v714 = vpop.f32.mrb[0].mxu0
        %715 = vmatprep.mubr.bf16.mxu0 0
        %716 = vmatmul.mubr.bf16.gmra.mrb[0].mxu0 %v616
        %v717 = vpop.f32.mrb[0].mxu0
        %v718 = vadd.f32 %v514, %v717
        %v719 = vpop.f32.mrb[0].mxu0
        %v720 = vpop.f32.mrb[0].mxu0
        %v721 = vadd.f32 %v514, %v720
        %v722 = vpop.f32.mrb[0].mxu0
        %723 = vmatprep.mubr.bf16.mxu0 0
        %724 = vmatmul.mubr.bf16.gmra.mrb[0].mxu0 %v619
        %v725 = vpop.f32.mrb[0].mxu0
        %v726 = vadd.f32 %v514, %v725
        %v727 = vpop.f32.mrb[0].mxu0
        %v728 = vpop.f32.mrb[0].mxu0
        %v729 = vadd.f32 %v514, %v728
        %v730 = vpop.f32.mrb[0].mxu0
        %731 = vmatprep.mubr.bf16.mxu0 0
        %732 = vmatmul.mubr.bf16.gmra.mrb[0].mxu0 %v622
        %v733 = vpop.f32.mrb[0].mxu0
        %v734 = vadd.f32 %v514, %v733
        %v735 = vpop.f32.mrb[0].mxu0
        %v736 = vpop.f32.mrb[0].mxu0
        %v737 = vadd.f32 %v514, %v736
        %v738 = vpop.f32.mrb[0].mxu0
        %739 = vmatprep.mubr.bf16.mxu0 0
        %740 = vmatmul.mubr.bf16.gmra.mrb[0].mxu0 %v625
        %v741 = vpop.f32.mrb[0].mxu0
        %v742 = vadd.f32 %v514, %v741
        %v743 = vpop.f32.mrb[0].mxu0
        %v744 = vpop.f32.mrb[0].mxu0
        %v745 = vadd.f32 %v514, %v744
        %v746 = vpop.f32.mrb[0].mxu0
        %747 = vmatprep.mubr.bf16.mxu0 0
        %748 = vmatmul.mubr.bf16.gmra.mrb[0].mxu0 %v628
        %v749 = vpop.f32.mrb[0].mxu0
        %v750 = vadd.f32 %v514, %v749
        %v751 = vpop.f32.mrb[0].mxu0
        %v752 = vpop.f32.mrb[0].mxu0
        %v753 = vadd.f32 %v514, %v752
        %v754 = vpop.f32.mrb[0].mxu0
        %755 = vmatprep.mubr.bf16.mxu0 0
        %756 = vmatmul.mubr.bf16.gmra.mrb[0].mxu0 %v631
        %v757 = vpop.f32.mrb[0].mxu0
        %v758 = vadd.f32 %v514, %v757
        %v759 = vpop.f32.mrb[0].mxu0
        %v760 = vpop.f32.mrb[0].mxu0
        %v761 = vadd.f32 %v514, %v760
        %v762 = vpop.f32.mrb[0].mxu0
        %763 = vmatprep.mubr.bf16.mxu0 0
        %764 = vmatmul.mubr.bf16.gmra.mrb[0].mxu0 %v634
        %v765 = vpop.f32.mrb[0].mxu0
        %v766 = vadd.f32 %v514, %v765
        %v767 = vpop.f32.mrb[0].mxu0
        %v768 = vpop.f32.mrb[0].mxu0
        %v769 = vadd.f32 %v514, %v768
        %v770 = vpop.f32.mrb[0].mxu0
        %771 = vmatprep.mubr.bf16.mxu0 0
        %772 = vmatmul.mubr.bf16.gmra.mrb[0].mxu0 %v637
        %v773 = vpop.f32.mrb[0].mxu0
        %v774 = vadd.f32 %v514, %v773
        %v775 = vpop.f32.mrb[0].mxu0
        %v776 = vpop.f32.mrb[0].mxu0
        %v777 = vadd.f32 %v514, %v776
        %v778 = vpop.f32.mrb[0].mxu0
        %779 = vmatprep.mubr.bf16.mxu0 0
        %780 = vmatmul.mubr.bf16.gmra.mrb[0].mxu0 %v640
        %v781 = vpop.f32.mrb[0].mxu0
        %v782 = vadd.f32 %v514, %v781
        %v783 = vpop.f32.mrb[0].mxu0
        %v784 = vpop.f32.mrb[0].mxu0
        %v785 = vadd.f32 %v514, %v784
        %v786 = vpop.f32.mrb[0].mxu0
        %787 = vmatprep.mubr.bf16.mxu0 0
        %788 = vmatmul.mubr.bf16.gmra.mrb[0].mxu0 %v643
        %v789 = vpop.f32.mrb[0].mxu0
        %v790 = vadd.f32 %v514, %v789
        %v791 = vpop.f32.mrb[0].mxu0
        %v792 = vpop.f32.mrb[0].mxu0
        %v793 = vadd.f32 %v514, %v792
        %v794 = vpop.f32.mrb[0].mxu0
        %795 = vmatprep.mubr.bf16.mxu0 0
        %796 = vmatmul.mubr.bf16.gmra.mrb[0].mxu0 %v646
        %v797 = vpop.f32.mrb[0].mxu0
        %v798 = vadd.f32 %v514, %v797
        %v799 = vpop.f32.mrb[0].mxu0
        %v800 = vpop.f32.mrb[0].mxu0
        %v801 = vadd.f32 %v514, %v800
        %v802 = vpop.f32.mrb[0].mxu0
        %803 = vmatprep.mubr.bf16.mxu0 0
        %804 = vmatmul.mubr.bf16.gmra.mrb[0].mxu0 %v649
        %v805 = vpop.f32.mrb[0].mxu0
        %v806 = vadd.f32 %v514, %v805
        %v807 = vpop.f32.mrb[0].mxu0
        %v808 = vpop.f32.mrb[0].mxu0
        %v809 = vadd.f32 %v514, %v808
        %v810 = vpop.f32.mrb[0].mxu0
        %811 = vdwg.mxu0
        %v812 = vmax.f32 %v686, 0.0
        %v813 = vmax.f32 %v689, 0.0
        %v814 = vmax.f32 %v694, 0.0
        %v815 = vmax.f32 %v697, 0.0
        %v816 = vmax.f32 %v702, 0.0
        %v817 = vmax.f32 %v705, 0.0
        %v818 = vmax.f32 %v710, 0.0
        %v819 = vmax.f32 %v713, 0.0
        %v820 = vmax.f32 %v718, 0.0
        %v821 = vmax.f32 %v721, 0.0
        %v822 = vmax.f32 %v726, 0.0
        %v823 = vmax.f32 %v729, 0.0
        %v824 = vmax.f32 %v734, 0.0
        %v825 = vmax.f32 %v737, 0.0
        %v826 = vmax.f32 %v742, 0.0
        %v827 = vmax.f32 %v745, 0.0
        %v828 = vmax.f32 %v750, 0.0
        %v829 = vmax.f32 %v753, 0.0
        %v830 = vmax.f32 %v758, 0.0
        %v831 = vmax.f32 %v761, 0.0
        %v832 = vmax.f32 %v766, 0.0
        %v833 = vmax.f32 %v769, 0.0
        %v834 = vmax.f32 %v774, 0.0
        %v835 = vmax.f32 %v777, 0.0
        %v836 = vmax.f32 %v782, 0.0
        %v837 = vmax.f32 %v785, 0.0
        %v838 = vmax.f32 %v790, 0.0
        %v839 = vmax.f32 %v793, 0.0
        %v840 = vmax.f32 %v798, 0.0
        %v841 = vmax.f32 %v801, 0.0
        %v842 = vmax.f32 %v806, 0.0
        %v843 = vmax.f32 %v809, 0.0
        %v844 = vpack.c.bf16 %v813, %v812
        %v845 = vpack.c.bf16 %v815, %v814
        %v846 = vpack.c.bf16 %v817, %v816
        %v847 = vpack.c.bf16 %v819, %v818
        %v848 = vpack.c.bf16 %v821, %v820
        %v849 = vpack.c.bf16 %v823, %v822
        %v850 = vpack.c.bf16 %v825, %v824
        %v851 = vpack.c.bf16 %v827, %v826
        %v852 = vpack.c.bf16 %v829, %v828
        %v853 = vpack.c.bf16 %v831, %v830
        %v854 = vpack.c.bf16 %v833, %v832
        %v855 = vpack.c.bf16 %v835, %v834
        %v856 = vpack.c.bf16 %v837, %v836
        %v857 = vpack.c.bf16 %v839, %v838
        %v858 = vpack.c.bf16 %v841, %v840
        %v859 = vpack.c.bf16 %v843, %v842
        %p860 = scmp.eq.s32.totalorder %s36, 0
        %v861 = vld [vmem:[%s416] sm:$0xf]
        %v862 = vld [vmem:[%s416 + $0x4] sm:$0xf]
        %v865 = vunpack.c.l.b16 %v861
        %v866 = vunpack.c.l.b16 %v862
        %v867 = vpack.c.b16 %v866, %v865
        %v869 = vsel %vm602, %v867, 0
        %871 = vmatprep.subr.bf16.mxu0 0
        %872 = vmatpush1.bf16.msra.mxu0 %v600
        %873 = vmatprep.subr.bf16.mxu0 0
        %874 = vmatpush1.bf16.msra.mxu0 0
        %875 = vmatprep.subr.bf16.mxu0 0
        %876 = vmatpush1.bf16.msra.mxu0 0
        %877 = vmatprep.subr.bf16.mxu0 0
        %878 = vmatpush1.bf16.msra.mxu0 0
        %879 = vmatprep.subr.bf16.mxu0 0
        %880 = vmatpush1.bf16.msra.mxu0 0
        %881 = vmatprep.subr.bf16.mxu0 0
        %882 = vmatpush1.bf16.msra.mxu0 0
        %883 = vmatprep.subr.bf16.mxu0 0
        %884 = vmatpush1.bf16.msra.mxu0 0
        %885 = vmatprep.subr.bf16.mxu0 0
        %886 = vmatpush1.bf16.msra.mxu0 0
        %887 = vmatprep.subr.bf16.mxu0 0
        %888 = vmatpush1.bf16.msra.mxu0 0
        %889 = vmatprep.subr.bf16.mxu0 0
        %890 = vmatpush1.bf16.msra.mxu0 0
        %891 = vmatprep.subr.bf16.mxu0 0
        %892 = vmatpush1.bf16.msra.mxu0 0
        %893 = vmatprep.subr.bf16.mxu0 0
        %894 = vmatpush1.bf16.msra.mxu0 0
        %895 = vmatprep.subr.bf16.mxu0 0
        %896 = vmatpush1.bf16.msra.mxu0 0
        %897 = vmatprep.subr.bf16.mxu0 0
        %898 = vmatpush1.bf16.msra.mxu0 0
        %899 = vmatprep.subr.bf16.mxu0 0
        %900 = vmatpush1.bf16.msra.mxu0 0
        %901 = vmatprep.subr.bf16.mxu0 0
        %902 = vmatpush1.bf16.msra.mxu0 0
        %903 = vmatprep.mubr.bf16.mxu0 0
        %904 = vmatmul.mubr.bf16.gmra.mrb[0].mxu0 %v869
        %v905 = vpop.f32.mrb[0].mxu0
        %v906 = vadd.f32 %v514, %v905
        %v907 = vpop.f32.mrb[0].mxu0
        %v908 = vpop.f32.mrb[0].mxu0
        %v909 = vadd.f32 %v514, %v908
        %v910 = vpop.f32.mrb[0].mxu0
        %911 = vdwg.mxu0
        %v912 = vmax.f32 %v906, 0.0
        %v913 = vmax.f32 %v909, 0.0
        %s914 = scalar_select %p860, 1, 0
        %v915 = vstv %s914
        %vm916 = vcmp.eq.s32.totalorder %v915, 1
        %v917 = vsel %vm916, 0.0, %v912
        %v918 = vsel %vm916, 0.0, %v913
        %v919 = vpack.c.bf16 %v918, %v917
        %v920 = vld [vmem:[#allocation8] sm:$0xff]
        %v921 = vld [vmem:[#allocation8 + $0x8] sm:$0xff]
        %v922 = vld [vmem:[#allocation8 + $0x10] sm:$0xff]
        %v923 = vld [vmem:[#allocation8 + $0x18] sm:$0xff]
        %v924 = vld [vmem:[#allocation8 + $0x20] sm:$0xff]
        %v925 = vld [vmem:[#allocation8 + $0x28] sm:$0xff]
        %v926 = vld [vmem:[#allocation8 + $0x30] sm:$0xff]
        %v927 = vld [vmem:[#allocation8 + $0x38] sm:$0xff]
        %v928 = vld [vmem:[#allocation8 + $0x40] sm:$0xff]
        %v929 = vld [vmem:[#allocation8 + $0x48] sm:$0xff]
        %v930 = vld [vmem:[#allocation8 + $0x50] sm:$0xff]
        %v931 = vld [vmem:[#allocation8 + $0x58] sm:$0xff]
        %v932 = vld [vmem:[#allocation8 + $0x60] sm:$0xff]
        %v933 = vld [vmem:[#allocation8 + $0x68] sm:$0xff]
        %v934 = vld [vmem:[#allocation8 + $0x70] sm:$0xff]
        %v935 = vld [vmem:[#allocation8 + $0x78] sm:$0xff]
        %v936 = vld [vmem:[#allocation8 + $0x80] sm:$0xff]
        %v937 = vld [vmem:[#allocation8 + $0x88] sm:$0xff]
        %v938 = vld [vmem:[#allocation8 + $0x90] sm:$0xff]
        %v939 = vld [vmem:[#allocation8 + $0x98] sm:$0xff]
        %v940 = vld [vmem:[#allocation8 + $0xa0] sm:$0xff]
        %v941 = vld [vmem:[#allocation8 + $0xa8] sm:$0xff]
        %v942 = vld [vmem:[#allocation8 + $0xb0] sm:$0xff]
        %v943 = vld [vmem:[#allocation8 + $0xb8] sm:$0xff]
        %v944 = vld [vmem:[#allocation8 + $0xc0] sm:$0xff]
        %v945 = vld [vmem:[#allocation8 + $0xc8] sm:$0xff]
        %v946 = vld [vmem:[#allocation8 + $0xd0] sm:$0xff]
        %v947 = vld [vmem:[#allocation8 + $0xd8] sm:$0xff]
        %v948 = vld [vmem:[#allocation8 + $0xe0] sm:$0xff]
        %v949 = vld [vmem:[#allocation8 + $0xe8] sm:$0xff]
        %v950 = vld [vmem:[#allocation8 + $0xf0] sm:$0xff]
        %v951 = vld [vmem:[#allocation8 + $0xf8] sm:$0xff]
        %v952 = vld [vmem:[#allocation8 + $0x100] sm:$0xff]
        %v953 = vld [vmem:[#allocation8 + $0x108] sm:$0xff]
        %v954 = vld [vmem:[#allocation8 + $0x110] sm:$0xff]
        %v955 = vld [vmem:[#allocation8 + $0x118] sm:$0xff]
        %v956 = vld [vmem:[#allocation8 + $0x120] sm:$0xff]
        %v957 = vld [vmem:[#allocation8 + $0x128] sm:$0xff]
        %v958 = vld [vmem:[#allocation8 + $0x130] sm:$0xff]
        %v959 = vld [vmem:[#allocation8 + $0x138] sm:$0xff]
        %v960 = vld [vmem:[#allocation8 + $0x140] sm:$0xff]
        %v961 = vld [vmem:[#allocation8 + $0x148] sm:$0xff]
        %v962 = vld [vmem:[#allocation8 + $0x150] sm:$0xff]
        %v963 = vld [vmem:[#allocation8 + $0x158] sm:$0xff]
        %v964 = vld [vmem:[#allocation8 + $0x160] sm:$0xff]
        %v965 = vld [vmem:[#allocation8 + $0x168] sm:$0xff]
        %v966 = vld [vmem:[#allocation8 + $0x170] sm:$0xff]
        %v967 = vld [vmem:[#allocation8 + $0x178] sm:$0xff]
        %v1016 = vunpack.c.l.b16 %v920
        %v1017 = vunpack.c.h.b16 %v920
        %v1018 = vunpack.c.l.b16 %v921
        %v1019 = vunpack.c.h.b16 %v921
        %v1020 = vunpack.c.l.b16 %v922
        %v1021 = vunpack.c.h.b16 %v922
        %v1022 = vunpack.c.l.b16 %v923
        %v1023 = vunpack.c.h.b16 %v923
        %v1024 = vunpack.c.l.b16 %v924
        %v1025 = vunpack.c.h.b16 %v924
        %v1026 = vunpack.c.l.b16 %v925
        %v1027 = vunpack.c.h.b16 %v925
        %v1028 = vunpack.c.l.b16 %v926
        %v1029 = vunpack.c.h.b16 %v926
        %v1030 = vunpack.c.l.b16 %v927
        %v1031 = vunpack.c.h.b16 %v927
        %v1032 = vunpack.c.l.b16 %v928
        %v1033 = vunpack.c.h.b16 %v928
        %v1034 = vunpack.c.l.b16 %v929
        %v1035 = vunpack.c.h.b16 %v929
        %v1036 = vunpack.c.l.b16 %v930
        %v1037 = vunpack.c.h.b16 %v930
        %v1038 = vunpack.c.l.b16 %v931
        %v1039 = vunpack.c.h.b16 %v931
        %v1040 = vunpack.c.l.b16 %v932
        %v1041 = vunpack.c.h.b16 %v932
        %v1042 = vunpack.c.l.b16 %v933
        %v1043 = vunpack.c.h.b16 %v933
        %v1044 = vunpack.c.l.b16 %v934
        %v1045 = vunpack.c.h.b16 %v934
        %v1046 = vunpack.c.l.b16 %v935
        %v1047 = vunpack.c.h.b16 %v935
        %v1048 = vunpack.c.l.b16 %v936
        %v1049 = vunpack.c.h.b16 %v936
        %v1050 = vunpack.c.l.b16 %v937
        %v1051 = vunpack.c.h.b16 %v937
        %v1052 = vunpack.c.l.b16 %v938
        %v1053 = vunpack.c.h.b16 %v938
        %v1054 = vunpack.c.l.b16 %v939
        %v1055 = vunpack.c.h.b16 %v939
        %v1056 = vunpack.c.l.b16 %v940
        %v1057 = vunpack.c.h.b16 %v940
        %v1058 = vunpack.c.l.b16 %v941
        %v1059 = vunpack.c.h.b16 %v941
        %v1060 = vunpack.c.l.b16 %v942
        %v1061 = vunpack.c.h.b16 %v942
        %v1062 = vunpack.c.l.b16 %v943
        %v1063 = vunpack.c.h.b16 %v943
        %v1064 = vunpack.c.l.b16 %v944
        %v1065 = vunpack.c.h.b16 %v944
        %v1066 = vunpack.c.l.b16 %v945
        %v1067 = vunpack.c.h.b16 %v945
        %v1068 = vunpack.c.l.b16 %v946
        %v1069 = vunpack.c.h.b16 %v946
        %v1070 = vunpack.c.l.b16 %v947
        %v1071 = vunpack.c.h.b16 %v947
        %v1072 = vunpack.c.l.b16 %v948
        %v1073 = vunpack.c.h.b16 %v948
        %v1074 = vunpack.c.l.b16 %v949
        %v1075 = vunpack.c.h.b16 %v949
        %v1076 = vunpack.c.l.b16 %v950
        %v1077 = vunpack.c.h.b16 %v950
        %v1078 = vunpack.c.l.b16 %v951
        %v1079 = vunpack.c.h.b16 %v951
        %v1080 = vunpack.c.l.b16 %v952
        %v1081 = vunpack.c.h.b16 %v952
        %v1082 = vunpack.c.l.b16 %v953
        %v1083 = vunpack.c.h.b16 %v953
        %v1084 = vunpack.c.l.b16 %v954
        %v1085 = vunpack.c.h.b16 %v954
        %v1086 = vunpack.c.l.b16 %v955
        %v1087 = vunpack.c.h.b16 %v955
        %v1088 = vunpack.c.l.b16 %v956
        %v1089 = vunpack.c.h.b16 %v956
        %v1090 = vunpack.c.l.b16 %v957
        %v1091 = vunpack.c.h.b16 %v957
        %v1092 = vunpack.c.l.b16 %v958
        %v1093 = vunpack.c.h.b16 %v958
        %v1094 = vunpack.c.l.b16 %v959
        %v1095 = vunpack.c.h.b16 %v959
        %v1096 = vunpack.c.l.b16 %v960
        %v1097 = vunpack.c.h.b16 %v960
        %v1098 = vunpack.c.l.b16 %v961
        %v1099 = vunpack.c.h.b16 %v961
        %v1100 = vunpack.c.l.b16 %v962
        %v1101 = vunpack.c.h.b16 %v962
        %v1102 = vunpack.c.l.b16 %v963
        %v1103 = vunpack.c.h.b16 %v963
        %v1104 = vunpack.c.l.b16 %v964
        %v1105 = vunpack.c.h.b16 %v964
        %v1106 = vunpack.c.l.b16 %v965
        %v1107 = vunpack.c.h.b16 %v965
        %v1108 = vunpack.c.l.b16 %v966
        %v1109 = vunpack.c.h.b16 %v966
        %v1110 = vunpack.c.l.b16 %v967
        %v1111 = vunpack.c.h.b16 %v967
        %v1112 = vpack.c.b16 %v1022, %v1016
        %v1113 = vpack.c.b16 %v1023, %v1017
        %v1114 = vpack.c.b16 %v1024, %v1018
        %v1115 = vpack.c.b16 %v1025, %v1019
        %v1116 = vpack.c.b16 %v1026, %v1020
        %v1117 = vpack.c.b16 %v1027, %v1021
        %v1118 = vpack.c.b16 %v1034, %v1028
        %v1119 = vpack.c.b16 %v1035, %v1029
        %v1120 = vpack.c.b16 %v1036, %v1030
        %v1121 = vpack.c.b16 %v1037, %v1031
        %v1122 = vpack.c.b16 %v1038, %v1032
        %v1123 = vpack.c.b16 %v1039, %v1033
        %v1124 = vpack.c.b16 %v1046, %v1040
        %v1125 = vpack.c.b16 %v1047, %v1041
        %v1126 = vpack.c.b16 %v1048, %v1042
        %v1127 = vpack.c.b16 %v1049, %v1043
        %v1128 = vpack.c.b16 %v1050, %v1044
        %v1129 = vpack.c.b16 %v1051, %v1045
        %v1130 = vpack.c.b16 %v1058, %v1052
        %v1131 = vpack.c.b16 %v1059, %v1053
        %v1132 = vpack.c.b16 %v1060, %v1054
        %v1133 = vpack.c.b16 %v1061, %v1055
        %v1134 = vpack.c.b16 %v1062, %v1056
        %v1135 = vpack.c.b16 %v1063, %v1057
        %v1136 = vpack.c.b16 %v1070, %v1064
        %v1137 = vpack.c.b16 %v1071, %v1065
        %v1138 = vpack.c.b16 %v1072, %v1066
        %v1139 = vpack.c.b16 %v1073, %v1067
        %v1140 = vpack.c.b16 %v1074, %v1068
        %v1141 = vpack.c.b16 %v1075, %v1069
        %v1142 = vpack.c.b16 %v1082, %v1076
        %v1143 = vpack.c.b16 %v1083, %v1077
        %v1144 = vpack.c.b16 %v1084, %v1078
        %v1145 = vpack.c.b16 %v1085, %v1079
        %v1146 = vpack.c.b16 %v1086, %v1080
        %v1147 = vpack.c.b16 %v1087, %v1081
        %v1148 = vpack.c.b16 %v1094, %v1088
        %v1149 = vpack.c.b16 %v1095, %v1089
        %v1150 = vpack.c.b16 %v1096, %v1090
        %v1151 = vpack.c.b16 %v1097, %v1091
        %v1152 = vpack.c.b16 %v1098, %v1092
        %v1153 = vpack.c.b16 %v1099, %v1093
        %v1154 = vpack.c.b16 %v1106, %v1100
        %v1155 = vpack.c.b16 %v1107, %v1101
        %v1156 = vpack.c.b16 %v1108, %v1102
        %v1157 = vpack.c.b16 %v1109, %v1103
        %v1158 = vpack.c.b16 %v1110, %v1104
        %v1159 = vpack.c.b16 %v1111, %v1105
        %1208 = vmatprep.subr.bf16.mxu0 %v1113
        %1209 = vmatpush1.bf16.msra.mxu0 %v1112
        %1210 = vmatprep.subr.bf16.mxu0 %v1119
        %1211 = vmatpush1.bf16.msra.mxu0 %v1118
        %1212 = vmatprep.subr.bf16.mxu0 %v1125
        %1213 = vmatpush1.bf16.msra.mxu0 %v1124
        %1214 = vmatprep.subr.bf16.mxu0 %v1131
        %1215 = vmatpush1.bf16.msra.mxu0 %v1130
        %1216 = vmatprep.subr.bf16.mxu0 %v1137
        %1217 = vmatpush1.bf16.msra.mxu0 %v1136
        %1218 = vmatprep.subr.bf16.mxu0 %v1143
        %1219 = vmatpush1.bf16.msra.mxu0 %v1142
        %1220 = vmatprep.subr.bf16.mxu0 %v1149
        %1221 = vmatpush1.bf16.msra.mxu0 %v1148
        %1222 = vmatprep.subr.bf16.mxu0 %v1155
        %1223 = vmatpush1.bf16.msra.mxu0 %v1154
        %1224 = vmatprep.subr.bf16.mxu0 0
        %1225 = vmatpush1.bf16.msra.mxu0 0
        %1226 = vmatprep.subr.bf16.mxu0 0
        %1227 = vmatpush1.bf16.msra.mxu0 0
        %1228 = vmatprep.subr.bf16.mxu0 0
        %1229 = vmatpush1.bf16.msra.mxu0 0
        %1230 = vmatprep.subr.bf16.mxu0 0
        %1231 = vmatpush1.bf16.msra.mxu0 0
        %1232 = vmatprep.subr.bf16.mxu0 0
        %1233 = vmatpush1.bf16.msra.mxu0 0
        %1234 = vmatprep.subr.bf16.mxu0 0
        %1235 = vmatpush1.bf16.msra.mxu0 0
        %1236 = vmatprep.subr.bf16.mxu0 0
        %1237 = vmatpush1.bf16.msra.mxu0 0
        %1238 = vmatprep.subr.bf16.mxu0 0
        %1239 = vmatpush1.bf16.msra.mxu0 0
        %1240 = vmatprep.mubr.bf16.mxu0 0
        %1241 = vmatmul.mubr.bf16.gmra.mrb[0].mxu0 %v844
        %v1242 = vpop.f32.mrb[0].mxu0
        %v1243 = vadd.f32 0.0, %v1242
        %v1244 = vpop.f32.mrb[0].mxu0
        %v1245 = vadd.f32 0.0, %v1244
        %v1246 = vpop.f32.mrb[0].mxu0
        %v1247 = vadd.f32 0.0, %v1246
        %v1248 = vpop.f32.mrb[0].mxu0
        %v1249 = vadd.f32 0.0, %v1248
        %1250 = vmatprep.mubr.bf16.mxu0 0
        %1251 = vmatmul.mubr.bf16.gmra.mrb[0].mxu0 %v845
        %v1252 = vpop.f32.mrb[0].mxu0
        %v1253 = vadd.f32 0.0, %v1252
        %v1254 = vpop.f32.mrb[0].mxu0
        %v1255 = vadd.f32 0.0, %v1254
        %v1256 = vpop.f32.mrb[0].mxu0
        %v1257 = vadd.f32 0.0, %v1256
        %v1258 = vpop.f32.mrb[0].mxu0
        %v1259 = vadd.f32 0.0, %v1258
        %1260 = vmatprep.mubr.bf16.mxu0 0
        %1261 = vmatmul.mubr.bf16.gmra.mrb[0].mxu0 %v846
        %v1262 = vpop.f32.mrb[0].mxu0
        %v1263 = vadd.f32 0.0, %v1262
        %v1264 = vpop.f32.mrb[0].mxu0
        %v1265 = vadd.f32 0.0, %v1264
        %v1266 = vpop.f32.mrb[0].mxu0
        %v1267 = vadd.f32 0.0, %v1266
        %v1268 = vpop.f32.mrb[0].mxu0
        %v1269 = vadd.f32 0.0, %v1268
        %1270 = vmatprep.mubr.bf16.mxu0 0
        %1271 = vmatmul.mubr.bf16.gmra.mrb[0].mxu0 %v847
        %v1272 = vpop.f32.mrb[0].mxu0
        %v1273 = vadd.f32 0.0, %v1272
        %v1274 = vpop.f32.mrb[0].mxu0
        %v1275 = vadd.f32 0.0, %v1274
        %v1276 = vpop.f32.mrb[0].mxu0
        %v1277 = vadd.f32 0.0, %v1276
        %v1278 = vpop.f32.mrb[0].mxu0
        %v1279 = vadd.f32 0.0, %v1278
        %1280 = vmatprep.mubr.bf16.mxu0 0
        %1281 = vmatmul.mubr.bf16.gmra.mrb[0].mxu0 %v848
        %v1282 = vpop.f32.mrb[0].mxu0
        %v1283 = vadd.f32 0.0, %v1282
        %v1284 = vpop.f32.mrb[0].mxu0
        %v1285 = vadd.f32 0.0, %v1284
        %v1286 = vpop.f32.mrb[0].mxu0
        %v1287 = vadd.f32 0.0, %v1286
        %v1288 = vpop.f32.mrb[0].mxu0
        %v1289 = vadd.f32 0.0, %v1288
        %1290 = vmatprep.mubr.bf16.mxu0 0
        %1291 = vmatmul.mubr.bf16.gmra.mrb[0].mxu0 %v849
        %v1292 = vpop.f32.mrb[0].mxu0
        %v1293 = vadd.f32 0.0, %v1292
        %v1294 = vpop.f32.mrb[0].mxu0
        %v1295 = vadd.f32 0.0, %v1294
        %v1296 = vpop.f32.mrb[0].mxu0
        %v1297 = vadd.f32 0.0, %v1296
        %v1298 = vpop.f32.mrb[0].mxu0
        %v1299 = vadd.f32 0.0, %v1298
        %1300 = vmatprep.mubr.bf16.mxu0 0
        %1301 = vmatmul.mubr.bf16.gmra.mrb[0].mxu0 %v850
        %v1302 = vpop.f32.mrb[0].mxu0
        %v1303 = vadd.f32 0.0, %v1302
        %v1304 = vpop.f32.mrb[0].mxu0
        %v1305 = vadd.f32 0.0, %v1304
        %v1306 = vpop.f32.mrb[0].mxu0
        %v1307 = vadd.f32 0.0, %v1306
        %v1308 = vpop.f32.mrb[0].mxu0
        %v1309 = vadd.f32 0.0, %v1308
        %1310 = vmatprep.mubr.bf16.mxu0 0
        %1311 = vmatmul.mubr.bf16.gmra.mrb[0].mxu0 %v851
        %v1312 = vpop.f32.mrb[0].mxu0
        %v1313 = vadd.f32 0.0, %v1312
        %v1314 = vpop.f32.mrb[0].mxu0
        %v1315 = vadd.f32 0.0, %v1314
        %v1316 = vpop.f32.mrb[0].mxu0
        %v1317 = vadd.f32 0.0, %v1316
        %v1318 = vpop.f32.mrb[0].mxu0
        %v1319 = vadd.f32 0.0, %v1318
        %1320 = vmatprep.mubr.bf16.mxu0 0
        %1321 = vmatmul.mubr.bf16.gmra.mrb[0].mxu0 %v852
        %v1322 = vpop.f32.mrb[0].mxu0
        %v1323 = vadd.f32 0.0, %v1322
        %v1324 = vpop.f32.mrb[0].mxu0
        %v1325 = vadd.f32 0.0, %v1324
        %v1326 = vpop.f32.mrb[0].mxu0
        %v1327 = vadd.f32 0.0, %v1326
        %v1328 = vpop.f32.mrb[0].mxu0
        %v1329 = vadd.f32 0.0, %v1328
        %1330 = vmatprep.mubr.bf16.mxu0 0
        %1331 = vmatmul.mubr.bf16.gmra.mrb[0].mxu0 %v853
        %v1332 = vpop.f32.mrb[0].mxu0
        %v1333 = vadd.f32 0.0, %v1332
        %v1334 = vpop.f32.mrb[0].mxu0
        %v1335 = vadd.f32 0.0, %v1334
        %v1336 = vpop.f32.mrb[0].mxu0
        %v1337 = vadd.f32 0.0, %v1336
        %v1338 = vpop.f32.mrb[0].mxu0
        %v1339 = vadd.f32 0.0, %v1338
        %1340 = vmatprep.mubr.bf16.mxu0 0
        %1341 = vmatmul.mubr.bf16.gmra.mrb[0].mxu0 %v854
        %v1342 = vpop.f32.mrb[0].mxu0
        %v1343 = vadd.f32 0.0, %v1342
        %v1344 = vpop.f32.mrb[0].mxu0
        %v1345 = vadd.f32 0.0, %v1344
        %v1346 = vpop.f32.mrb[0].mxu0
        %v1347 = vadd.f32 0.0, %v1346
        %v1348 = vpop.f32.mrb[0].mxu0
        %v1349 = vadd.f32 0.0, %v1348
        %1350 = vmatprep.mubr.bf16.mxu0 0
        %1351 = vmatmul.mubr.bf16.gmra.mrb[0].mxu0 %v855
        %v1352 = vpop.f32.mrb[0].mxu0
        %v1353 = vadd.f32 0.0, %v1352
        %v1354 = vpop.f32.mrb[0].mxu0
        %v1355 = vadd.f32 0.0, %v1354
        %v1356 = vpop.f32.mrb[0].mxu0
        %v1357 = vadd.f32 0.0, %v1356
        %v1358 = vpop.f32.mrb[0].mxu0
        %v1359 = vadd.f32 0.0, %v1358
        %1360 = vmatprep.mubr.bf16.mxu0 0
        %1361 = vmatmul.mubr.bf16.gmra.mrb[0].mxu0 %v856
        %v1362 = vpop.f32.mrb[0].mxu0
        %v1363 = vadd.f32 0.0, %v1362
        %v1364 = vpop.f32.mrb[0].mxu0
        %v1365 = vadd.f32 0.0, %v1364
        %v1366 = vpop.f32.mrb[0].mxu0
        %v1367 = vadd.f32 0.0, %v1366
        %v1368 = vpop.f32.mrb[0].mxu0
        %v1369 = vadd.f32 0.0, %v1368
        %1370 = vmatprep.mubr.bf16.mxu0 0
        %1371 = vmatmul.mubr.bf16.gmra.mrb[0].mxu0 %v857
        %v1372 = vpop.f32.mrb[0].mxu0
        %v1373 = vadd.f32 0.0, %v1372
        %v1374 = vpop.f32.mrb[0].mxu0
        %v1375 = vadd.f32 0.0, %v1374
        %v1376 = vpop.f32.mrb[0].mxu0
        %v1377 = vadd.f32 0.0, %v1376
        %v1378 = vpop.f32.mrb[0].mxu0
        %v1379 = vadd.f32 0.0, %v1378
        %1380 = vmatprep.mubr.bf16.mxu0 0
        %1381 = vmatmul.mubr.bf16.gmra.mrb[0].mxu0 %v858
        %v1382 = vpop.f32.mrb[0].mxu0
        %v1383 = vadd.f32 0.0, %v1382
        %v1384 = vpop.f32.mrb[0].mxu0
        %v1385 = vadd.f32 0.0, %v1384
        %v1386 = vpop.f32.mrb[0].mxu0
        %v1387 = vadd.f32 0.0, %v1386
        %v1388 = vpop.f32.mrb[0].mxu0
        %v1389 = vadd.f32 0.0, %v1388
        %1390 = vmatprep.mubr.bf16.mxu0 0
        %1391 = vmatmul.mubr.bf16.gmra.mrb[0].mxu0 %v859
        %v1392 = vpop.f32.mrb[0].mxu0
        %v1393 = vadd.f32 0.0, %v1392
        %v1394 = vpop.f32.mrb[0].mxu0
        %v1395 = vadd.f32 0.0, %v1394
        %v1396 = vpop.f32.mrb[0].mxu0
        %v1397 = vadd.f32 0.0, %v1396
        %v1398 = vpop.f32.mrb[0].mxu0
        %v1399 = vadd.f32 0.0, %v1398
        %1400 = vdwg.mxu0
        %1401 = vmatprep.subr.bf16.mxu0 %v1115
        %1402 = vmatpush1.bf16.msra.mxu0 %v1114
        %1403 = vmatprep.subr.bf16.mxu0 %v1121
        %1404 = vmatpush1.bf16.msra.mxu0 %v1120
        %1405 = vmatprep.subr.bf16.mxu0 %v1127
        %1406 = vmatpush1.bf16.msra.mxu0 %v1126
        %1407 = vmatprep.subr.bf16.mxu0 %v1133
        %1408 = vmatpush1.bf16.msra.mxu0 %v1132
        %1409 = vmatprep.subr.bf16.mxu0 %v1139
        %1410 = vmatpush1.bf16.msra.mxu0 %v1138
        %1411 = vmatprep.subr.bf16.mxu0 %v1145
        %1412 = vmatpush1.bf16.msra.mxu0 %v1144
        %1413 = vmatprep.subr.bf16.mxu0 %v1151
        %1414 = vmatpush1.bf16.msra.mxu0 %v1150
        %1415 = vmatprep.subr.bf16.mxu0 %v1157
        %1416 = vmatpush1.bf16.msra.mxu0 %v1156
        %1417 = vmatprep.subr.bf16.mxu0 0
        %1418 = vmatpush1.bf16.msra.mxu0 0
        %1419 = vmatprep.subr.bf16.mxu0 0
        %1420 = vmatpush1.bf16.msra.mxu0 0
        %1421 = vmatprep.subr.bf16.mxu0 0
        %1422 = vmatpush1.bf16.msra.mxu0 0
        %1423 = vmatprep.subr.bf16.mxu0 0
        %1424 = vmatpush1.bf16.msra.mxu0 0
        %1425 = vmatprep.subr.bf16.mxu0 0
        %1426 = vmatpush1.bf16.msra.mxu0 0
        %1427 = vmatprep.subr.bf16.mxu0 0
        %1428 = vmatpush1.bf16.msra.mxu0 0
        %1429 = vmatprep.subr.bf16.mxu0 0
        %1430 = vmatpush1.bf16.msra.mxu0 0
        %1431 = vmatprep.subr.bf16.mxu0 0
        %1432 = vmatpush1.bf16.msra.mxu0 0
        %1433 = vmatprep.mubr.bf16.mxu0 0
        %1434 = vmatmul.mubr.bf16.gmra.mrb[0].mxu0 %v844
        %v1435 = vpop.f32.mrb[0].mxu0
        %v1436 = vadd.f32 0.0, %v1435
        %v1437 = vpop.f32.mrb[0].mxu0
        %v1438 = vadd.f32 0.0, %v1437
        %v1439 = vpop.f32.mrb[0].mxu0
        %v1440 = vadd.f32 0.0, %v1439
        %v1441 = vpop.f32.mrb[0].mxu0
        %v1442 = vadd.f32 0.0, %v1441
        %1443 = vmatprep.mubr.bf16.mxu0 0
        %1444 = vmatmul.mubr.bf16.gmra.mrb[0].mxu0 %v845
        %v1445 = vpop.f32.mrb[0].mxu0
        %v1446 = vadd.f32 0.0, %v1445
        %v1447 = vpop.f32.mrb[0].mxu0
        %v1448 = vadd.f32 0.0, %v1447
        %v1449 = vpop.f32.mrb[0].mxu0
        %v1450 = vadd.f32 0.0, %v1449
        %v1451 = vpop.f32.mrb[0].mxu0
        %v1452 = vadd.f32 0.0, %v1451
        %1453 = vmatprep.mubr.bf16.mxu0 0
        %1454 = vmatmul.mubr.bf16.gmra.mrb[0].mxu0 %v846
        %v1455 = vpop.f32.mrb[0].mxu0
        %v1456 = vadd.f32 0.0, %v1455
        %v1457 = vpop.f32.mrb[0].mxu0
        %v1458 = vadd.f32 0.0, %v1457
        %v1459 = vpop.f32.mrb[0].mxu0
        %v1460 = vadd.f32 0.0, %v1459
        %v1461 = vpop.f32.mrb[0].mxu0
        %v1462 = vadd.f32 0.0, %v1461
        %1463 = vmatprep.mubr.bf16.mxu0 0
        %1464 = vmatmul.mubr.bf16.gmra.mrb[0].mxu0 %v847
        %v1465 = vpop.f32.mrb[0].mxu0
        %v1466 = vadd.f32 0.0, %v1465
        %v1467 = vpop.f32.mrb[0].mxu0
        %v1468 = vadd.f32 0.0, %v1467
        %v1469 = vpop.f32.mrb[0].mxu0
        %v1470 = vadd.f32 0.0, %v1469
        %v1471 = vpop.f32.mrb[0].mxu0
        %v1472 = vadd.f32 0.0, %v1471
        %1473 = vmatprep.mubr.bf16.mxu0 0
        %1474 = vmatmul.mubr.bf16.gmra.mrb[0].mxu0 %v848
        %v1475 = vpop.f32.mrb[0].mxu0
        %v1476 = vadd.f32 0.0, %v1475
        %v1477 = vpop.f32.mrb[0].mxu0
        %v1478 = vadd.f32 0.0, %v1477
        %v1479 = vpop.f32.mrb[0].mxu0
        %v1480 = vadd.f32 0.0, %v1479
        %v1481 = vpop.f32.mrb[0].mxu0
        %v1482 = vadd.f32 0.0, %v1481
        %1483 = vmatprep.mubr.bf16.mxu0 0
        %1484 = vmatmul.mubr.bf16.gmra.mrb[0].mxu0 %v849
        %v1485 = vpop.f32.mrb[0].mxu0
        %v1486 = vadd.f32 0.0, %v1485
        %v1487 = vpop.f32.mrb[0].mxu0
        %v1488 = vadd.f32 0.0, %v1487
        %v1489 = vpop.f32.mrb[0].mxu0
        %v1490 = vadd.f32 0.0, %v1489
        %v1491 = vpop.f32.mrb[0].mxu0
        %v1492 = vadd.f32 0.0, %v1491
        %1493 = vmatprep.mubr.bf16.mxu0 0
        %1494 = vmatmul.mubr.bf16.gmra.mrb[0].mxu0 %v850
        %v1495 = vpop.f32.mrb[0].mxu0
        %v1496 = vadd.f32 0.0, %v1495
        %v1497 = vpop.f32.mrb[0].mxu0
        %v1498 = vadd.f32 0.0, %v1497
        %v1499 = vpop.f32.mrb[0].mxu0
        %v1500 = vadd.f32 0.0, %v1499
        %v1501 = vpop.f32.mrb[0].mxu0
        %v1502 = vadd.f32 0.0, %v1501
        %1503 = vmatprep.mubr.bf16.mxu0 0
        %1504 = vmatmul.mubr.bf16.gmra.mrb[0].mxu0 %v851
        %v1505 = vpop.f32.mrb[0].mxu0
        %v1506 = vadd.f32 0.0, %v1505
        %v1507 = vpop.f32.mrb[0].mxu0
        %v1508 = vadd.f32 0.0, %v1507
        %v1509 = vpop.f32.mrb[0].mxu0
        %v1510 = vadd.f32 0.0, %v1509
        %v1511 = vpop.f32.mrb[0].mxu0
        %v1512 = vadd.f32 0.0, %v1511
        %1513 = vmatprep.mubr.bf16.mxu0 0
        %1514 = vmatmul.mubr.bf16.gmra.mrb[0].mxu0 %v852
        %v1515 = vpop.f32.mrb[0].mxu0
        %v1516 = vadd.f32 0.0, %v1515
        %v1517 = vpop.f32.mrb[0].mxu0
        %v1518 = vadd.f32 0.0, %v1517
        %v1519 = vpop.f32.mrb[0].mxu0
        %v1520 = vadd.f32 0.0, %v1519
        %v1521 = vpop.f32.mrb[0].mxu0
        %v1522 = vadd.f32 0.0, %v1521
        %1523 = vmatprep.mubr.bf16.mxu0 0
        %1524 = vmatmul.mubr.bf16.gmra.mrb[0].mxu0 %v853
        %v1525 = vpop.f32.mrb[0].mxu0
        %v1526 = vadd.f32 0.0, %v1525
        %v1527 = vpop.f32.mrb[0].mxu0
        %v1528 = vadd.f32 0.0, %v1527
        %v1529 = vpop.f32.mrb[0].mxu0
        %v1530 = vadd.f32 0.0, %v1529
        %v1531 = vpop.f32.mrb[0].mxu0
        %v1532 = vadd.f32 0.0, %v1531
        %1533 = vmatprep.mubr.bf16.mxu0 0
        %1534 = vmatmul.mubr.bf16.gmra.mrb[0].mxu0 %v854
        %v1535 = vpop.f32.mrb[0].mxu0
        %v1536 = vadd.f32 0.0, %v1535
        %v1537 = vpop.f32.mrb[0].mxu0
        %v1538 = vadd.f32 0.0, %v1537
        %v1539 = vpop.f32.mrb[0].mxu0
        %v1540 = vadd.f32 0.0, %v1539
        %v1541 = vpop.f32.mrb[0].mxu0
        %v1542 = vadd.f32 0.0, %v1541
        %1543 = vmatprep.mubr.bf16.mxu0 0
        %1544 = vmatmul.mubr.bf16.gmra.mrb[0].mxu0 %v855
        %v1545 = vpop.f32.mrb[0].mxu0
        %v1546 = vadd.f32 0.0, %v1545
        %v1547 = vpop.f32.mrb[0].mxu0
        %v1548 = vadd.f32 0.0, %v1547
        %v1549 = vpop.f32.mrb[0].mxu0
        %v1550 = vadd.f32 0.0, %v1549
        %v1551 = vpop.f32.mrb[0].mxu0
        %v1552 = vadd.f32 0.0, %v1551
        %1553 = vmatprep.mubr.bf16.mxu0 0
        %1554 = vmatmul.mubr.bf16.gmra.mrb[0].mxu0 %v856
        %v1555 = vpop.f32.mrb[0].mxu0
        %v1556 = vadd.f32 0.0, %v1555
        %v1557 = vpop.f32.mrb[0].mxu0
        %v1558 = vadd.f32 0.0, %v1557
        %v1559 = vpop.f32.mrb[0].mxu0
        %v1560 = vadd.f32 0.0, %v1559
        %v1561 = vpop.f32.mrb[0].mxu0
        %v1562 = vadd.f32 0.0, %v1561
        %1563 = vmatprep.mubr.bf16.mxu0 0
        %1564 = vmatmul.mubr.bf16.gmra.mrb[0].mxu0 %v857
        %v1565 = vpop.f32.mrb[0].mxu0
        %v1566 = vadd.f32 0.0, %v1565
        %v1567 = vpop.f32.mrb[0].mxu0
        %v1568 = vadd.f32 0.0, %v1567
        %v1569 = vpop.f32.mrb[0].mxu0
        %v1570 = vadd.f32 0.0, %v1569
        %v1571 = vpop.f32.mrb[0].mxu0
        %v1572 = vadd.f32 0.0, %v1571
        %1573 = vmatprep.mubr.bf16.mxu0 0
        %1574 = vmatmul.mubr.bf16.gmra.mrb[0].mxu0 %v858
        %v1575 = vpop.f32.mrb[0].mxu0
        %v1576 = vadd.f32 0.0, %v1575
        %v1577 = vpop.f32.mrb[0].mxu0
        %v1578 = vadd.f32 0.0, %v1577
        %v1579 = vpop.f32.mrb[0].mxu0
        %v1580 = vadd.f32 0.0, %v1579
        %v1581 = vpop.f32.mrb[0].mxu0
        %v1582 = vadd.f32 0.0, %v1581
        %1583 = vmatprep.mubr.bf16.mxu0 0
        %1584 = vmatmul.mubr.bf16.gmra.mrb[0].mxu0 %v859
        %v1585 = vpop.f32.mrb[0].mxu0
        %v1586 = vadd.f32 0.0, %v1585
        %v1587 = vpop.f32.mrb[0].mxu0
        %v1588 = vadd.f32 0.0, %v1587
        %v1589 = vpop.f32.mrb[0].mxu0
        %v1590 = vadd.f32 0.0, %v1589
        %v1591 = vpop.f32.mrb[0].mxu0
        %v1592 = vadd.f32 0.0, %v1591
        %1593 = vdwg.mxu0
        %1594 = vmatprep.subr.bf16.mxu0 %v1117
        %1595 = vmatpush1.bf16.msra.mxu0 %v1116
        %1596 = vmatprep.subr.bf16.mxu0 %v1123
        %1597 = vmatpush1.bf16.msra.mxu0 %v1122
        %1598 = vmatprep.subr.bf16.mxu0 %v1129
        %1599 = vmatpush1.bf16.msra.mxu0 %v1128
        %1600 = vmatprep.subr.bf16.mxu0 %v1135
        %1601 = vmatpush1.bf16.msra.mxu0 %v1134
        %1602 = vmatprep.subr.bf16.mxu0 %v1141
        %1603 = vmatpush1.bf16.msra.mxu0 %v1140
        %1604 = vmatprep.subr.bf16.mxu0 %v1147
        %1605 = vmatpush1.bf16.msra.mxu0 %v1146
        %1606 = vmatprep.subr.bf16.mxu0 %v1153
        %1607 = vmatpush1.bf16.msra.mxu0 %v1152
        %1608 = vmatprep.subr.bf16.mxu0 %v1159
        %1609 = vmatpush1.bf16.msra.mxu0 %v1158
        %1610 = vmatprep.subr.bf16.mxu0 0
        %1611 = vmatpush1.bf16.msra.mxu0 0
        %1612 = vmatprep.subr.bf16.mxu0 0
        %1613 = vmatpush1.bf16.msra.mxu0 0
        %1614 = vmatprep.subr.bf16.mxu0 0
        %1615 = vmatpush1.bf16.msra.mxu0 0
        %1616 = vmatprep.subr.bf16.mxu0 0
        %1617 = vmatpush1.bf16.msra.mxu0 0
        %1618 = vmatprep.subr.bf16.mxu0 0
        %1619 = vmatpush1.bf16.msra.mxu0 0
        %1620 = vmatprep.subr.bf16.mxu0 0
        %1621 = vmatpush1.bf16.msra.mxu0 0
        %1622 = vmatprep.subr.bf16.mxu0 0
        %1623 = vmatpush1.bf16.msra.mxu0 0
        %1624 = vmatprep.subr.bf16.mxu0 0
        %1625 = vmatpush1.bf16.msra.mxu0 0
        %1626 = vmatprep.mubr.bf16.mxu0 0
        %1627 = vmatmul.mubr.bf16.gmra.mrb[0].mxu0 %v844
        %v1628 = vpop.f32.mrb[0].mxu0
        %v1629 = vadd.f32 0.0, %v1628
        %v1630 = vpop.f32.mrb[0].mxu0
        %v1631 = vadd.f32 0.0, %v1630
        %v1632 = vpop.f32.mrb[0].mxu0
        %v1633 = vadd.f32 0.0, %v1632
        %v1634 = vpop.f32.mrb[0].mxu0
        %v1635 = vadd.f32 0.0, %v1634
        %1636 = vmatprep.mubr.bf16.mxu0 0
        %1637 = vmatmul.mubr.bf16.gmra.mrb[0].mxu0 %v845
        %v1638 = vpop.f32.mrb[0].mxu0
        %v1639 = vadd.f32 0.0, %v1638
        %v1640 = vpop.f32.mrb[0].mxu0
        %v1641 = vadd.f32 0.0, %v1640
        %v1642 = vpop.f32.mrb[0].mxu0
        %v1643 = vadd.f32 0.0, %v1642
        %v1644 = vpop.f32.mrb[0].mxu0
        %v1645 = vadd.f32 0.0, %v1644
        %1646 = vmatprep.mubr.bf16.mxu0 0
        %1647 = vmatmul.mubr.bf16.gmra.mrb[0].mxu0 %v846
        %v1648 = vpop.f32.mrb[0].mxu0
        %v1649 = vadd.f32 0.0, %v1648
        %v1650 = vpop.f32.mrb[0].mxu0
        %v1651 = vadd.f32 0.0, %v1650
        %v1652 = vpop.f32.mrb[0].mxu0
        %v1653 = vadd.f32 0.0, %v1652
        %v1654 = vpop.f32.mrb[0].mxu0
        %v1655 = vadd.f32 0.0, %v1654
        %1656 = vmatprep.mubr.bf16.mxu0 0
        %1657 = vmatmul.mubr.bf16.gmra.mrb[0].mxu0 %v847
        %v1658 = vpop.f32.mrb[0].mxu0
        %v1659 = vadd.f32 0.0, %v1658
        %v1660 = vpop.f32.mrb[0].mxu0
        %v1661 = vadd.f32 0.0, %v1660
        %v1662 = vpop.f32.mrb[0].mxu0
        %v1663 = vadd.f32 0.0, %v1662
        %v1664 = vpop.f32.mrb[0].mxu0
        %v1665 = vadd.f32 0.0, %v1664
        %1666 = vmatprep.mubr.bf16.mxu0 0
        %1667 = vmatmul.mubr.bf16.gmra.mrb[0].mxu0 %v848
        %v1668 = vpop.f32.mrb[0].mxu0
        %v1669 = vadd.f32 0.0, %v1668
        %v1670 = vpop.f32.mrb[0].mxu0
        %v1671 = vadd.f32 0.0, %v1670
        %v1672 = vpop.f32.mrb[0].mxu0
        %v1673 = vadd.f32 0.0, %v1672
        %v1674 = vpop.f32.mrb[0].mxu0
        %v1675 = vadd.f32 0.0, %v1674
        %1676 = vmatprep.mubr.bf16.mxu0 0
        %1677 = vmatmul.mubr.bf16.gmra.mrb[0].mxu0 %v849
        %v1678 = vpop.f32.mrb[0].mxu0
        %v1679 = vadd.f32 0.0, %v1678
        %v1680 = vpop.f32.mrb[0].mxu0
        %v1681 = vadd.f32 0.0, %v1680
        %v1682 = vpop.f32.mrb[0].mxu0
        %v1683 = vadd.f32 0.0, %v1682
        %v1684 = vpop.f32.mrb[0].mxu0
        %v1685 = vadd.f32 0.0, %v1684
        %1686 = vmatprep.mubr.bf16.mxu0 0
        %1687 = vmatmul.mubr.bf16.gmra.mrb[0].mxu0 %v850
        %v1688 = vpop.f32.mrb[0].mxu0
        %v1689 = vadd.f32 0.0, %v1688
        %v1690 = vpop.f32.mrb[0].mxu0
        %v1691 = vadd.f32 0.0, %v1690
        %v1692 = vpop.f32.mrb[0].mxu0
        %v1693 = vadd.f32 0.0, %v1692
        %v1694 = vpop.f32.mrb[0].mxu0
        %v1695 = vadd.f32 0.0, %v1694
        %1696 = vmatprep.mubr.bf16.mxu0 0
        %1697 = vmatmul.mubr.bf16.gmra.mrb[0].mxu0 %v851
        %v1698 = vpop.f32.mrb[0].mxu0
        %v1699 = vadd.f32 0.0, %v1698
        %v1700 = vpop.f32.mrb[0].mxu0
        %v1701 = vadd.f32 0.0, %v1700
        %v1702 = vpop.f32.mrb[0].mxu0
        %v1703 = vadd.f32 0.0, %v1702
        %v1704 = vpop.f32.mrb[0].mxu0
        %v1705 = vadd.f32 0.0, %v1704
        %1706 = vmatprep.mubr.bf16.mxu0 0
        %1707 = vmatmul.mubr.bf16.gmra.mrb[0].mxu0 %v852
        %v1708 = vpop.f32.mrb[0].mxu0
        %v1709 = vadd.f32 0.0, %v1708
        %v1710 = vpop.f32.mrb[0].mxu0
        %v1711 = vadd.f32 0.0, %v1710
        %v1712 = vpop.f32.mrb[0].mxu0
        %v1713 = vadd.f32 0.0, %v1712
        %v1714 = vpop.f32.mrb[0].mxu0
        %v1715 = vadd.f32 0.0, %v1714
        %1716 = vmatprep.mubr.bf16.mxu0 0
        %1717 = vmatmul.mubr.bf16.gmra.mrb[0].mxu0 %v853
        %v1718 = vpop.f32.mrb[0].mxu0
        %v1719 = vadd.f32 0.0, %v1718
        %v1720 = vpop.f32.mrb[0].mxu0
        %v1721 = vadd.f32 0.0, %v1720
        %v1722 = vpop.f32.mrb[0].mxu0
        %v1723 = vadd.f32 0.0, %v1722
        %v1724 = vpop.f32.mrb[0].mxu0
        %v1725 = vadd.f32 0.0, %v1724
        %1726 = vmatprep.mubr.bf16.mxu0 0
        %1727 = vmatmul.mubr.bf16.gmra.mrb[0].mxu0 %v854
        %v1728 = vpop.f32.mrb[0].mxu0
        %v1729 = vadd.f32 0.0, %v1728
        %v1730 = vpop.f32.mrb[0].mxu0
        %v1731 = vadd.f32 0.0, %v1730
        %v1732 = vpop.f32.mrb[0].mxu0
        %v1733 = vadd.f32 0.0, %v1732
        %v1734 = vpop.f32.mrb[0].mxu0
        %v1735 = vadd.f32 0.0, %v1734
        %1736 = vmatprep.mubr.bf16.mxu0 0
        %1737 = vmatmul.mubr.bf16.gmra.mrb[0].mxu0 %v855
        %v1738 = vpop.f32.mrb[0].mxu0
        %v1739 = vadd.f32 0.0, %v1738
        %v1740 = vpop.f32.mrb[0].mxu0
        %v1741 = vadd.f32 0.0, %v1740
        %v1742 = vpop.f32.mrb[0].mxu0
        %v1743 = vadd.f32 0.0, %v1742
        %v1744 = vpop.f32.mrb[0].mxu0
        %v1745 = vadd.f32 0.0, %v1744
        %1746 = vmatprep.mubr.bf16.mxu0 0
        %1747 = vmatmul.mubr.bf16.gmra.mrb[0].mxu0 %v856
        %v1748 = vpop.f32.mrb[0].mxu0
        %v1749 = vadd.f32 0.0, %v1748
        %v1750 = vpop.f32.mrb[0].mxu0
        %v1751 = vadd.f32 0.0, %v1750
        %v1752 = vpop.f32.mrb[0].mxu0
        %v1753 = vadd.f32 0.0, %v1752
        %v1754 = vpop.f32.mrb[0].mxu0
        %v1755 = vadd.f32 0.0, %v1754
        %1756 = vmatprep.mubr.bf16.mxu0 0
        %1757 = vmatmul.mubr.bf16.gmra.mrb[0].mxu0 %v857
        %v1758 = vpop.f32.mrb[0].mxu0
        %v1759 = vadd.f32 0.0, %v1758
        %v1760 = vpop.f32.mrb[0].mxu0
        %v1761 = vadd.f32 0.0, %v1760
        %v1762 = vpop.f32.mrb[0].mxu0
        %v1763 = vadd.f32 0.0, %v1762
        %v1764 = vpop.f32.mrb[0].mxu0
        %v1765 = vadd.f32 0.0, %v1764
        %1766 = vmatprep.mubr.bf16.mxu0 0
        %1767 = vmatmul.mubr.bf16.gmra.mrb[0].mxu0 %v858
        %v1768 = vpop.f32.mrb[0].mxu0
        %v1769 = vadd.f32 0.0, %v1768
        %v1770 = vpop.f32.mrb[0].mxu0
        %v1771 = vadd.f32 0.0, %v1770
        %v1772 = vpop.f32.mrb[0].mxu0
        %v1773 = vadd.f32 0.0, %v1772
        %v1774 = vpop.f32.mrb[0].mxu0
        %v1775 = vadd.f32 0.0, %v1774
        %1776 = vmatprep.mubr.bf16.mxu0 0
        %1777 = vmatmul.mubr.bf16.gmra.mrb[0].mxu0 %v859
        %v1778 = vpop.f32.mrb[0].mxu0
        %v1779 = vadd.f32 0.0, %v1778
        %v1780 = vpop.f32.mrb[0].mxu0
        %v1781 = vadd.f32 0.0, %v1780
        %v1782 = vpop.f32.mrb[0].mxu0
        %v1783 = vadd.f32 0.0, %v1782
        %v1784 = vpop.f32.mrb[0].mxu0
        %v1785 = vadd.f32 0.0, %v1784
        %1786 = vdwg.mxu0
        %v1787 = vld [vmem:[#allocation10] sm:$0xff]
        %v1788 = vld [vmem:[#allocation10 + $0x8] sm:$0xf]
        %v1789 = vld [vmem:[#allocation10 + $0xc] sm:$0xff]
        %v1790 = vld [vmem:[#allocation10 + $0x14] sm:$0xf]
        %v1791 = vld [vmem:[#allocation10 + $0x18] sm:$0xff]
        %v1792 = vld [vmem:[#allocation10 + $0x20] sm:$0xf]
        %v1793 = vld [vmem:[#allocation10 + $0x24] sm:$0xff]
        %v1794 = vld [vmem:[#allocation10 + $0x2c] sm:$0xf]
        %v1795 = vld [vmem:[#allocation10 + $0x30] sm:$0xff]
        %v1796 = vld [vmem:[#allocation10 + $0x38] sm:$0xf]
        %v1797 = vld [vmem:[#allocation10 + $0x3c] sm:$0xff]
        %v1798 = vld [vmem:[#allocation10 + $0x44] sm:$0xf]
        %v1799 = vld [vmem:[#allocation10 + $0x48] sm:$0xff]
        %v1800 = vld [vmem:[#allocation10 + $0x50] sm:$0xf]
        %v1801 = vld [vmem:[#allocation10 + $0x54] sm:$0xff]
        %v1802 = vld [vmem:[#allocation10 + $0x5c] sm:$0xf]
        %v1803 = vld [vmem:[#allocation10 + $0x60] sm:$0xff]
        %v1804 = vld [vmem:[#allocation10 + $0x68] sm:$0xf]
        %v1805 = vld [vmem:[#allocation10 + $0x6c] sm:$0xff]
        %v1806 = vld [vmem:[#allocation10 + $0x74] sm:$0xf]
        %v1807 = vld [vmem:[#allocation10 + $0x78] sm:$0xff]
        %v1808 = vld [vmem:[#allocation10 + $0x80] sm:$0xf]
        %v1809 = vld [vmem:[#allocation10 + $0x84] sm:$0xff]
        %v1810 = vld [vmem:[#allocation10 + $0x8c] sm:$0xf]
        %v1811 = vld [vmem:[#allocation10 + $0x90] sm:$0xff]
        %v1812 = vld [vmem:[#allocation10 + $0x98] sm:$0xf]
        %v1813 = vld [vmem:[#allocation10 + $0x9c] sm:$0xff]
        %v1814 = vld [vmem:[#allocation10 + $0xa4] sm:$0xf]
        %v1815 = vld [vmem:[#allocation10 + $0xa8] sm:$0xff]
        %v1816 = vld [vmem:[#allocation10 + $0xb0] sm:$0xf]
        %v1817 = vld [vmem:[#allocation10 + $0xb4] sm:$0xff]
        %v1818 = vld [vmem:[#allocation10 + $0xbc] sm:$0xf]
        %v1851 = vunpack.c.l.b16 %v1787
        %v1852 = vunpack.c.h.b16 %v1787
        %v1853 = vunpack.c.l.b16 %v1788
        %v1854 = vunpack.c.l.b16 %v1789
        %v1855 = vunpack.c.h.b16 %v1789
        %v1856 = vunpack.c.l.b16 %v1790
        %v1857 = vunpack.c.l.b16 %v1791
        %v1858 = vunpack.c.h.b16 %v1791
        %v1859 = vunpack.c.l.b16 %v1792
        %v1860 = vunpack.c.l.b16 %v1793
        %v1861 = vunpack.c.h.b16 %v1793
        %v1862 = vunpack.c.l.b16 %v1794
        %v1863 = vunpack.c.l.b16 %v1795
        %v1864 = vunpack.c.h.b16 %v1795
        %v1865 = vunpack.c.l.b16 %v1796
        %v1866 = vunpack.c.l.b16 %v1797
        %v1867 = vunpack.c.h.b16 %v1797
        %v1868 = vunpack.c.l.b16 %v1798
        %v1869 = vunpack.c.l.b16 %v1799
        %v1870 = vunpack.c.h.b16 %v1799
        %v1871 = vunpack.c.l.b16 %v1800
        %v1872 = vunpack.c.l.b16 %v1801
        %v1873 = vunpack.c.h.b16 %v1801
        %v1874 = vunpack.c.l.b16 %v1802
        %v1875 = vunpack.c.l.b16 %v1803
        %v1876 = vunpack.c.h.b16 %v1803
        %v1877 = vunpack.c.l.b16 %v1804
        %v1878 = vunpack.c.l.b16 %v1805
        %v1879 = vunpack.c.h.b16 %v1805
        %v1880 = vunpack.c.l.b16 %v1806
        %v1881 = vunpack.c.l.b16 %v1807
        %v1882 = vunpack.c.h.b16 %v1807
        %v1883 = vunpack.c.l.b16 %v1808
        %v1884 = vunpack.c.l.b16 %v1809
        %v1885 = vunpack.c.h.b16 %v1809
        %v1886 = vunpack.c.l.b16 %v1810
        %v1887 = vunpack.c.l.b16 %v1811
        %v1888 = vunpack.c.h.b16 %v1811
        %v1889 = vunpack.c.l.b16 %v1812
        %v1890 = vunpack.c.l.b16 %v1813
        %v1891 = vunpack.c.h.b16 %v1813
        %v1892 = vunpack.c.l.b16 %v1814
        %v1893 = vunpack.c.l.b16 %v1815
        %v1894 = vunpack.c.h.b16 %v1815
        %v1895 = vunpack.c.l.b16 %v1816
        %v1896 = vunpack.c.l.b16 %v1817
        %v1897 = vunpack.c.h.b16 %v1817
        %v1898 = vunpack.c.l.b16 %v1818
        %v1899 = vpack.c.b16 %v1854, %v1851
        %v1900 = vpack.c.b16 %v1855, %v1852
        %v1901 = vpack.c.b16 %v1856, %v1853
        %v1902 = vpack.c.b16 %v1860, %v1857
        %v1903 = vpack.c.b16 %v1861, %v1858
        %v1904 = vpack.c.b16 %v1862, %v1859
        %v1905 = vpack.c.b16 %v1866, %v1863
        %v1906 = vpack.c.b16 %v1867, %v1864
        %v1907 = vpack.c.b16 %v1868, %v1865
        %v1908 = vpack.c.b16 %v1872, %v1869
        %v1909 = vpack.c.b16 %v1873, %v1870
        %v1910 = vpack.c.b16 %v1874, %v1871
        %v1911 = vpack.c.b16 %v1878, %v1875
        %v1912 = vpack.c.b16 %v1879, %v1876
        %v1913 = vpack.c.b16 %v1880, %v1877
        %v1914 = vpack.c.b16 %v1884, %v1881
        %v1915 = vpack.c.b16 %v1885, %v1882
        %v1916 = vpack.c.b16 %v1886, %v1883
        %v1917 = vpack.c.b16 %v1890, %v1887
        %v1918 = vpack.c.b16 %v1891, %v1888
        %v1919 = vpack.c.b16 %v1892, %v1889
        %v1920 = vpack.c.b16 %v1896, %v1893
        %v1921 = vpack.c.b16 %v1897, %v1894
        %v1922 = vpack.c.b16 %v1898, %v1895
        %1947 = vmatprep.subr.bf16.mxu0 %v1900
        %1948 = vmatpush1.bf16.msra.mxu0 %v1899
        %1949 = vmatprep.subr.bf16.mxu0 %v1903
        %1950 = vmatpush1.bf16.msra.mxu0 %v1902
        %1951 = vmatprep.subr.bf16.mxu0 %v1906
        %1952 = vmatpush1.bf16.msra.mxu0 %v1905
        %1953 = vmatprep.subr.bf16.mxu0 %v1909
        %1954 = vmatpush1.bf16.msra.mxu0 %v1908
        %1955 = vmatprep.subr.bf16.mxu0 %v1912
        %1956 = vmatpush1.bf16.msra.mxu0 %v1911
        %1957 = vmatprep.subr.bf16.mxu0 %v1915
        %1958 = vmatpush1.bf16.msra.mxu0 %v1914
        %1959 = vmatprep.subr.bf16.mxu0 %v1918
        %1960 = vmatpush1.bf16.msra.mxu0 %v1917
        %1961 = vmatprep.subr.bf16.mxu0 %v1921
        %1962 = vmatpush1.bf16.msra.mxu0 %v1920
        %1963 = vmatprep.subr.bf16.mxu0 0
        %1964 = vmatpush1.bf16.msra.mxu0 0
        %1965 = vmatprep.subr.bf16.mxu0 0
        %1966 = vmatpush1.bf16.msra.mxu0 0
        %1967 = vmatprep.subr.bf16.mxu0 0
        %1968 = vmatpush1.bf16.msra.mxu0 0
        %1969 = vmatprep.subr.bf16.mxu0 0
        %1970 = vmatpush1.bf16.msra.mxu0 0
        %1971 = vmatprep.subr.bf16.mxu0 0
        %1972 = vmatpush1.bf16.msra.mxu0 0
        %1973 = vmatprep.subr.bf16.mxu0 0
        %1974 = vmatpush1.bf16.msra.mxu0 0
        %1975 = vmatprep.subr.bf16.mxu0 0
        %1976 = vmatpush1.bf16.msra.mxu0 0
        %1977 = vmatprep.subr.bf16.mxu0 0
        %1978 = vmatpush1.bf16.msra.mxu0 0
        %1979 = vmatprep.mubr.bf16.mxu0 0
        %1980 = vmatmul.mubr.bf16.gmra.mrb[0].mxu0 %v845
        %v1981 = vpop.f32.mrb[0].mxu0
        %v1982 = vadd.f32 0.0, %v1981
        %v1983 = vpop.f32.mrb[0].mxu0
        %v1984 = vadd.f32 0.0, %v1983
        %v1985 = vpop.f32.mrb[0].mxu0
        %v1986 = vadd.f32 0.0, %v1985
        %v1987 = vpop.f32.mrb[0].mxu0
        %v1988 = vadd.f32 0.0, %v1987
        %1989 = vmatprep.mubr.bf16.mxu0 0
        %1990 = vmatmul.mubr.bf16.gmra.mrb[0].mxu0 %v846
        %v1991 = vpop.f32.mrb[0].mxu0
        %v1992 = vadd.f32 0.0, %v1991
        %v1993 = vpop.f32.mrb[0].mxu0
        %v1994 = vadd.f32 0.0, %v1993
        %v1995 = vpop.f32.mrb[0].mxu0
        %v1996 = vadd.f32 0.0, %v1995
        %v1997 = vpop.f32.mrb[0].mxu0
        %v1998 = vadd.f32 0.0, %v1997
        %1999 = vmatprep.mubr.bf16.mxu0 0
        %2000 = vmatmul.mubr.bf16.gmra.mrb[0].mxu0 %v847
        %v2001 = vpop.f32.mrb[0].mxu0
        %v2002 = vadd.f32 0.0, %v2001
        %v2003 = vpop.f32.mrb[0].mxu0
        %v2004 = vadd.f32 0.0, %v2003
        %v2005 = vpop.f32.mrb[0].mxu0
        %v2006 = vadd.f32 0.0, %v2005
        %v2007 = vpop.f32.mrb[0].mxu0
        %v2008 = vadd.f32 0.0, %v2007
        %2009 = vmatprep.mubr.bf16.mxu0 0
        %2010 = vmatmul.mubr.bf16.gmra.mrb[0].mxu0 %v848
        %v2011 = vpop.f32.mrb[0].mxu0
        %v2012 = vadd.f32 0.0, %v2011
        %v2013 = vpop.f32.mrb[0].mxu0
        %v2014 = vadd.f32 0.0, %v2013
        %v2015 = vpop.f32.mrb[0].mxu0
        %v2016 = vadd.f32 0.0, %v2015
        %v2017 = vpop.f32.mrb[0].mxu0
        %v2018 = vadd.f32 0.0, %v2017
        %2019 = vmatprep.mubr.bf16.mxu0 0
        %2020 = vmatmul.mubr.bf16.gmra.mrb[0].mxu0 %v849
        %v2021 = vpop.f32.mrb[0].mxu0
        %v2022 = vadd.f32 0.0, %v2021
        %v2023 = vpop.f32.mrb[0].mxu0
        %v2024 = vadd.f32 0.0, %v2023
        %v2025 = vpop.f32.mrb[0].mxu0
        %v2026 = vadd.f32 0.0, %v2025
        %v2027 = vpop.f32.mrb[0].mxu0
        %v2028 = vadd.f32 0.0, %v2027
        %2029 = vmatprep.mubr.bf16.mxu0 0
        %2030 = vmatmul.mubr.bf16.gmra.mrb[0].mxu0 %v850
        %v2031 = vpop.f32.mrb[0].mxu0
        %v2032 = vadd.f32 0.0, %v2031
        %v2033 = vpop.f32.mrb[0].mxu0
        %v2034 = vadd.f32 0.0, %v2033
        %v2035 = vpop.f32.mrb[0].mxu0
        %v2036 = vadd.f32 0.0, %v2035
        %v2037 = vpop.f32.mrb[0].mxu0
        %v2038 = vadd.f32 0.0, %v2037
        %2039 = vmatprep.mubr.bf16.mxu0 0
        %2040 = vmatmul.mubr.bf16.gmra.mrb[0].mxu0 %v851
        %v2041 = vpop.f32.mrb[0].mxu0
        %v2042 = vadd.f32 0.0, %v2041
        %v2043 = vpop.f32.mrb[0].mxu0
        %v2044 = vadd.f32 0.0, %v2043
        %v2045 = vpop.f32.mrb[0].mxu0
        %v2046 = vadd.f32 0.0, %v2045
        %v2047 = vpop.f32.mrb[0].mxu0
        %v2048 = vadd.f32 0.0, %v2047
        %2049 = vmatprep.mubr.bf16.mxu0 0
        %2050 = vmatmul.mubr.bf16.gmra.mrb[0].mxu0 %v852
        %v2051 = vpop.f32.mrb[0].mxu0
        %v2052 = vadd.f32 0.0, %v2051
        %v2053 = vpop.f32.mrb[0].mxu0
        %v2054 = vadd.f32 0.0, %v2053
        %v2055 = vpop.f32.mrb[0].mxu0
        %v2056 = vadd.f32 0.0, %v2055
        %v2057 = vpop.f32.mrb[0].mxu0
        %v2058 = vadd.f32 0.0, %v2057
        %2059 = vmatprep.mubr.bf16.mxu0 0
        %2060 = vmatmul.mubr.bf16.gmra.mrb[0].mxu0 %v853
        %v2061 = vpop.f32.mrb[0].mxu0
        %v2062 = vadd.f32 0.0, %v2061
        %v2063 = vpop.f32.mrb[0].mxu0
        %v2064 = vadd.f32 0.0, %v2063
        %v2065 = vpop.f32.mrb[0].mxu0
        %v2066 = vadd.f32 0.0, %v2065
        %v2067 = vpop.f32.mrb[0].mxu0
        %v2068 = vadd.f32 0.0, %v2067
        %2069 = vmatprep.mubr.bf16.mxu0 0
        %2070 = vmatmul.mubr.bf16.gmra.mrb[0].mxu0 %v854
        %v2071 = vpop.f32.mrb[0].mxu0
        %v2072 = vadd.f32 0.0, %v2071
        %v2073 = vpop.f32.mrb[0].mxu0
        %v2074 = vadd.f32 0.0, %v2073
        %v2075 = vpop.f32.mrb[0].mxu0
        %v2076 = vadd.f32 0.0, %v2075
        %v2077 = vpop.f32.mrb[0].mxu0
        %v2078 = vadd.f32 0.0, %v2077
        %2079 = vmatprep.mubr.bf16.mxu0 0
        %2080 = vmatmul.mubr.bf16.gmra.mrb[0].mxu0 %v855
        %v2081 = vpop.f32.mrb[0].mxu0
        %v2082 = vadd.f32 0.0, %v2081
        %v2083 = vpop.f32.mrb[0].mxu0
        %v2084 = vadd.f32 0.0, %v2083
        %v2085 = vpop.f32.mrb[0].mxu0
        %v2086 = vadd.f32 0.0, %v2085
        %v2087 = vpop.f32.mrb[0].mxu0
        %v2088 = vadd.f32 0.0, %v2087
        %2089 = vmatprep.mubr.bf16.mxu0 0
        %2090 = vmatmul.mubr.bf16.gmra.mrb[0].mxu0 %v856
        %v2091 = vpop.f32.mrb[0].mxu0
        %v2092 = vadd.f32 0.0, %v2091
        %v2093 = vpop.f32.mrb[0].mxu0
        %v2094 = vadd.f32 0.0, %v2093
        %v2095 = vpop.f32.mrb[0].mxu0
        %v2096 = vadd.f32 0.0, %v2095
        %v2097 = vpop.f32.mrb[0].mxu0
        %v2098 = vadd.f32 0.0, %v2097
        %2099 = vmatprep.mubr.bf16.mxu0 0
        %2100 = vmatmul.mubr.bf16.gmra.mrb[0].mxu0 %v857
        %v2101 = vpop.f32.mrb[0].mxu0
        %v2102 = vadd.f32 0.0, %v2101
        %v2103 = vpop.f32.mrb[0].mxu0
        %v2104 = vadd.f32 0.0, %v2103
        %v2105 = vpop.f32.mrb[0].mxu0
        %v2106 = vadd.f32 0.0, %v2105
        %v2107 = vpop.f32.mrb[0].mxu0
        %v2108 = vadd.f32 0.0, %v2107
        %2109 = vmatprep.mubr.bf16.mxu0 0
        %2110 = vmatmul.mubr.bf16.gmra.mrb[0].mxu0 %v858
        %v2111 = vpop.f32.mrb[0].mxu0
        %v2112 = vadd.f32 0.0, %v2111
        %v2113 = vpop.f32.mrb[0].mxu0
        %v2114 = vadd.f32 0.0, %v2113
        %v2115 = vpop.f32.mrb[0].mxu0
        %v2116 = vadd.f32 0.0, %v2115
        %v2117 = vpop.f32.mrb[0].mxu0
        %v2118 = vadd.f32 0.0, %v2117
        %2119 = vmatprep.mubr.bf16.mxu0 0
        %2120 = vmatmul.mubr.bf16.gmra.mrb[0].mxu0 %v859
        %v2121 = vpop.f32.mrb[0].mxu0
        %v2122 = vadd.f32 0.0, %v2121
        %v2123 = vpop.f32.mrb[0].mxu0
        %v2124 = vadd.f32 0.0, %v2123
        %v2125 = vpop.f32.mrb[0].mxu0
        %v2126 = vadd.f32 0.0, %v2125
        %v2127 = vpop.f32.mrb[0].mxu0
        %v2128 = vadd.f32 0.0, %v2127
        %2129 = vmatprep.mubr.bf16.mxu0 0
        %2130 = vmatmul.mubr.bf16.gmra.mrb[0].mxu0 %v919
        %v2131 = vpop.f32.mrb[0].mxu0
        %v2132 = vadd.f32 0.0, %v2131
        %v2133 = vpop.f32.mrb[0].mxu0
        %v2134 = vadd.f32 0.0, %v2133
        %v2135 = vpop.f32.mrb[0].mxu0
        %v2136 = vadd.f32 0.0, %v2135
        %v2137 = vpop.f32.mrb[0].mxu0
        %v2138 = vadd.f32 0.0, %v2137
        %2139 = vdwg.mxu0
        %2140 = vmatprep.subr.bf16.mxu0 0
        %2141 = vmatpush1.bf16.msra.mxu0 %v1901
        %2142 = vmatprep.subr.bf16.mxu0 0
        %2143 = vmatpush1.bf16.msra.mxu0 %v1904
        %2144 = vmatprep.subr.bf16.mxu0 0
        %2145 = vmatpush1.bf16.msra.mxu0 %v1907
        %2146 = vmatprep.subr.bf16.mxu0 0
        %2147 = vmatpush1.bf16.msra.mxu0 %v1910
        %2148 = vmatprep.subr.bf16.mxu0 0
        %2149 = vmatpush1.bf16.msra.mxu0 %v1913
        %2150 = vmatprep.subr.bf16.mxu0 0
        %2151 = vmatpush1.bf16.msra.mxu0 %v1916
        %2152 = vmatprep.subr.bf16.mxu0 0
        %2153 = vmatpush1.bf16.msra.mxu0 %v1919
        %2154 = vmatprep.subr.bf16.mxu0 0
        %2155 = vmatpush1.bf16.msra.mxu0 %v1922
        %2156 = vmatprep.subr.bf16.mxu0 0
        %2157 = vmatpush1.bf16.msra.mxu0 0
        %2158 = vmatprep.subr.bf16.mxu0 0
        %2159 = vmatpush1.bf16.msra.mxu0 0
        %2160 = vmatprep.subr.bf16.mxu0 0
        %2161 = vmatpush1.bf16.msra.mxu0 0
        %2162 = vmatprep.subr.bf16.mxu0 0
        %2163 = vmatpush1.bf16.msra.mxu0 0
        %2164 = vmatprep.subr.bf16.mxu0 0
        %2165 = vmatpush1.bf16.msra.mxu0 0
        %2166 = vmatprep.subr.bf16.mxu0 0
        %2167 = vmatpush1.bf16.msra.mxu0 0
        %2168 = vmatprep.subr.bf16.mxu0 0
        %2169 = vmatpush1.bf16.msra.mxu0 0
        %2170 = vmatprep.subr.bf16.mxu0 0
        %2171 = vmatpush1.bf16.msra.mxu0 0
        %2172 = vmatprep.mubr.bf16.mxu0 0
        %2173 = vmatmul.mubr.bf16.gmra.mrb[0].mxu0 %v845
        %v2174 = vpop.f32.mrb[0].mxu0
        %v2175 = vadd.f32 0.0, %v2174
        %v2176 = vpop.f32.mrb[0].mxu0
        %v2177 = vpop.f32.mrb[0].mxu0
        %v2178 = vadd.f32 0.0, %v2177
        %v2179 = vpop.f32.mrb[0].mxu0
        %2180 = vmatprep.mubr.bf16.mxu0 0
        %2181 = vmatmul.mubr.bf16.gmra.mrb[0].mxu0 %v846
        %v2182 = vpop.f32.mrb[0].mxu0
        %v2183 = vadd.f32 0.0, %v2182
        %v2184 = vpop.f32.mrb[0].mxu0
        %v2185 = vpop.f32.mrb[0].mxu0
        %v2186 = vadd.f32 0.0, %v2185
        %v2187 = vpop.f32.mrb[0].mxu0
        %2188 = vmatprep.mubr.bf16.mxu0 0
        %2189 = vmatmul.mubr.bf16.gmra.mrb[0].mxu0 %v847
        %v2190 = vpop.f32.mrb[0].mxu0
        %v2191 = vadd.f32 0.0, %v2190
        %v2192 = vpop.f32.mrb[0].mxu0
        %v2193 = vpop.f32.mrb[0].mxu0
        %v2194 = vadd.f32 0.0, %v2193
        %v2195 = vpop.f32.mrb[0].mxu0
        %2196 = vmatprep.mubr.bf16.mxu0 0
        %2197 = vmatmul.mubr.bf16.gmra.mrb[0].mxu0 %v848
        %v2198 = vpop.f32.mrb[0].mxu0
        %v2199 = vadd.f32 0.0, %v2198
        %v2200 = vpop.f32.mrb[0].mxu0
        %v2201 = vpop.f32.mrb[0].mxu0
        %v2202 = vadd.f32 0.0, %v2201
        %v2203 = vpop.f32.mrb[0].mxu0
        %2204 = vmatprep.mubr.bf16.mxu0 0
        %2205 = vmatmul.mubr.bf16.gmra.mrb[0].mxu0 %v849
        %v2206 = vpop.f32.mrb[0].mxu0
        %v2207 = vadd.f32 0.0, %v2206
        %v2208 = vpop.f32.mrb[0].mxu0
        %v2209 = vpop.f32.mrb[0].mxu0
        %v2210 = vadd.f32 0.0, %v2209
        %v2211 = vpop.f32.mrb[0].mxu0
        %2212 = vmatprep.mubr.bf16.mxu0 0
        %2213 = vmatmul.mubr.bf16.gmra.mrb[0].mxu0 %v850
        %v2214 = vpop.f32.mrb[0].mxu0
        %v2215 = vadd.f32 0.0, %v2214
        %v2216 = vpop.f32.mrb[0].mxu0
        %v2217 = vpop.f32.mrb[0].mxu0
        %v2218 = vadd.f32 0.0, %v2217
        %v2219 = vpop.f32.mrb[0].mxu0
        %2220 = vmatprep.mubr.bf16.mxu0 0
        %2221 = vmatmul.mubr.bf16.gmra.mrb[0].mxu0 %v851
        %v2222 = vpop.f32.mrb[0].mxu0
        %v2223 = vadd.f32 0.0, %v2222
        %v2224 = vpop.f32.mrb[0].mxu0
        %v2225 = vpop.f32.mrb[0].mxu0
        %v2226 = vadd.f32 0.0, %v2225
        %v2227 = vpop.f32.mrb[0].mxu0
        %2228 = vmatprep.mubr.bf16.mxu0 0
        %2229 = vmatmul.mubr.bf16.gmra.mrb[0].mxu0 %v852
        %v2230 = vpop.f32.mrb[0].mxu0
        %v2231 = vadd.f32 0.0, %v2230
        %v2232 = vpop.f32.mrb[0].mxu0
        %v2233 = vpop.f32.mrb[0].mxu0
        %v2234 = vadd.f32 0.0, %v2233
        %v2235 = vpop.f32.mrb[0].mxu0
        %2236 = vmatprep.mubr.bf16.mxu0 0
        %2237 = vmatmul.mubr.bf16.gmra.mrb[0].mxu0 %v853
        %v2238 = vpop.f32.mrb[0].mxu0
        %v2239 = vadd.f32 0.0, %v2238
        %v2240 = vpop.f32.mrb[0].mxu0
        %v2241 = vpop.f32.mrb[0].mxu0
        %v2242 = vadd.f32 0.0, %v2241
        %v2243 = vpop.f32.mrb[0].mxu0
        %2244 = vmatprep.mubr.bf16.mxu0 0
        %2245 = vmatmul.mubr.bf16.gmra.mrb[0].mxu0 %v854
        %v2246 = vpop.f32.mrb[0].mxu0
        %v2247 = vadd.f32 0.0, %v2246
        %v2248 = vpop.f32.mrb[0].mxu0
        %v2249 = vpop.f32.mrb[0].mxu0
        %v2250 = vadd.f32 0.0, %v2249
        %v2251 = vpop.f32.mrb[0].mxu0
        %2252 = vmatprep.mubr.bf16.mxu0 0
        %2253 = vmatmul.mubr.bf16.gmra.mrb[0].mxu0 %v855
        %v2254 = vpop.f32.mrb[0].mxu0
        %v2255 = vadd.f32 0.0, %v2254
        %v2256 = vpop.f32.mrb[0].mxu0
        %v2257 = vpop.f32.mrb[0].mxu0
        %v2258 = vadd.f32 0.0, %v2257
        %v2259 = vpop.f32.mrb[0].mxu0
        %2260 = vmatprep.mubr.bf16.mxu0 0
        %2261 = vmatmul.mubr.bf16.gmra.mrb[0].mxu0 %v856
        %v2262 = vpop.f32.mrb[0].mxu0
        %v2263 = vadd.f32 0.0, %v2262
        %v2264 = vpop.f32.mrb[0].mxu0
        %v2265 = vpop.f32.mrb[0].mxu0
        %v2266 = vadd.f32 0.0, %v2265
        %v2267 = vpop.f32.mrb[0].mxu0
        %2268 = vmatprep.mubr.bf16.mxu0 0
        %2269 = vmatmul.mubr.bf16.gmra.mrb[0].mxu0 %v857
        %v2270 = vpop.f32.mrb[0].mxu0
        %v2271 = vadd.f32 0.0, %v2270
        %v2272 = vpop.f32.mrb[0].mxu0
        %v2273 = vpop.f32.mrb[0].mxu0
        %v2274 = vadd.f32 0.0, %v2273
        %v2275 = vpop.f32.mrb[0].mxu0
        %2276 = vmatprep.mubr.bf16.mxu0 0
        %2277 = vmatmul.mubr.bf16.gmra.mrb[0].mxu0 %v858
        %v2278 = vpop.f32.mrb[0].mxu0
        %v2279 = vadd.f32 0.0, %v2278
        %v2280 = vpop.f32.mrb[0].mxu0
        %v2281 = vpop.f32.mrb[0].mxu0
        %v2282 = vadd.f32 0.0, %v2281
        %v2283 = vpop.f32.mrb[0].mxu0
        %2284 = vmatprep.mubr.bf16.mxu0 0
        %2285 = vmatmul.mubr.bf16.gmra.mrb[0].mxu0 %v859
        %v2286 = vpop.f32.mrb[0].mxu0
        %v2287 = vadd.f32 0.0, %v2286
        %v2288 = vpop.f32.mrb[0].mxu0
        %v2289 = vpop.f32.mrb[0].mxu0
        %v2290 = vadd.f32 0.0, %v2289
        %v2291 = vpop.f32.mrb[0].mxu0
        %2292 = vmatprep.mubr.bf16.mxu0 0
        %2293 = vmatmul.mubr.bf16.gmra.mrb[0].mxu0 %v919
        %v2294 = vpop.f32.mrb[0].mxu0
        %v2295 = vadd.f32 0.0, %v2294
        %v2296 = vpop.f32.mrb[0].mxu0
        %v2297 = vpop.f32.mrb[0].mxu0
        %v2298 = vadd.f32 0.0, %v2297
        %v2299 = vpop.f32.mrb[0].mxu0
        %2300 = vdwg.mxu0
        %vm2333 = vcmask 1046528
        %v2334 = vrot.slane %v1629, 1
        %v2335 = vrot.slane %v1633, 1
        %v2336 = vsel %vm2333, %v2334, %v2335
        %v2337 = vrot.slane %v1639, 1
        %v2338 = vrot.slane %v1643, 1
        %v2339 = vsel %vm2333, %v2337, %v2338
        %v2340 = vrot.slane %v1649, 1
        %v2341 = vrot.slane %v1653, 1
        %v2342 = vsel %vm2333, %v2340, %v2341
        %v2343 = vrot.slane %v1659, 1
        %v2344 = vrot.slane %v1663, 1
        %v2345 = vsel %vm2333, %v2343, %v2344
        %v2346 = vrot.slane %v1669, 1
        %v2347 = vrot.slane %v1673, 1
        %v2348 = vsel %vm2333, %v2346, %v2347
        %v2349 = vrot.slane %v1679, 1
        %v2350 = vrot.slane %v1683, 1
        %v2351 = vsel %vm2333, %v2349, %v2350
        %v2352 = vrot.slane %v1689, 1
        %v2353 = vrot.slane %v1693, 1
        %v2354 = vsel %vm2333, %v2352, %v2353
        %v2355 = vrot.slane %v1699, 1
        %v2356 = vrot.slane %v1703, 1
        %v2357 = vsel %vm2333, %v2355, %v2356
        %v2358 = vrot.slane %v1709, 1
        %v2359 = vrot.slane %v1713, 1
        %v2360 = vsel %vm2333, %v2358, %v2359
        %v2361 = vrot.slane %v1719, 1
        %v2362 = vrot.slane %v1723, 1
        %v2363 = vsel %vm2333, %v2361, %v2362
        %v2364 = vrot.slane %v1729, 1
        %v2365 = vrot.slane %v1733, 1
        %v2366 = vsel %vm2333, %v2364, %v2365
        %v2367 = vrot.slane %v1739, 1
        %v2368 = vrot.slane %v1743, 1
        %v2369 = vsel %vm2333, %v2367, %v2368
        %v2370 = vrot.slane %v1749, 1
        %v2371 = vrot.slane %v1753, 1
        %v2372 = vsel %vm2333, %v2370, %v2371
        %v2373 = vrot.slane %v1759, 1
        %v2374 = vrot.slane %v1763, 1
        %v2375 = vsel %vm2333, %v2373, %v2374
        %v2376 = vrot.slane %v1769, 1
        %v2377 = vrot.slane %v1773, 1
        %v2378 = vsel %vm2333, %v2376, %v2377
        %v2379 = vrot.slane %v1779, 1
        %v2380 = vrot.slane %v1783, 1
        %v2381 = vsel %vm2333, %v2379, %v2380
        %v2414 = vsel %vm2333, %v2335, 0.0
        %v2415 = vsel %vm2333, %v2338, 0.0
        %v2416 = vsel %vm2333, %v2341, 0.0
        %v2417 = vsel %vm2333, %v2344, 0.0
        %v2418 = vsel %vm2333, %v2347, 0.0
        %v2419 = vsel %vm2333, %v2350, 0.0
        %v2420 = vsel %vm2333, %v2353, 0.0
        %v2421 = vsel %vm2333, %v2356, 0.0
        %v2422 = vsel %vm2333, %v2359, 0.0
        %v2423 = vsel %vm2333, %v2362, 0.0
        %v2424 = vsel %vm2333, %v2365, 0.0
        %v2425 = vsel %vm2333, %v2368, 0.0
        %v2426 = vsel %vm2333, %v2371, 0.0
        %v2427 = vsel %vm2333, %v2374, 0.0
        %v2428 = vsel %vm2333, %v2377, 0.0
        %v2429 = vsel %vm2333, %v2380, 0.0
        %v2430 = vadd.f32 %v1245, %v2336
        %v2431 = vadd.f32 %v1249, %v2414
        %v2432 = vadd.f32 %v1255, %v2339
        %v2433 = vadd.f32 %v1259, %v2415
        %v2434 = vadd.f32 %v1265, %v2342
        %v2435 = vadd.f32 %v1269, %v2416
        %v2436 = vadd.f32 %v1275, %v2345
        %v2437 = vadd.f32 %v1279, %v2417
        %v2438 = vadd.f32 %v1285, %v2348
        %v2439 = vadd.f32 %v1289, %v2418
        %v2440 = vadd.f32 %v1295, %v2351
        %v2441 = vadd.f32 %v1299, %v2419
        %v2442 = vadd.f32 %v1305, %v2354
        %v2443 = vadd.f32 %v1309, %v2420
        %v2444 = vadd.f32 %v1315, %v2357
        %v2445 = vadd.f32 %v1319, %v2421
        %v2446 = vadd.f32 %v1325, %v2360
        %v2447 = vadd.f32 %v1329, %v2422
        %v2448 = vadd.f32 %v1335, %v2363
        %v2449 = vadd.f32 %v1339, %v2423
        %v2450 = vadd.f32 %v1345, %v2366
        %v2451 = vadd.f32 %v1349, %v2424
        %v2452 = vadd.f32 %v1355, %v2369
        %v2453 = vadd.f32 %v1359, %v2425
        %v2454 = vadd.f32 %v1365, %v2372
        %v2455 = vadd.f32 %v1369, %v2426
        %v2456 = vadd.f32 %v1375, %v2375
        %v2457 = vadd.f32 %v1379, %v2427
        %v2458 = vadd.f32 %v1385, %v2378
        %v2459 = vadd.f32 %v1389, %v2428
        %v2460 = vadd.f32 %v1395, %v2381
        %v2461 = vadd.f32 %v1399, %v2429
        %v2462 = vadd.f32 %v1436, %v1982
        %v2463 = vadd.f32 %v1440, %v1986
        %v2464 = vadd.f32 %v1446, %v1992
        %v2465 = vadd.f32 %v1450, %v1996
        %v2466 = vadd.f32 %v1456, %v2002
        %v2467 = vadd.f32 %v1460, %v2006
        %v2468 = vadd.f32 %v1466, %v2012
        %v2469 = vadd.f32 %v1470, %v2016
        %v2470 = vadd.f32 %v1476, %v2022
        %v2471 = vadd.f32 %v1480, %v2026
        %v2472 = vadd.f32 %v1486, %v2032
        %v2473 = vadd.f32 %v1490, %v2036
        %v2474 = vadd.f32 %v1496, %v2042
        %v2475 = vadd.f32 %v1500, %v2046
        %v2476 = vadd.f32 %v1506, %v2052
        %v2477 = vadd.f32 %v1510, %v2056
        %v2478 = vadd.f32 %v1516, %v2062
        %v2479 = vadd.f32 %v1520, %v2066
        %v2480 = vadd.f32 %v1526, %v2072
        %v2481 = vadd.f32 %v1530, %v2076
        %v2482 = vadd.f32 %v1536, %v2082
        %v2483 = vadd.f32 %v1540, %v2086
        %v2484 = vadd.f32 %v1546, %v2092
        %v2485 = vadd.f32 %v1550, %v2096
        %v2486 = vadd.f32 %v1556, %v2102
        %v2487 = vadd.f32 %v1560, %v2106
        %v2488 = vadd.f32 %v1566, %v2112
        %v2489 = vadd.f32 %v1570, %v2116
        %v2490 = vadd.f32 %v1576, %v2122
        %v2491 = vadd.f32 %v1580, %v2126
        %v2492 = vadd.f32 %v1586, %v2132
        %v2493 = vadd.f32 %v1590, %v2136
        %v2494 = vadd.f32 %v1438, %v1984
        %v2495 = vadd.f32 %v1442, %v1988
        %v2496 = vadd.f32 %v1448, %v1994
        %v2497 = vadd.f32 %v1452, %v1998
        %v2498 = vadd.f32 %v1458, %v2004
        %v2499 = vadd.f32 %v1462, %v2008
        %v2500 = vadd.f32 %v1468, %v2014
        %v2501 = vadd.f32 %v1472, %v2018
        %v2502 = vadd.f32 %v1478, %v2024
        %v2503 = vadd.f32 %v1482, %v2028
        %v2504 = vadd.f32 %v1488, %v2034
        %v2505 = vadd.f32 %v1492, %v2038
        %v2506 = vadd.f32 %v1498, %v2044
        %v2507 = vadd.f32 %v1502, %v2048
        %v2508 = vadd.f32 %v1508, %v2054
        %v2509 = vadd.f32 %v1512, %v2058
        %v2510 = vadd.f32 %v1518, %v2064
        %v2511 = vadd.f32 %v1522, %v2068
        %v2512 = vadd.f32 %v1528, %v2074
        %v2513 = vadd.f32 %v1532, %v2078
        %v2514 = vadd.f32 %v1538, %v2084
        %v2515 = vadd.f32 %v1542, %v2088
        %v2516 = vadd.f32 %v1548, %v2094
        %v2517 = vadd.f32 %v1552, %v2098
        %v2518 = vadd.f32 %v1558, %v2104
        %v2519 = vadd.f32 %v1562, %v2108
        %v2520 = vadd.f32 %v1568, %v2114
        %v2521 = vadd.f32 %v1572, %v2118
        %v2522 = vadd.f32 %v1578, %v2124
        %v2523 = vadd.f32 %v1582, %v2128
        %v2524 = vadd.f32 %v1588, %v2134
        %v2525 = vadd.f32 %v1592, %v2138
        %v2526 = vadd.f32 %v1631, %v2175
        %v2527 = vadd.f32 %v1635, %v2178
        %v2528 = vadd.f32 %v1641, %v2183
        %v2529 = vadd.f32 %v1645, %v2186
        %v2530 = vadd.f32 %v1651, %v2191
        %v2531 = vadd.f32 %v1655, %v2194
        %v2532 = vadd.f32 %v1661, %v2199
        %v2533 = vadd.f32 %v1665, %v2202
        %v2534 = vadd.f32 %v1671, %v2207
        %v2535 = vadd.f32 %v1675, %v2210
        %v2536 = vadd.f32 %v1681, %v2215
        %v2537 = vadd.f32 %v1685, %v2218
        %v2538 = vadd.f32 %v1691, %v2223
        %v2539 = vadd.f32 %v1695, %v2226
        %v2540 = vadd.f32 %v1701, %v2231
        %v2541 = vadd.f32 %v1705, %v2234
        %v2542 = vadd.f32 %v1711, %v2239
        %v2543 = vadd.f32 %v1715, %v2242
        %v2544 = vadd.f32 %v1721, %v2247
        %v2545 = vadd.f32 %v1725, %v2250
        %v2546 = vadd.f32 %v1731, %v2255
        %v2547 = vadd.f32 %v1735, %v2258
        %v2548 = vadd.f32 %v1741, %v2263
        %v2549 = vadd.f32 %v1745, %v2266
        %v2550 = vadd.f32 %v1751, %v2271
        %v2551 = vadd.f32 %v1755, %v2274
        %v2552 = vadd.f32 %v1761, %v2279
        %v2553 = vadd.f32 %v1765, %v2282
        %v2554 = vadd.f32 %v1771, %v2287
        %v2555 = vadd.f32 %v1775, %v2290
        %v2556 = vadd.f32 %v1781, %v2295
        %v2557 = vadd.f32 %v1785, %v2298
        %v2590 = vrot.slane %v2526, 1
        %v2591 = vrot.slane %v2527, 1
        %v2592 = vsel %vm2333, %v2590, %v2591
        %v2593 = vrot.slane %v2528, 1
        %v2594 = vrot.slane %v2529, 1
        %v2595 = vsel %vm2333, %v2593, %v2594
        %v2596 = vrot.slane %v2530, 1
        %v2597 = vrot.slane %v2531, 1
        %v2598 = vsel %vm2333, %v2596, %v2597
        %v2599 = vrot.slane %v2532, 1
        %v2600 = vrot.slane %v2533, 1
        %v2601 = vsel %vm2333, %v2599, %v2600
        %v2602 = vrot.slane %v2534, 1
        %v2603 = vrot.slane %v2535, 1
        %v2604 = vsel %vm2333, %v2602, %v2603
        %v2605 = vrot.slane %v2536, 1
        %v2606 = vrot.slane %v2537, 1
        %v2607 = vsel %vm2333, %v2605, %v2606
        %v2608 = vrot.slane %v2538, 1
        %v2609 = vrot.slane %v2539, 1
        %v2610 = vsel %vm2333, %v2608, %v2609
        %v2611 = vrot.slane %v2540, 1
        %v2612 = vrot.slane %v2541, 1
        %v2613 = vsel %vm2333, %v2611, %v2612
        %v2614 = vrot.slane %v2542, 1
        %v2615 = vrot.slane %v2543, 1
        %v2616 = vsel %vm2333, %v2614, %v2615
        %v2617 = vrot.slane %v2544, 1
        %v2618 = vrot.slane %v2545, 1
        %v2619 = vsel %vm2333, %v2617, %v2618
        %v2620 = vrot.slane %v2546, 1
        %v2621 = vrot.slane %v2547, 1
        %v2622 = vsel %vm2333, %v2620, %v2621
        %v2623 = vrot.slane %v2548, 1
        %v2624 = vrot.slane %v2549, 1
        %v2625 = vsel %vm2333, %v2623, %v2624
        %v2626 = vrot.slane %v2550, 1
        %v2627 = vrot.slane %v2551, 1
        %v2628 = vsel %vm2333, %v2626, %v2627
        %v2629 = vrot.slane %v2552, 1
        %v2630 = vrot.slane %v2553, 1
        %v2631 = vsel %vm2333, %v2629, %v2630
        %v2632 = vrot.slane %v2554, 1
        %v2633 = vrot.slane %v2555, 1
        %v2634 = vsel %vm2333, %v2632, %v2633
        %v2635 = vrot.slane %v2556, 1
        %v2636 = vrot.slane %v2557, 1
        %v2637 = vsel %vm2333, %v2635, %v2636
        %v2670 = vsel %vm2333, %v2591, 0.0
        %v2671 = vsel %vm2333, %v2594, 0.0
        %v2672 = vsel %vm2333, %v2597, 0.0
        %v2673 = vsel %vm2333, %v2600, 0.0
        %v2674 = vsel %vm2333, %v2603, 0.0
        %v2675 = vsel %vm2333, %v2606, 0.0
        %v2676 = vsel %vm2333, %v2609, 0.0
        %v2677 = vsel %vm2333, %v2612, 0.0
        %v2678 = vsel %vm2333, %v2615, 0.0
        %v2679 = vsel %vm2333, %v2618, 0.0
        %v2680 = vsel %vm2333, %v2621, 0.0
        %v2681 = vsel %vm2333, %v2624, 0.0
        %v2682 = vsel %vm2333, %v2627, 0.0
        %v2683 = vsel %vm2333, %v2630, 0.0
        %v2684 = vsel %vm2333, %v2633, 0.0
        %v2685 = vsel %vm2333, %v2636, 0.0
        %v2686 = vadd.f32 %v2494, %v2592
        %v2687 = vadd.f32 %v2495, %v2670
        %v2688 = vadd.f32 %v2496, %v2595
        %v2689 = vadd.f32 %v2497, %v2671
        %v2690 = vadd.f32 %v2498, %v2598
        %v2691 = vadd.f32 %v2499, %v2672
        %v2692 = vadd.f32 %v2500, %v2601
        %v2693 = vadd.f32 %v2501, %v2673
        %v2694 = vadd.f32 %v2502, %v2604
        %v2695 = vadd.f32 %v2503, %v2674
        %v2696 = vadd.f32 %v2504, %v2607
        %v2697 = vadd.f32 %v2505, %v2675
        %v2698 = vadd.f32 %v2506, %v2610
        %v2699 = vadd.f32 %v2507, %v2676
        %v2700 = vadd.f32 %v2508, %v2613
        %v2701 = vadd.f32 %v2509, %v2677
        %v2702 = vadd.f32 %v2510, %v2616
        %v2703 = vadd.f32 %v2511, %v2678
        %v2704 = vadd.f32 %v2512, %v2619
        %v2705 = vadd.f32 %v2513, %v2679
        %v2706 = vadd.f32 %v2514, %v2622
        %v2707 = vadd.f32 %v2515, %v2680
        %v2708 = vadd.f32 %v2516, %v2625
        %v2709 = vadd.f32 %v2517, %v2681
        %v2710 = vadd.f32 %v2518, %v2628
        %v2711 = vadd.f32 %v2519, %v2682
        %v2712 = vadd.f32 %v2520, %v2631
        %v2713 = vadd.f32 %v2521, %v2683
        %v2714 = vadd.f32 %v2522, %v2634
        %v2715 = vadd.f32 %v2523, %v2684
        %v2716 = vadd.f32 %v2524, %v2637
        %v2717 = vadd.f32 %v2525, %v2685
        %v2718 = vld [vmem:[%s6] sm:$0x1]
        %v2719 = vld [vmem:[%s8] sm:$0x1]
        %v2720 = vld [vmem:[#allocation11] sm:$0xf]
        %v2721 = vld [vmem:[#allocation11 + $0x4] sm:$0xf]
        %v2722 = vld [vmem:[#allocation11 + $0x8] sm:$0xf]
        %v2723 = vld [vmem:[#allocation11 + $0xc] sm:$0xf]
        %v2724 = vld [vmem:[#allocation11 + $0x10] sm:$0xf]
        %v2725 = vld [vmem:[#allocation11 + $0x14] sm:$0xf]
        %v2726 = vld [vmem:[#allocation11 + $0x18] sm:$0xf]
        %v2727 = vld [vmem:[#allocation11 + $0x1c] sm:$0xf]
        %v2728 = vld [vmem:[#allocation11 + $0x20] sm:$0xf]
        %v2729 = vld [vmem:[#allocation11 + $0x24] sm:$0xf]
        %v2730 = vld [vmem:[#allocation11 + $0x28] sm:$0xf]
        %v2731 = vld [vmem:[#allocation11 + $0x2c] sm:$0xf]
        %v2732 = vld [vmem:[#allocation11 + $0x30] sm:$0xf]
        %v2733 = vld [vmem:[#allocation11 + $0x34] sm:$0xf]
        %v2734 = vld [vmem:[#allocation11 + $0x38] sm:$0xf]
        %v2735 = vld [vmem:[#allocation11 + $0x3c] sm:$0xf]
        %v2737 = vlaneseq
        %v2738 = vshrl.u32 %v2737, 7
        %v2739 = vsub.s32 0, %v2738
        %v2740 = vrot.slane %v2718, %v2739
        %v2742 = vadd.f32 %v1243, %v2740
        %v2743 = vadd.f32 %v1247, %v2740
        %v2744 = vadd.f32 %v1253, %v2740
        %v2745 = vadd.f32 %v1257, %v2740
        %v2746 = vadd.f32 %v1263, %v2740
        %v2747 = vadd.f32 %v1267, %v2740
        %v2748 = vadd.f32 %v1273, %v2740
        %v2749 = vadd.f32 %v1277, %v2740
        %v2750 = vadd.f32 %v1283, %v2740
        %v2751 = vadd.f32 %v1287, %v2740
        %v2752 = vadd.f32 %v1293, %v2740
        %v2753 = vadd.f32 %v1297, %v2740
        %v2754 = vadd.f32 %v1303, %v2740
        %v2755 = vadd.f32 %v1307, %v2740
        %v2756 = vadd.f32 %v1313, %v2740
        %v2757 = vadd.f32 %v1317, %v2740
        %v2758 = vadd.f32 %v1323, %v2740
        %v2759 = vadd.f32 %v1327, %v2740
        %v2760 = vadd.f32 %v1333, %v2740
        %v2761 = vadd.f32 %v1337, %v2740
        %v2762 = vadd.f32 %v1343, %v2740
        %v2763 = vadd.f32 %v1347, %v2740
        %v2764 = vadd.f32 %v1353, %v2740
        %v2765 = vadd.f32 %v1357, %v2740
        %v2766 = vadd.f32 %v1363, %v2740
        %v2767 = vadd.f32 %v1367, %v2740
        %v2768 = vadd.f32 %v1373, %v2740
        %v2769 = vadd.f32 %v1377, %v2740
        %v2770 = vadd.f32 %v1383, %v2740
        %v2771 = vadd.f32 %v1387, %v2740
        %v2772 = vadd.f32 %v1393, %v2740
        %v2773 = vadd.f32 %v1397, %v2740
        %v2774 = vmax.f32 %v2742, 0.0
        %v2775 = vmax.f32 %v2743, 0.0
        %v2776 = vmax.f32 %v2744, 0.0
        %v2777 = vmax.f32 %v2745, 0.0
        %v2778 = vmax.f32 %v2746, 0.0
        %v2779 = vmax.f32 %v2747, 0.0
        %v2780 = vmax.f32 %v2748, 0.0
        %v2781 = vmax.f32 %v2749, 0.0
        %v2782 = vmax.f32 %v2750, 0.0
        %v2783 = vmax.f32 %v2751, 0.0
        %v2784 = vmax.f32 %v2752, 0.0
        %v2785 = vmax.f32 %v2753, 0.0
        %v2786 = vmax.f32 %v2754, 0.0
        %v2787 = vmax.f32 %v2755, 0.0
        %v2788 = vmax.f32 %v2756, 0.0
        %v2789 = vmax.f32 %v2757, 0.0
        %v2790 = vmax.f32 %v2758, 0.0
        %v2791 = vmax.f32 %v2759, 0.0
        %v2792 = vmax.f32 %v2760, 0.0
        %v2793 = vmax.f32 %v2761, 0.0
        %v2794 = vmax.f32 %v2762, 0.0
        %v2795 = vmax.f32 %v2763, 0.0
        %v2796 = vmax.f32 %v2764, 0.0
        %v2797 = vmax.f32 %v2765, 0.0
        %v2798 = vmax.f32 %v2766, 0.0
        %v2799 = vmax.f32 %v2767, 0.0
        %v2800 = vmax.f32 %v2768, 0.0
        %v2801 = vmax.f32 %v2769, 0.0
        %v2802 = vmax.f32 %v2770, 0.0
        %v2803 = vmax.f32 %v2771, 0.0
        %v2804 = vmax.f32 %v2772, 0.0
        %v2805 = vmax.f32 %v2773, 0.0
        %v2806 = vpack.c.bf16 %v2775, %v2774
        %v2807 = vpack.c.bf16 %v2777, %v2776
        %v2808 = vpack.c.bf16 %v2779, %v2778
        %v2809 = vpack.c.bf16 %v2781, %v2780
        %v2810 = vpack.c.bf16 %v2783, %v2782
        %v2811 = vpack.c.bf16 %v2785, %v2784
        %v2812 = vpack.c.bf16 %v2787, %v2786
        %v2813 = vpack.c.bf16 %v2789, %v2788
        %v2814 = vpack.c.bf16 %v2791, %v2790
        %v2815 = vpack.c.bf16 %v2793, %v2792
        %v2816 = vpack.c.bf16 %v2795, %v2794
        %v2817 = vpack.c.bf16 %v2797, %v2796
        %v2818 = vpack.c.bf16 %v2799, %v2798
        %v2819 = vpack.c.bf16 %v2801, %v2800
        %v2820 = vpack.c.bf16 %v2803, %v2802
        %v2821 = vpack.c.bf16 %v2805, %v2804
        %v2823 = vlaneseq
        %v2824 = vshrl.u32 %v2823, 7
        %v2825 = vsub.s32 0, %v2824
        %v2826 = vrot.slane %v2719, %v2825
        %v2844 = vunpack.c.l.b16 %v2720
        %v2845 = vunpack.c.l.b16 %v2721
        %v2846 = vunpack.c.l.b16 %v2722
        %v2847 = vunpack.c.l.b16 %v2723
        %v2848 = vunpack.c.l.b16 %v2724
        %v2849 = vunpack.c.l.b16 %v2725
        %v2850 = vunpack.c.l.b16 %v2726
        %v2851 = vunpack.c.l.b16 %v2727
        %v2852 = vunpack.c.l.b16 %v2728
        %v2853 = vunpack.c.l.b16 %v2729
        %v2854 = vunpack.c.l.b16 %v2730
        %v2855 = vunpack.c.l.b16 %v2731
        %v2856 = vunpack.c.l.b16 %v2732
        %v2857 = vunpack.c.l.b16 %v2733
        %v2858 = vunpack.c.l.b16 %v2734
        %v2859 = vunpack.c.l.b16 %v2735
        %v2860 = vpack.c.b16 %v2845, %v2844
        %v2861 = vpack.c.b16 %v2847, %v2846
        %v2862 = vpack.c.b16 %v2849, %v2848
        %v2863 = vpack.c.b16 %v2851, %v2850
        %v2864 = vpack.c.b16 %v2853, %v2852
        %v2865 = vpack.c.b16 %v2855, %v2854
        %v2866 = vpack.c.b16 %v2857, %v2856
        %v2867 = vpack.c.b16 %v2859, %v2858
        %2876 = vmatprep.subr.bf16.mxu0 0
        %2877 = vmatpush1.bf16.msra.mxu0 %v2860
        %2878 = vmatprep.subr.bf16.mxu0 0
        %2879 = vmatpush1.bf16.msra.mxu0 %v2861
        %2880 = vmatprep.subr.bf16.mxu0 0
        %2881 = vmatpush1.bf16.msra.mxu0 %v2862
        %2882 = vmatprep.subr.bf16.mxu0 0
        %2883 = vmatpush1.bf16.msra.mxu0 %v2863
        %2884 = vmatprep.subr.bf16.mxu0 0
        %2885 = vmatpush1.bf16.msra.mxu0 %v2864
        %2886 = vmatprep.subr.bf16.mxu0 0
        %2887 = vmatpush1.bf16.msra.mxu0 %v2865
        %2888 = vmatprep.subr.bf16.mxu0 0
        %2889 = vmatpush1.bf16.msra.mxu0 %v2866
        %2890 = vmatprep.subr.bf16.mxu0 0
        %2891 = vmatpush1.bf16.msra.mxu0 %v2867
        %2892 = vmatprep.subr.bf16.mxu0 0
        %2893 = vmatpush1.bf16.msra.mxu0 0
        %2894 = vmatprep.subr.bf16.mxu0 0
        %2895 = vmatpush1.bf16.msra.mxu0 0
        %2896 = vmatprep.subr.bf16.mxu0 0
        %2897 = vmatpush1.bf16.msra.mxu0 0
        %2898 = vmatprep.subr.bf16.mxu0 0
        %2899 = vmatpush1.bf16.msra.mxu0 0
        %2900 = vmatprep.subr.bf16.mxu0 0
        %2901 = vmatpush1.bf16.msra.mxu0 0
        %2902 = vmatprep.subr.bf16.mxu0 0
        %2903 = vmatpush1.bf16.msra.mxu0 0
        %2904 = vmatprep.subr.bf16.mxu0 0
        %2905 = vmatpush1.bf16.msra.mxu0 0
        %2906 = vmatprep.subr.bf16.mxu0 0
        %2907 = vmatpush1.bf16.msra.mxu0 0
        %2908 = vmatprep.mubr.bf16.mxu0 0
        %2909 = vmatmul.mubr.bf16.gmra.mrb[0].mxu0 %v2806
        %v2910 = vpop.f32.mrb[0].mxu0
        %v2911 = vadd.f32 %v2826, %v2910
        %v2912 = vpop.f32.mrb[0].mxu0
        %v2913 = vpop.f32.mrb[0].mxu0
        %v2914 = vadd.f32 %v2826, %v2913
        %v2915 = vpop.f32.mrb[0].mxu0
        %2916 = vmatprep.mubr.bf16.mxu0 0
        %2917 = vmatmul.mubr.bf16.gmra.mrb[0].mxu0 %v2807
        %v2918 = vpop.f32.mrb[0].mxu0
        %v2919 = vadd.f32 %v2826, %v2918
        %v2920 = vpop.f32.mrb[0].mxu0
        %v2921 = vpop.f32.mrb[0].mxu0
        %v2922 = vadd.f32 %v2826, %v2921
        %v2923 = vpop.f32.mrb[0].mxu0
        %2924 = vmatprep.mubr.bf16.mxu0 0
        %2925 = vmatmul.mubr.bf16.gmra.mrb[0].mxu0 %v2808
        %v2926 = vpop.f32.mrb[0].mxu0
        %v2927 = vadd.f32 %v2826, %v2926
        %v2928 = vpop.f32.mrb[0].mxu0
        %v2929 = vpop.f32.mrb[0].mxu0
        %v2930 = vadd.f32 %v2826, %v2929
        %v2931 = vpop.f32.mrb[0].mxu0
        %2932 = vmatprep.mubr.bf16.mxu0 0
        %2933 = vmatmul.mubr.bf16.gmra.mrb[0].mxu0 %v2809
        %v2934 = vpop.f32.mrb[0].mxu0
        %v2935 = vadd.f32 %v2826, %v2934
        %v2936 = vpop.f32.mrb[0].mxu0
        %v2937 = vpop.f32.mrb[0].mxu0
        %v2938 = vadd.f32 %v2826, %v2937
        %v2939 = vpop.f32.mrb[0].mxu0
        %2940 = vmatprep.mubr.bf16.mxu0 0
        %2941 = vmatmul.mubr.bf16.gmra.mrb[0].mxu0 %v2810
        %v2942 = vpop.f32.mrb[0].mxu0
        %v2943 = vadd.f32 %v2826, %v2942
        %v2944 = vpop.f32.mrb[0].mxu0
        %v2945 = vpop.f32.mrb[0].mxu0
        %v2946 = vadd.f32 %v2826, %v2945
        %v2947 = vpop.f32.mrb[0].mxu0
        %2948 = vmatprep.mubr.bf16.mxu0 0
        %2949 = vmatmul.mubr.bf16.gmra.mrb[0].mxu0 %v2811
        %v2950 = vpop.f32.mrb[0].mxu0
        %v2951 = vadd.f32 %v2826, %v2950
        %v2952 = vpop.f32.mrb[0].mxu0
        %v2953 = vpop.f32.mrb[0].mxu0
        %v2954 = vadd.f32 %v2826, %v2953
        %v2955 = vpop.f32.mrb[0].mxu0
        %2956 = vmatprep.mubr.bf16.mxu0 0
        %2957 = vmatmul.mubr.bf16.gmra.mrb[0].mxu0 %v2812
        %v2958 = vpop.f32.mrb[0].mxu0
        %v2959 = vadd.f32 %v2826, %v2958
        %v2960 = vpop.f32.mrb[0].mxu0
        %v2961 = vpop.f32.mrb[0].mxu0
        %v2962 = vadd.f32 %v2826, %v2961
        %v2963 = vpop.f32.mrb[0].mxu0
        %2964 = vmatprep.mubr.bf16.mxu0 0
        %2965 = vmatmul.mubr.bf16.gmra.mrb[0].mxu0 %v2813
        %v2966 = vpop.f32.mrb[0].mxu0
        %v2967 = vadd.f32 %v2826, %v2966
        %v2968 = vpop.f32.mrb[0].mxu0
        %v2969 = vpop.f32.mrb[0].mxu0
        %v2970 = vadd.f32 %v2826, %v2969
        %v2971 = vpop.f32.mrb[0].mxu0
        %2972 = vmatprep.mubr.bf16.mxu0 0
        %2973 = vmatmul.mubr.bf16.gmra.mrb[0].mxu0 %v2814
        %v2974 = vpop.f32.mrb[0].mxu0
        %v2975 = vadd.f32 %v2826, %v2974
        %v2976 = vpop.f32.mrb[0].mxu0
        %v2977 = vpop.f32.mrb[0].mxu0
        %v2978 = vadd.f32 %v2826, %v2977
        %v2979 = vpop.f32.mrb[0].mxu0
        %2980 = vmatprep.mubr.bf16.mxu0 0
        %2981 = vmatmul.mubr.bf16.gmra.mrb[0].mxu0 %v2815
        %v2982 = vpop.f32.mrb[0].mxu0
        %v2983 = vadd.f32 %v2826, %v2982
        %v2984 = vpop.f32.mrb[0].mxu0
        %v2985 = vpop.f32.mrb[0].mxu0
        %v2986 = vadd.f32 %v2826, %v2985
        %v2987 = vpop.f32.mrb[0].mxu0
        %2988 = vmatprep.mubr.bf16.mxu0 0
        %2989 = vmatmul.mubr.bf16.gmra.mrb[0].mxu0 %v2816
        %v2990 = vpop.f32.mrb[0].mxu0
        %v2991 = vadd.f32 %v2826, %v2990
        %v2992 = vpop.f32.mrb[0].mxu0
        %v2993 = vpop.f32.mrb[0].mxu0
        %v2994 = vadd.f32 %v2826, %v2993
        %v2995 = vpop.f32.mrb[0].mxu0
        %2996 = vmatprep.mubr.bf16.mxu0 0
        %2997 = vmatmul.mubr.bf16.gmra.mrb[0].mxu0 %v2817
        %v2998 = vpop.f32.mrb[0].mxu0
        %v2999 = vadd.f32 %v2826, %v2998
        %v3000 = vpop.f32.mrb[0].mxu0
        %v3001 = vpop.f32.mrb[0].mxu0
        %v3002 = vadd.f32 %v2826, %v3001
        %v3003 = vpop.f32.mrb[0].mxu0
        %3004 = vmatprep.mubr.bf16.mxu0 0
        %3005 = vmatmul.mubr.bf16.gmra.mrb[0].mxu0 %v2818
        %v3006 = vpop.f32.mrb[0].mxu0
        %v3007 = vadd.f32 %v2826, %v3006
        %v3008 = vpop.f32.mrb[0].mxu0
        %v3009 = vpop.f32.mrb[0].mxu0
        %v3010 = vadd.f32 %v2826, %v3009
        %v3011 = vpop.f32.mrb[0].mxu0
        %3012 = vmatprep.mubr.bf16.mxu0 0
        %3013 = vmatmul.mubr.bf16.gmra.mrb[0].mxu0 %v2819
        %v3014 = vpop.f32.mrb[0].mxu0
        %v3015 = vadd.f32 %v2826, %v3014
        %v3016 = vpop.f32.mrb[0].mxu0
        %v3017 = vpop.f32.mrb[0].mxu0
        %v3018 = vadd.f32 %v2826, %v3017
        %v3019 = vpop.f32.mrb[0].mxu0
        %3020 = vmatprep.mubr.bf16.mxu0 0
        %3021 = vmatmul.mubr.bf16.gmra.mrb[0].mxu0 %v2820
        %v3022 = vpop.f32.mrb[0].mxu0
        %v3023 = vadd.f32 %v2826, %v3022
        %v3024 = vpop.f32.mrb[0].mxu0
        %v3025 = vpop.f32.mrb[0].mxu0
        %v3026 = vadd.f32 %v2826, %v3025
        %v3027 = vpop.f32.mrb[0].mxu0
        %3028 = vmatprep.mubr.bf16.mxu0 0
        %3029 = vmatmul.mubr.bf16.gmra.mrb[0].mxu0 %v2821
        %v3030 = vpop.f32.mrb[0].mxu0
        %v3031 = vadd.f32 %v2826, %v3030
        %v3032 = vpop.f32.mrb[0].mxu0
        %v3033 = vpop.f32.mrb[0].mxu0
        %v3034 = vadd.f32 %v2826, %v3033
        %v3035 = vpop.f32.mrb[0].mxu0
        %3036 = vdwg.mxu0
        %v3037 = vmax.f32 %v2911, 0.0
        %v3038 = vmax.f32 %v2914, 0.0
        %v3039 = vmax.f32 %v2919, 0.0
        %v3040 = vmax.f32 %v2922, 0.0
        %v3041 = vmax.f32 %v2927, 0.0
        %v3042 = vmax.f32 %v2930, 0.0
        %v3043 = vmax.f32 %v2935, 0.0
        %v3044 = vmax.f32 %v2938, 0.0
        %v3045 = vmax.f32 %v2943, 0.0
        %v3046 = vmax.f32 %v2946, 0.0
        %v3047 = vmax.f32 %v2951, 0.0
        %v3048 = vmax.f32 %v2954, 0.0
        %v3049 = vmax.f32 %v2959, 0.0
        %v3050 = vmax.f32 %v2962, 0.0
        %v3051 = vmax.f32 %v2967, 0.0
        %v3052 = vmax.f32 %v2970, 0.0
        %v3053 = vmax.f32 %v2975, 0.0
        %v3054 = vmax.f32 %v2978, 0.0
        %v3055 = vmax.f32 %v2983, 0.0
        %v3056 = vmax.f32 %v2986, 0.0
        %v3057 = vmax.f32 %v2991, 0.0
        %v3058 = vmax.f32 %v2994, 0.0
        %v3059 = vmax.f32 %v2999, 0.0
        %v3060 = vmax.f32 %v3002, 0.0
        %v3061 = vmax.f32 %v3007, 0.0
        %v3062 = vmax.f32 %v3010, 0.0
        %v3063 = vmax.f32 %v3015, 0.0
        %v3064 = vmax.f32 %v3018, 0.0
        %v3065 = vmax.f32 %v3023, 0.0
        %v3066 = vmax.f32 %v3026, 0.0
        %v3067 = vmax.f32 %v3031, 0.0
        %v3068 = vmax.f32 %v3034, 0.0
        %v3069 = vpack.c.bf16 %v3038, %v3037
        %v3070 = vpack.c.bf16 %v3040, %v3039
        %v3071 = vpack.c.bf16 %v3042, %v3041
        %v3072 = vpack.c.bf16 %v3044, %v3043
        %v3073 = vpack.c.bf16 %v3046, %v3045
        %v3074 = vpack.c.bf16 %v3048, %v3047
        %v3075 = vpack.c.bf16 %v3050, %v3049
        %v3076 = vpack.c.bf16 %v3052, %v3051
        %v3077 = vpack.c.bf16 %v3054, %v3053
        %v3078 = vpack.c.bf16 %v3056, %v3055
        %v3079 = vpack.c.bf16 %v3058, %v3057
        %v3080 = vpack.c.bf16 %v3060, %v3059
        %v3081 = vpack.c.bf16 %v3062, %v3061
        %v3082 = vpack.c.bf16 %v3064, %v3063
        %v3083 = vpack.c.bf16 %v3066, %v3065
        %v3084 = vpack.c.bf16 %v3068, %v3067
        %v3101 = vunpack.c.l.b16 %v3069
        %v3102 = vunpack.c.h.b16 %v3069
        %v3103 = vunpack.c.l.b16 %v3070
        %v3104 = vunpack.c.h.b16 %v3070
        %v3105 = vunpack.c.l.b16 %v3071
        %v3106 = vunpack.c.h.b16 %v3071
        %v3107 = vunpack.c.l.b16 %v3072
        %v3108 = vunpack.c.h.b16 %v3072
        %v3109 = vunpack.c.l.b16 %v3073
        %v3110 = vunpack.c.h.b16 %v3073
        %v3111 = vunpack.c.l.b16 %v3074
        %v3112 = vunpack.c.h.b16 %v3074
        %v3113 = vunpack.c.l.b16 %v3075
        %v3114 = vunpack.c.h.b16 %v3075
        %v3115 = vunpack.c.l.b16 %v3076
        %v3116 = vunpack.c.h.b16 %v3076
        %v3117 = vunpack.c.l.b16 %v3077
        %v3118 = vunpack.c.h.b16 %v3077
        %v3119 = vunpack.c.l.b16 %v3078
        %v3120 = vunpack.c.h.b16 %v3078
        %v3121 = vunpack.c.l.b16 %v3079
        %v3122 = vunpack.c.h.b16 %v3079
        %v3123 = vunpack.c.l.b16 %v3080
        %v3124 = vunpack.c.h.b16 %v3080
        %v3125 = vunpack.c.l.b16 %v3081
        %v3126 = vunpack.c.h.b16 %v3081
        %v3127 = vunpack.c.l.b16 %v3082
        %v3128 = vunpack.c.h.b16 %v3082
        %v3129 = vunpack.c.l.b16 %v3083
        %v3130 = vunpack.c.h.b16 %v3083
        %v3131 = vunpack.c.l.b16 %v3084
        %v3132 = vunpack.c.h.b16 %v3084
        %v3133 = vpack.c.b16 %v3101, %v3101
        %v3134 = vpack.c.b16 %v3102, %v3102
        %v3135 = vpack.c.b16 %v3103, %v3103
        %v3136 = vpack.c.b16 %v3104, %v3104
        %v3137 = vpack.c.b16 %v3105, %v3105
        %v3138 = vpack.c.b16 %v3106, %v3106
        %v3139 = vpack.c.b16 %v3107, %v3107
        %v3140 = vpack.c.b16 %v3108, %v3108
        %v3141 = vpack.c.b16 %v3109, %v3109
        %v3142 = vpack.c.b16 %v3110, %v3110
        %v3143 = vpack.c.b16 %v3111, %v3111
        %v3144 = vpack.c.b16 %v3112, %v3112
        %v3145 = vpack.c.b16 %v3113, %v3113
        %v3146 = vpack.c.b16 %v3114, %v3114
        %v3147 = vpack.c.b16 %v3115, %v3115
        %v3148 = vpack.c.b16 %v3116, %v3116
        %v3149 = vpack.c.b16 %v3117, %v3117
        %v3150 = vpack.c.b16 %v3118, %v3118
        %v3151 = vpack.c.b16 %v3119, %v3119
        %v3152 = vpack.c.b16 %v3120, %v3120
        %v3153 = vpack.c.b16 %v3121, %v3121
        %v3154 = vpack.c.b16 %v3122, %v3122
        %v3155 = vpack.c.b16 %v3123, %v3123
        %v3156 = vpack.c.b16 %v3124, %v3124
        %v3157 = vpack.c.b16 %v3125, %v3125
        %v3158 = vpack.c.b16 %v3126, %v3126
        %v3159 = vpack.c.b16 %v3127, %v3127
        %v3160 = vpack.c.b16 %v3128, %v3128
        %v3161 = vpack.c.b16 %v3129, %v3129
        %v3162 = vpack.c.b16 %v3130, %v3130
        %v3163 = vpack.c.b16 %v3131, %v3131
        %v3164 = vpack.c.b16 %v3132, %v3132
        %3197 = vst [vmem:[%s471] sm:$0xf] %v3133
        %3198 = vst [vmem:[%s471 + $0x8] sm:$0xf] %v3134
        %3199 = vst [vmem:[%s471 + $0x20] sm:$0xf] %v3135
        %3200 = vst [vmem:[%s471 + $0x28] sm:$0xf] %v3136
        %3201 = vst [vmem:[%s471 + $0x40] sm:$0xf] %v3137
        %3202 = vst [vmem:[%s471 + $0x48] sm:$0xf] %v3138
        %3203 = vst [vmem:[%s471 + $0x60] sm:$0xf] %v3139
        %3204 = vst [vmem:[%s471 + $0x68] sm:$0xf] %v3140
        %3205 = vst [vmem:[%s471 + $0x80] sm:$0xf] %v3141
        %3206 = vst [vmem:[%s471 + $0x88] sm:$0xf] %v3142
        %3207 = vst [vmem:[%s471 + $0xa0] sm:$0xf] %v3143
        %3208 = vst [vmem:[%s471 + $0xa8] sm:$0xf] %v3144
        %3209 = vst [vmem:[%s471 + $0xc0] sm:$0xf] %v3145
        %3210 = vst [vmem:[%s471 + $0xc8] sm:$0xf] %v3146
        %3211 = vst [vmem:[%s471 + $0xe0] sm:$0xf] %v3147
        %3212 = vst [vmem:[%s471 + $0xe8] sm:$0xf] %v3148
        %3213 = vst [vmem:[%s471 + $0x100] sm:$0xf] %v3149
        %3214 = vst [vmem:[%s471 + $0x108] sm:$0xf] %v3150
        %3215 = vst [vmem:[%s471 + $0x120] sm:$0xf] %v3151
        %3216 = vst [vmem:[%s471 + $0x128] sm:$0xf] %v3152
        %3217 = vst [vmem:[%s471 + $0x140] sm:$0xf] %v3153
        %3218 = vst [vmem:[%s471 + $0x148] sm:$0xf] %v3154
        %3219 = vst [vmem:[%s471 + $0x160] sm:$0xf] %v3155
        %3220 = vst [vmem:[%s471 + $0x168] sm:$0xf] %v3156
        %3221 = vst [vmem:[%s471 + $0x180] sm:$0xf] %v3157
        %3222 = vst [vmem:[%s471 + $0x188] sm:$0xf] %v3158
        %3223 = vst [vmem:[%s471 + $0x1a0] sm:$0xf] %v3159
        %3224 = vst [vmem:[%s471 + $0x1a8] sm:$0xf] %v3160
        %3225 = vst [vmem:[%s471 + $0x1c0] sm:$0xf] %v3161
        %3226 = vst [vmem:[%s471 + $0x1c8] sm:$0xf] %v3162
        %3227 = vst [vmem:[%s471 + $0x1e0] sm:$0xf] %v3163
        %3228 = vst [vmem:[%s471 + $0x1e8] sm:$0xf] %v3164
        %v3229 = vadd.f32 %v2430, %v2740
        %v3230 = vadd.f32 %v2431, %v2740
        %v3231 = vadd.f32 %v2432, %v2740
        %v3232 = vadd.f32 %v2433, %v2740
        %v3233 = vadd.f32 %v2434, %v2740
        %v3234 = vadd.f32 %v2435, %v2740
        %v3235 = vadd.f32 %v2436, %v2740
        %v3236 = vadd.f32 %v2437, %v2740
        %v3237 = vadd.f32 %v2438, %v2740
        %v3238 = vadd.f32 %v2439, %v2740
        %v3239 = vadd.f32 %v2440, %v2740
        %v3240 = vadd.f32 %v2441, %v2740
        %v3241 = vadd.f32 %v2442, %v2740
        %v3242 = vadd.f32 %v2443, %v2740
        %v3243 = vadd.f32 %v2444, %v2740
        %v3244 = vadd.f32 %v2445, %v2740
        %v3245 = vadd.f32 %v2446, %v2740
        %v3246 = vadd.f32 %v2447, %v2740
        %v3247 = vadd.f32 %v2448, %v2740
        %v3248 = vadd.f32 %v2449, %v2740
        %v3249 = vadd.f32 %v2450, %v2740
        %v3250 = vadd.f32 %v2451, %v2740
        %v3251 = vadd.f32 %v2452, %v2740
        %v3252 = vadd.f32 %v2453, %v2740
        %v3253 = vadd.f32 %v2454, %v2740
        %v3254 = vadd.f32 %v2455, %v2740
        %v3255 = vadd.f32 %v2456, %v2740
        %v3256 = vadd.f32 %v2457, %v2740
        %v3257 = vadd.f32 %v2458, %v2740
        %v3258 = vadd.f32 %v2459, %v2740
        %v3259 = vadd.f32 %v2460, %v2740
        %v3260 = vadd.f32 %v2461, %v2740
        %v3261 = vmax.f32 %v3229, 0.0
        %v3262 = vmax.f32 %v3230, 0.0
        %v3263 = vmax.f32 %v3231, 0.0
        %v3264 = vmax.f32 %v3232, 0.0
        %v3265 = vmax.f32 %v3233, 0.0
        %v3266 = vmax.f32 %v3234, 0.0
        %v3267 = vmax.f32 %v3235, 0.0
        %v3268 = vmax.f32 %v3236, 0.0
        %v3269 = vmax.f32 %v3237, 0.0
        %v3270 = vmax.f32 %v3238, 0.0
        %v3271 = vmax.f32 %v3239, 0.0
        %v3272 = vmax.f32 %v3240, 0.0
        %v3273 = vmax.f32 %v3241, 0.0
        %v3274 = vmax.f32 %v3242, 0.0
        %v3275 = vmax.f32 %v3243, 0.0
        %v3276 = vmax.f32 %v3244, 0.0
        %v3277 = vmax.f32 %v3245, 0.0
        %v3278 = vmax.f32 %v3246, 0.0
        %v3279 = vmax.f32 %v3247, 0.0
        %v3280 = vmax.f32 %v3248, 0.0
        %v3281 = vmax.f32 %v3249, 0.0
        %v3282 = vmax.f32 %v3250, 0.0
        %v3283 = vmax.f32 %v3251, 0.0
        %v3284 = vmax.f32 %v3252, 0.0
        %v3285 = vmax.f32 %v3253, 0.0
        %v3286 = vmax.f32 %v3254, 0.0
        %v3287 = vmax.f32 %v3255, 0.0
        %v3288 = vmax.f32 %v3256, 0.0
        %v3289 = vmax.f32 %v3257, 0.0
        %v3290 = vmax.f32 %v3258, 0.0
        %v3291 = vmax.f32 %v3259, 0.0
        %v3292 = vmax.f32 %v3260, 0.0
        %v3293 = vpack.c.bf16 %v3262, %v3261
        %v3294 = vpack.c.bf16 %v3264, %v3263
        %v3295 = vpack.c.bf16 %v3266, %v3265
        %v3296 = vpack.c.bf16 %v3268, %v3267
        %v3297 = vpack.c.bf16 %v3270, %v3269
        %v3298 = vpack.c.bf16 %v3272, %v3271
        %v3299 = vpack.c.bf16 %v3274, %v3273
        %v3300 = vpack.c.bf16 %v3276, %v3275
        %v3301 = vpack.c.bf16 %v3278, %v3277
        %v3302 = vpack.c.bf16 %v3280, %v3279
        %v3303 = vpack.c.bf16 %v3282, %v3281
        %v3304 = vpack.c.bf16 %v3284, %v3283
        %v3305 = vpack.c.bf16 %v3286, %v3285
        %v3306 = vpack.c.bf16 %v3288, %v3287
        %v3307 = vpack.c.bf16 %v3290, %v3289
        %v3308 = vpack.c.bf16 %v3292, %v3291
        %3309 = vmatprep.subr.bf16.mxu0 0
        %3310 = vmatpush1.bf16.msra.mxu0 %v2860
        %3311 = vmatprep.subr.bf16.mxu0 0
        %3312 = vmatpush1.bf16.msra.mxu0 %v2861
        %3313 = vmatprep.subr.bf16.mxu0 0
        %3314 = vmatpush1.bf16.msra.mxu0 %v2862
        %3315 = vmatprep.subr.bf16.mxu0 0
        %3316 = vmatpush1.bf16.msra.mxu0 %v2863
        %3317 = vmatprep.subr.bf16.mxu0 0
        %3318 = vmatpush1.bf16.msra.mxu0 %v2864
        %3319 = vmatprep.subr.bf16.mxu0 0
        %3320 = vmatpush1.bf16.msra.mxu0 %v2865
        %3321 = vmatprep.subr.bf16.mxu0 0
        %3322 = vmatpush1.bf16.msra.mxu0 %v2866
        %3323 = vmatprep.subr.bf16.mxu0 0
        %3324 = vmatpush1.bf16.msra.mxu0 %v2867
        %3325 = vmatprep.subr.bf16.mxu0 0
        %3326 = vmatpush1.bf16.msra.mxu0 0
        %3327 = vmatprep.subr.bf16.mxu0 0
        %3328 = vmatpush1.bf16.msra.mxu0 0
        %3329 = vmatprep.subr.bf16.mxu0 0
        %3330 = vmatpush1.bf16.msra.mxu0 0
        %3331 = vmatprep.subr.bf16.mxu0 0
        %3332 = vmatpush1.bf16.msra.mxu0 0
        %3333 = vmatprep.subr.bf16.mxu0 0
        %3334 = vmatpush1.bf16.msra.mxu0 0
        %3335 = vmatprep.subr.bf16.mxu0 0
        %3336 = vmatpush1.bf16.msra.mxu0 0
        %3337 = vmatprep.subr.bf16.mxu0 0
        %3338 = vmatpush1.bf16.msra.mxu0 0
        %3339 = vmatprep.subr.bf16.mxu0 0
        %3340 = vmatpush1.bf16.msra.mxu0 0
        %3341 = vmatprep.mubr.bf16.mxu0 0
        %3342 = vmatmul.mubr.bf16.gmra.mrb[0].mxu0 %v3293
        %v3343 = vpop.f32.mrb[0].mxu0
        %v3344 = vadd.f32 %v2826, %v3343
        %v3345 = vpop.f32.mrb[0].mxu0
        %v3346 = vpop.f32.mrb[0].mxu0
        %v3347 = vadd.f32 %v2826, %v3346
        %v3348 = vpop.f32.mrb[0].mxu0
        %3349 = vmatprep.mubr.bf16.mxu0 0
        %3350 = vmatmul.mubr.bf16.gmra.mrb[0].mxu0 %v3294
        %v3351 = vpop.f32.mrb[0].mxu0
        %v3352 = vadd.f32 %v2826, %v3351
        %v3353 = vpop.f32.mrb[0].mxu0
        %v3354 = vpop.f32.mrb[0].mxu0
        %v3355 = vadd.f32 %v2826, %v3354
        %v3356 = vpop.f32.mrb[0].mxu0
        %3357 = vmatprep.mubr.bf16.mxu0 0
        %3358 = vmatmul.mubr.bf16.gmra.mrb[0].mxu0 %v3295
        %v3359 = vpop.f32.mrb[0].mxu0
        %v3360 = vadd.f32 %v2826, %v3359
        %v3361 = vpop.f32.mrb[0].mxu0
        %v3362 = vpop.f32.mrb[0].mxu0
        %v3363 = vadd.f32 %v2826, %v3362
        %v3364 = vpop.f32.mrb[0].mxu0
        %3365 = vmatprep.mubr.bf16.mxu0 0
        %3366 = vmatmul.mubr.bf16.gmra.mrb[0].mxu0 %v3296
        %v3367 = vpop.f32.mrb[0].mxu0
        %v3368 = vadd.f32 %v2826, %v3367
        %v3369 = vpop.f32.mrb[0].mxu0
        %v3370 = vpop.f32.mrb[0].mxu0
        %v3371 = vadd.f32 %v2826, %v3370
        %v3372 = vpop.f32.mrb[0].mxu0
        %3373 = vmatprep.mubr.bf16.mxu0 0
        %3374 = vmatmul.mubr.bf16.gmra.mrb[0].mxu0 %v3297
        %v3375 = vpop.f32.mrb[0].mxu0
        %v3376 = vadd.f32 %v2826, %v3375
        %v3377 = vpop.f32.mrb[0].mxu0
        %v3378 = vpop.f32.mrb[0].mxu0
        %v3379 = vadd.f32 %v2826, %v3378
        %v3380 = vpop.f32.mrb[0].mxu0
        %3381 = vmatprep.mubr.bf16.mxu0 0
        %3382 = vmatmul.mubr.bf16.gmra.mrb[0].mxu0 %v3298
        %v3383 = vpop.f32.mrb[0].mxu0
        %v3384 = vadd.f32 %v2826, %v3383
        %v3385 = vpop.f32.mrb[0].mxu0
        %v3386 = vpop.f32.mrb[0].mxu0
        %v3387 = vadd.f32 %v2826, %v3386
        %v3388 = vpop.f32.mrb[0].mxu0
        %3389 = vmatprep.mubr.bf16.mxu0 0
        %3390 = vmatmul.mubr.bf16.gmra.mrb[0].mxu0 %v3299
        %v3391 = vpop.f32.mrb[0].mxu0
        %v3392 = vadd.f32 %v2826, %v3391
        %v3393 = vpop.f32.mrb[0].mxu0
        %v3394 = vpop.f32.mrb[0].mxu0
        %v3395 = vadd.f32 %v2826, %v3394
        %v3396 = vpop.f32.mrb[0].mxu0
        %3397 = vmatprep.mubr.bf16.mxu0 0
        %3398 = vmatmul.mubr.bf16.gmra.mrb[0].mxu0 %v3300
        %v3399 = vpop.f32.mrb[0].mxu0
        %v3400 = vadd.f32 %v2826, %v3399
        %v3401 = vpop.f32.mrb[0].mxu0
        %v3402 = vpop.f32.mrb[0].mxu0
        %v3403 = vadd.f32 %v2826, %v3402
        %v3404 = vpop.f32.mrb[0].mxu0
        %3405 = vmatprep.mubr.bf16.mxu0 0
        %3406 = vmatmul.mubr.bf16.gmra.mrb[0].mxu0 %v3301
        %v3407 = vpop.f32.mrb[0].mxu0
        %v3408 = vadd.f32 %v2826, %v3407
        %v3409 = vpop.f32.mrb[0].mxu0
        %v3410 = vpop.f32.mrb[0].mxu0
        %v3411 = vadd.f32 %v2826, %v3410
        %v3412 = vpop.f32.mrb[0].mxu0
        %3413 = vmatprep.mubr.bf16.mxu0 0
        %3414 = vmatmul.mubr.bf16.gmra.mrb[0].mxu0 %v3302
        %v3415 = vpop.f32.mrb[0].mxu0
        %v3416 = vadd.f32 %v2826, %v3415
        %v3417 = vpop.f32.mrb[0].mxu0
        %v3418 = vpop.f32.mrb[0].mxu0
        %v3419 = vadd.f32 %v2826, %v3418
        %v3420 = vpop.f32.mrb[0].mxu0
        %3421 = vmatprep.mubr.bf16.mxu0 0
        %3422 = vmatmul.mubr.bf16.gmra.mrb[0].mxu0 %v3303
        %v3423 = vpop.f32.mrb[0].mxu0
        %v3424 = vadd.f32 %v2826, %v3423
        %v3425 = vpop.f32.mrb[0].mxu0
        %v3426 = vpop.f32.mrb[0].mxu0
        %v3427 = vadd.f32 %v2826, %v3426
        %v3428 = vpop.f32.mrb[0].mxu0
        %3429 = vmatprep.mubr.bf16.mxu0 0
        %3430 = vmatmul.mubr.bf16.gmra.mrb[0].mxu0 %v3304
        %v3431 = vpop.f32.mrb[0].mxu0
        %v3432 = vadd.f32 %v2826, %v3431
        %v3433 = vpop.f32.mrb[0].mxu0
        %v3434 = vpop.f32.mrb[0].mxu0
        %v3435 = vadd.f32 %v2826, %v3434
        %v3436 = vpop.f32.mrb[0].mxu0
        %3437 = vmatprep.mubr.bf16.mxu0 0
        %3438 = vmatmul.mubr.bf16.gmra.mrb[0].mxu0 %v3305
        %v3439 = vpop.f32.mrb[0].mxu0
        %v3440 = vadd.f32 %v2826, %v3439
        %v3441 = vpop.f32.mrb[0].mxu0
        %v3442 = vpop.f32.mrb[0].mxu0
        %v3443 = vadd.f32 %v2826, %v3442
        %v3444 = vpop.f32.mrb[0].mxu0
        %3445 = vmatprep.mubr.bf16.mxu0 0
        %3446 = vmatmul.mubr.bf16.gmra.mrb[0].mxu0 %v3306
        %v3447 = vpop.f32.mrb[0].mxu0
        %v3448 = vadd.f32 %v2826, %v3447
        %v3449 = vpop.f32.mrb[0].mxu0
        %v3450 = vpop.f32.mrb[0].mxu0
        %v3451 = vadd.f32 %v2826, %v3450
        %v3452 = vpop.f32.mrb[0].mxu0
        %3453 = vmatprep.mubr.bf16.mxu0 0
        %3454 = vmatmul.mubr.bf16.gmra.mrb[0].mxu0 %v3307
        %v3455 = vpop.f32.mrb[0].mxu0
        %v3456 = vadd.f32 %v2826, %v3455
        %v3457 = vpop.f32.mrb[0].mxu0
        %v3458 = vpop.f32.mrb[0].mxu0
        %v3459 = vadd.f32 %v2826, %v3458
        %v3460 = vpop.f32.mrb[0].mxu0
        %3461 = vmatprep.mubr.bf16.mxu0 0
        %3462 = vmatmul.mubr.bf16.gmra.mrb[0].mxu0 %v3308
        %v3463 = vpop.f32.mrb[0].mxu0
        %v3464 = vadd.f32 %v2826, %v3463
        %v3465 = vpop.f32.mrb[0].mxu0
        %v3466 = vpop.f32.mrb[0].mxu0
        %v3467 = vadd.f32 %v2826, %v3466
        %v3468 = vpop.f32.mrb[0].mxu0
        %3469 = vdwg.mxu0
        %v3470 = vmax.f32 %v3344, 0.0
        %v3471 = vmax.f32 %v3347, 0.0
        %v3472 = vmax.f32 %v3352, 0.0
        %v3473 = vmax.f32 %v3355, 0.0
        %v3474 = vmax.f32 %v3360, 0.0
        %v3475 = vmax.f32 %v3363, 0.0
        %v3476 = vmax.f32 %v3368, 0.0
        %v3477 = vmax.f32 %v3371, 0.0
        %v3478 = vmax.f32 %v3376, 0.0
        %v3479 = vmax.f32 %v3379, 0.0
        %v3480 = vmax.f32 %v3384, 0.0
        %v3481 = vmax.f32 %v3387, 0.0
        %v3482 = vmax.f32 %v3392, 0.0
        %v3483 = vmax.f32 %v3395, 0.0
        %v3484 = vmax.f32 %v3400, 0.0
        %v3485 = vmax.f32 %v3403, 0.0
        %v3486 = vmax.f32 %v3408, 0.0
        %v3487 = vmax.f32 %v3411, 0.0
        %v3488 = vmax.f32 %v3416, 0.0
        %v3489 = vmax.f32 %v3419, 0.0
        %v3490 = vmax.f32 %v3424, 0.0
        %v3491 = vmax.f32 %v3427, 0.0
        %v3492 = vmax.f32 %v3432, 0.0
        %v3493 = vmax.f32 %v3435, 0.0
        %v3494 = vmax.f32 %v3440, 0.0
        %v3495 = vmax.f32 %v3443, 0.0
        %v3496 = vmax.f32 %v3448, 0.0
        %v3497 = vmax.f32 %v3451, 0.0
        %v3498 = vmax.f32 %v3456, 0.0
        %v3499 = vmax.f32 %v3459, 0.0
        %v3500 = vmax.f32 %v3464, 0.0
        %v3501 = vmax.f32 %v3467, 0.0
        %v3502 = vpack.c.bf16 %v3471, %v3470
        %v3503 = vpack.c.bf16 %v3473, %v3472
        %v3504 = vpack.c.bf16 %v3475, %v3474
        %v3505 = vpack.c.bf16 %v3477, %v3476
        %v3506 = vpack.c.bf16 %v3479, %v3478
        %v3507 = vpack.c.bf16 %v3481, %v3480
        %v3508 = vpack.c.bf16 %v3483, %v3482
        %v3509 = vpack.c.bf16 %v3485, %v3484
        %v3510 = vpack.c.bf16 %v3487, %v3486
        %v3511 = vpack.c.bf16 %v3489, %v3488
        %v3512 = vpack.c.bf16 %v3491, %v3490
        %v3513 = vpack.c.bf16 %v3493, %v3492
        %v3514 = vpack.c.bf16 %v3495, %v3494
        %v3515 = vpack.c.bf16 %v3497, %v3496
        %v3516 = vpack.c.bf16 %v3499, %v3498
        %v3517 = vpack.c.bf16 %v3501, %v3500
        %v3534 = vunpack.c.l.b16 %v3502
        %v3535 = vunpack.c.h.b16 %v3502
        %v3536 = vunpack.c.l.b16 %v3503
        %v3537 = vunpack.c.h.b16 %v3503
        %v3538 = vunpack.c.l.b16 %v3504
        %v3539 = vunpack.c.h.b16 %v3504
        %v3540 = vunpack.c.l.b16 %v3505
        %v3541 = vunpack.c.h.b16 %v3505
        %v3542 = vunpack.c.l.b16 %v3506
        %v3543 = vunpack.c.h.b16 %v3506
        %v3544 = vunpack.c.l.b16 %v3507
        %v3545 = vunpack.c.h.b16 %v3507
        %v3546 = vunpack.c.l.b16 %v3508
        %v3547 = vunpack.c.h.b16 %v3508
        %v3548 = vunpack.c.l.b16 %v3509
        %v3549 = vunpack.c.h.b16 %v3509
        %v3550 = vunpack.c.l.b16 %v3510
        %v3551 = vunpack.c.h.b16 %v3510
        %v3552 = vunpack.c.l.b16 %v3511
        %v3553 = vunpack.c.h.b16 %v3511
        %v3554 = vunpack.c.l.b16 %v3512
        %v3555 = vunpack.c.h.b16 %v3512
        %v3556 = vunpack.c.l.b16 %v3513
        %v3557 = vunpack.c.h.b16 %v3513
        %v3558 = vunpack.c.l.b16 %v3514
        %v3559 = vunpack.c.h.b16 %v3514
        %v3560 = vunpack.c.l.b16 %v3515
        %v3561 = vunpack.c.h.b16 %v3515
        %v3562 = vunpack.c.l.b16 %v3516
        %v3563 = vunpack.c.h.b16 %v3516
        %v3564 = vunpack.c.l.b16 %v3517
        %v3565 = vunpack.c.h.b16 %v3517
        %v3566 = vpack.c.b16 %v3534, %v3534
        %v3567 = vpack.c.b16 %v3535, %v3535
        %v3568 = vpack.c.b16 %v3536, %v3536
        %v3569 = vpack.c.b16 %v3537, %v3537
        %v3570 = vpack.c.b16 %v3538, %v3538
        %v3571 = vpack.c.b16 %v3539, %v3539
        %v3572 = vpack.c.b16 %v3540, %v3540
        %v3573 = vpack.c.b16 %v3541, %v3541
        %v3574 = vpack.c.b16 %v3542, %v3542
        %v3575 = vpack.c.b16 %v3543, %v3543
        %v3576 = vpack.c.b16 %v3544, %v3544
        %v3577 = vpack.c.b16 %v3545, %v3545
        %v3578 = vpack.c.b16 %v3546, %v3546
        %v3579 = vpack.c.b16 %v3547, %v3547
        %v3580 = vpack.c.b16 %v3548, %v3548
        %v3581 = vpack.c.b16 %v3549, %v3549
        %v3582 = vpack.c.b16 %v3550, %v3550
        %v3583 = vpack.c.b16 %v3551, %v3551
        %v3584 = vpack.c.b16 %v3552, %v3552
        %v3585 = vpack.c.b16 %v3553, %v3553
        %v3586 = vpack.c.b16 %v3554, %v3554
        %v3587 = vpack.c.b16 %v3555, %v3555
        %v3588 = vpack.c.b16 %v3556, %v3556
        %v3589 = vpack.c.b16 %v3557, %v3557
        %v3590 = vpack.c.b16 %v3558, %v3558
        %v3591 = vpack.c.b16 %v3559, %v3559
        %v3592 = vpack.c.b16 %v3560, %v3560
        %v3593 = vpack.c.b16 %v3561, %v3561
        %v3594 = vpack.c.b16 %v3562, %v3562
        %v3595 = vpack.c.b16 %v3563, %v3563
        %v3596 = vpack.c.b16 %v3564, %v3564
        %v3597 = vpack.c.b16 %v3565, %v3565
        %3630 = vst [vmem:[%s471 + $0x4] sm:$0xf] %v3566
        %3631 = vst [vmem:[%s471 + $0xc] sm:$0xf] %v3567
        %3632 = vst [vmem:[%s471 + $0x24] sm:$0xf] %v3568
        %3633 = vst [vmem:[%s471 + $0x2c] sm:$0xf] %v3569
        %3634 = vst [vmem:[%s471 + $0x44] sm:$0xf] %v3570
        %3635 = vst [vmem:[%s471 + $0x4c] sm:$0xf] %v3571
        %3636 = vst [vmem:[%s471 + $0x64] sm:$0xf] %v3572
        %3637 = vst [vmem:[%s471 + $0x6c] sm:$0xf] %v3573
        %3638 = vst [vmem:[%s471 + $0x84] sm:$0xf] %v3574
        %3639 = vst [vmem:[%s471 + $0x8c] sm:$0xf] %v3575
        %3640 = vst [vmem:[%s471 + $0xa4] sm:$0xf] %v3576
        %3641 = vst [vmem:[%s471 + $0xac] sm:$0xf] %v3577
        %3642 = vst [vmem:[%s471 + $0xc4] sm:$0xf] %v3578
        %3643 = vst [vmem:[%s471 + $0xcc] sm:$0xf] %v3579
        %3644 = vst [vmem:[%s471 + $0xe4] sm:$0xf] %v3580
        %3645 = vst [vmem:[%s471 + $0xec] sm:$0xf] %v3581
        %3646 = vst [vmem:[%s471 + $0x104] sm:$0xf] %v3582
        %3647 = vst [vmem:[%s471 + $0x10c] sm:$0xf] %v3583
        %3648 = vst [vmem:[%s471 + $0x124] sm:$0xf] %v3584
        %3649 = vst [vmem:[%s471 + $0x12c] sm:$0xf] %v3585
        %3650 = vst [vmem:[%s471 + $0x144] sm:$0xf] %v3586
        %3651 = vst [vmem:[%s471 + $0x14c] sm:$0xf] %v3587
        %3652 = vst [vmem:[%s471 + $0x164] sm:$0xf] %v3588
        %3653 = vst [vmem:[%s471 + $0x16c] sm:$0xf] %v3589
        %3654 = vst [vmem:[%s471 + $0x184] sm:$0xf] %v3590
        %3655 = vst [vmem:[%s471 + $0x18c] sm:$0xf] %v3591
        %3656 = vst [vmem:[%s471 + $0x1a4] sm:$0xf] %v3592
        %3657 = vst [vmem:[%s471 + $0x1ac] sm:$0xf] %v3593
        %3658 = vst [vmem:[%s471 + $0x1c4] sm:$0xf] %v3594
        %3659 = vst [vmem:[%s471 + $0x1cc] sm:$0xf] %v3595
        %3660 = vst [vmem:[%s471 + $0x1e4] sm:$0xf] %v3596
        %3661 = vst [vmem:[%s471 + $0x1ec] sm:$0xf] %v3597
        %v3662 = vadd.f32 %v2462, %v2740
        %v3663 = vadd.f32 %v2463, %v2740
        %v3664 = vadd.f32 %v2464, %v2740
        %v3665 = vadd.f32 %v2465, %v2740
        %v3666 = vadd.f32 %v2466, %v2740
        %v3667 = vadd.f32 %v2467, %v2740
        %v3668 = vadd.f32 %v2468, %v2740
        %v3669 = vadd.f32 %v2469, %v2740
        %v3670 = vadd.f32 %v2470, %v2740
        %v3671 = vadd.f32 %v2471, %v2740
        %v3672 = vadd.f32 %v2472, %v2740
        %v3673 = vadd.f32 %v2473, %v2740
        %v3674 = vadd.f32 %v2474, %v2740
        %v3675 = vadd.f32 %v2475, %v2740
        %v3676 = vadd.f32 %v2476, %v2740
        %v3677 = vadd.f32 %v2477, %v2740
        %v3678 = vadd.f32 %v2478, %v2740
        %v3679 = vadd.f32 %v2479, %v2740
        %v3680 = vadd.f32 %v2480, %v2740
        %v3681 = vadd.f32 %v2481, %v2740
        %v3682 = vadd.f32 %v2482, %v2740
        %v3683 = vadd.f32 %v2483, %v2740
        %v3684 = vadd.f32 %v2484, %v2740
        %v3685 = vadd.f32 %v2485, %v2740
        %v3686 = vadd.f32 %v2486, %v2740
        %v3687 = vadd.f32 %v2487, %v2740
        %v3688 = vadd.f32 %v2488, %v2740
        %v3689 = vadd.f32 %v2489, %v2740
        %v3690 = vadd.f32 %v2490, %v2740
        %v3691 = vadd.f32 %v2491, %v2740
        %v3692 = vadd.f32 %v2492, %v2740
        %v3693 = vadd.f32 %v2493, %v2740
        %v3694 = vmax.f32 %v3662, 0.0
        %v3695 = vmax.f32 %v3663, 0.0
        %v3696 = vmax.f32 %v3664, 0.0
        %v3697 = vmax.f32 %v3665, 0.0
        %v3698 = vmax.f32 %v3666, 0.0
        %v3699 = vmax.f32 %v3667, 0.0
        %v3700 = vmax.f32 %v3668, 0.0
        %v3701 = vmax.f32 %v3669, 0.0
        %v3702 = vmax.f32 %v3670, 0.0
        %v3703 = vmax.f32 %v3671, 0.0
        %v3704 = vmax.f32 %v3672, 0.0
        %v3705 = vmax.f32 %v3673, 0.0
        %v3706 = vmax.f32 %v3674, 0.0
        %v3707 = vmax.f32 %v3675, 0.0
        %v3708 = vmax.f32 %v3676, 0.0
        %v3709 = vmax.f32 %v3677, 0.0
        %v3710 = vmax.f32 %v3678, 0.0
        %v3711 = vmax.f32 %v3679, 0.0
        %v3712 = vmax.f32 %v3680, 0.0
        %v3713 = vmax.f32 %v3681, 0.0
        %v3714 = vmax.f32 %v3682, 0.0
        %v3715 = vmax.f32 %v3683, 0.0
        %v3716 = vmax.f32 %v3684, 0.0
        %v3717 = vmax.f32 %v3685, 0.0
        %v3718 = vmax.f32 %v3686, 0.0
        %v3719 = vmax.f32 %v3687, 0.0
        %v3720 = vmax.f32 %v3688, 0.0
        %v3721 = vmax.f32 %v3689, 0.0
        %v3722 = vmax.f32 %v3690, 0.0
        %v3723 = vmax.f32 %v3691, 0.0
        %v3724 = vmax.f32 %v3692, 0.0
        %v3725 = vmax.f32 %v3693, 0.0
        %v3726 = vpack.c.bf16 %v3695, %v3694
        %v3727 = vpack.c.bf16 %v3697, %v3696
        %v3728 = vpack.c.bf16 %v3699, %v3698
        %v3729 = vpack.c.bf16 %v3701, %v3700
        %v3730 = vpack.c.bf16 %v3703, %v3702
        %v3731 = vpack.c.bf16 %v3705, %v3704
        %v3732 = vpack.c.bf16 %v3707, %v3706
        %v3733 = vpack.c.bf16 %v3709, %v3708
        %v3734 = vpack.c.bf16 %v3711, %v3710
        %v3735 = vpack.c.bf16 %v3713, %v3712
        %v3736 = vpack.c.bf16 %v3715, %v3714
        %v3737 = vpack.c.bf16 %v3717, %v3716
        %v3738 = vpack.c.bf16 %v3719, %v3718
        %v3739 = vpack.c.bf16 %v3721, %v3720
        %v3740 = vpack.c.bf16 %v3723, %v3722
        %v3741 = vpack.c.bf16 %v3725, %v3724
        %3742 = vmatprep.subr.bf16.mxu0 0
        %3743 = vmatpush1.bf16.msra.mxu0 %v2860
        %3744 = vmatprep.subr.bf16.mxu0 0
        %3745 = vmatpush1.bf16.msra.mxu0 %v2861
        %3746 = vmatprep.subr.bf16.mxu0 0
        %3747 = vmatpush1.bf16.msra.mxu0 %v2862
        %3748 = vmatprep.subr.bf16.mxu0 0
        %3749 = vmatpush1.bf16.msra.mxu0 %v2863
        %3750 = vmatprep.subr.bf16.mxu0 0
        %3751 = vmatpush1.bf16.msra.mxu0 %v2864
        %3752 = vmatprep.subr.bf16.mxu0 0
        %3753 = vmatpush1.bf16.msra.mxu0 %v2865
        %3754 = vmatprep.subr.bf16.mxu0 0
        %3755 = vmatpush1.bf16.msra.mxu0 %v2866
        %3756 = vmatprep.subr.bf16.mxu0 0
        %3757 = vmatpush1.bf16.msra.mxu0 %v2867
        %3758 = vmatprep.subr.bf16.mxu0 0
        %3759 = vmatpush1.bf16.msra.mxu0 0
        %3760 = vmatprep.subr.bf16.mxu0 0
        %3761 = vmatpush1.bf16.msra.mxu0 0
        %3762 = vmatprep.subr.bf16.mxu0 0
        %3763 = vmatpush1.bf16.msra.mxu0 0
        %3764 = vmatprep.subr.bf16.mxu0 0
        %3765 = vmatpush1.bf16.msra.mxu0 0
        %3766 = vmatprep.subr.bf16.mxu0 0
        %3767 = vmatpush1.bf16.msra.mxu0 0
        %3768 = vmatprep.subr.bf16.mxu0 0
        %3769 = vmatpush1.bf16.msra.mxu0 0
        %3770 = vmatprep.subr.bf16.mxu0 0
        %3771 = vmatpush1.bf16.msra.mxu0 0
        %3772 = vmatprep.subr.bf16.mxu0 0
        %3773 = vmatpush1.bf16.msra.mxu0 0
        %3774 = vmatprep.mubr.bf16.mxu0 0
        %3775 = vmatmul.mubr.bf16.gmra.mrb[0].mxu0 %v3726
        %v3776 = vpop.f32.mrb[0].mxu0
        %v3777 = vadd.f32 %v2826, %v3776
        %v3778 = vpop.f32.mrb[0].mxu0
        %v3779 = vpop.f32.mrb[0].mxu0
        %v3780 = vadd.f32 %v2826, %v3779
        %v3781 = vpop.f32.mrb[0].mxu0
        %3782 = vmatprep.mubr.bf16.mxu0 0
        %3783 = vmatmul.mubr.bf16.gmra.mrb[0].mxu0 %v3727
        %v3784 = vpop.f32.mrb[0].mxu0
        %v3785 = vadd.f32 %v2826, %v3784
        %v3786 = vpop.f32.mrb[0].mxu0
        %v3787 = vpop.f32.mrb[0].mxu0
        %v3788 = vadd.f32 %v2826, %v3787
        %v3789 = vpop.f32.mrb[0].mxu0
        %3790 = vmatprep.mubr.bf16.mxu0 0
        %3791 = vmatmul.mubr.bf16.gmra.mrb[0].mxu0 %v3728
        %v3792 = vpop.f32.mrb[0].mxu0
        %v3793 = vadd.f32 %v2826, %v3792
        %v3794 = vpop.f32.mrb[0].mxu0
        %v3795 = vpop.f32.mrb[0].mxu0
        %v3796 = vadd.f32 %v2826, %v3795
        %v3797 = vpop.f32.mrb[0].mxu0
        %3798 = vmatprep.mubr.bf16.mxu0 0
        %3799 = vmatmul.mubr.bf16.gmra.mrb[0].mxu0 %v3729
        %v3800 = vpop.f32.mrb[0].mxu0
        %v3801 = vadd.f32 %v2826, %v3800
        %v3802 = vpop.f32.mrb[0].mxu0
        %v3803 = vpop.f32.mrb[0].mxu0
        %v3804 = vadd.f32 %v2826, %v3803
        %v3805 = vpop.f32.mrb[0].mxu0
        %3806 = vmatprep.mubr.bf16.mxu0 0
        %3807 = vmatmul.mubr.bf16.gmra.mrb[0].mxu0 %v3730
        %v3808 = vpop.f32.mrb[0].mxu0
        %v3809 = vadd.f32 %v2826, %v3808
        %v3810 = vpop.f32.mrb[0].mxu0
        %v3811 = vpop.f32.mrb[0].mxu0
        %v3812 = vadd.f32 %v2826, %v3811
        %v3813 = vpop.f32.mrb[0].mxu0
        %3814 = vmatprep.mubr.bf16.mxu0 0
        %3815 = vmatmul.mubr.bf16.gmra.mrb[0].mxu0 %v3731
        %v3816 = vpop.f32.mrb[0].mxu0
        %v3817 = vadd.f32 %v2826, %v3816
        %v3818 = vpop.f32.mrb[0].mxu0
        %v3819 = vpop.f32.mrb[0].mxu0
        %v3820 = vadd.f32 %v2826, %v3819
        %v3821 = vpop.f32.mrb[0].mxu0
        %3822 = vmatprep.mubr.bf16.mxu0 0
        %3823 = vmatmul.mubr.bf16.gmra.mrb[0].mxu0 %v3732
        %v3824 = vpop.f32.mrb[0].mxu0
        %v3825 = vadd.f32 %v2826, %v3824
        %v3826 = vpop.f32.mrb[0].mxu0
        %v3827 = vpop.f32.mrb[0].mxu0
        %v3828 = vadd.f32 %v2826, %v3827
        %v3829 = vpop.f32.mrb[0].mxu0
        %3830 = vmatprep.mubr.bf16.mxu0 0
        %3831 = vmatmul.mubr.bf16.gmra.mrb[0].mxu0 %v3733
        %v3832 = vpop.f32.mrb[0].mxu0
        %v3833 = vadd.f32 %v2826, %v3832
        %v3834 = vpop.f32.mrb[0].mxu0
        %v3835 = vpop.f32.mrb[0].mxu0
        %v3836 = vadd.f32 %v2826, %v3835
        %v3837 = vpop.f32.mrb[0].mxu0
        %3838 = vmatprep.mubr.bf16.mxu0 0
        %3839 = vmatmul.mubr.bf16.gmra.mrb[0].mxu0 %v3734
        %v3840 = vpop.f32.mrb[0].mxu0
        %v3841 = vadd.f32 %v2826, %v3840
        %v3842 = vpop.f32.mrb[0].mxu0
        %v3843 = vpop.f32.mrb[0].mxu0
        %v3844 = vadd.f32 %v2826, %v3843
        %v3845 = vpop.f32.mrb[0].mxu0
        %3846 = vmatprep.mubr.bf16.mxu0 0
        %3847 = vmatmul.mubr.bf16.gmra.mrb[0].mxu0 %v3735
        %v3848 = vpop.f32.mrb[0].mxu0
        %v3849 = vadd.f32 %v2826, %v3848
        %v3850 = vpop.f32.mrb[0].mxu0
        %v3851 = vpop.f32.mrb[0].mxu0
        %v3852 = vadd.f32 %v2826, %v3851
        %v3853 = vpop.f32.mrb[0].mxu0
        %3854 = vmatprep.mubr.bf16.mxu0 0
        %3855 = vmatmul.mubr.bf16.gmra.mrb[0].mxu0 %v3736
        %v3856 = vpop.f32.mrb[0].mxu0
        %v3857 = vadd.f32 %v2826, %v3856
        %v3858 = vpop.f32.mrb[0].mxu0
        %v3859 = vpop.f32.mrb[0].mxu0
        %v3860 = vadd.f32 %v2826, %v3859
        %v3861 = vpop.f32.mrb[0].mxu0
        %3862 = vmatprep.mubr.bf16.mxu0 0
        %3863 = vmatmul.mubr.bf16.gmra.mrb[0].mxu0 %v3737
        %v3864 = vpop.f32.mrb[0].mxu0
        %v3865 = vadd.f32 %v2826, %v3864
        %v3866 = vpop.f32.mrb[0].mxu0
        %v3867 = vpop.f32.mrb[0].mxu0
        %v3868 = vadd.f32 %v2826, %v3867
        %v3869 = vpop.f32.mrb[0].mxu0
        %3870 = vmatprep.mubr.bf16.mxu0 0
        %3871 = vmatmul.mubr.bf16.gmra.mrb[0].mxu0 %v3738
        %v3872 = vpop.f32.mrb[0].mxu0
        %v3873 = vadd.f32 %v2826, %v3872
        %v3874 = vpop.f32.mrb[0].mxu0
        %v3875 = vpop.f32.mrb[0].mxu0
        %v3876 = vadd.f32 %v2826, %v3875
        %v3877 = vpop.f32.mrb[0].mxu0
        %3878 = vmatprep.mubr.bf16.mxu0 0
        %3879 = vmatmul.mubr.bf16.gmra.mrb[0].mxu0 %v3739
        %v3880 = vpop.f32.mrb[0].mxu0
        %v3881 = vadd.f32 %v2826, %v3880
        %v3882 = vpop.f32.mrb[0].mxu0
        %v3883 = vpop.f32.mrb[0].mxu0
        %v3884 = vadd.f32 %v2826, %v3883
        %v3885 = vpop.f32.mrb[0].mxu0
        %3886 = vmatprep.mubr.bf16.mxu0 0
        %3887 = vmatmul.mubr.bf16.gmra.mrb[0].mxu0 %v3740
        %v3888 = vpop.f32.mrb[0].mxu0
        %v3889 = vadd.f32 %v2826, %v3888
        %v3890 = vpop.f32.mrb[0].mxu0
        %v3891 = vpop.f32.mrb[0].mxu0
        %v3892 = vadd.f32 %v2826, %v3891
        %v3893 = vpop.f32.mrb[0].mxu0
        %3894 = vmatprep.mubr.bf16.mxu0 0
        %3895 = vmatmul.mubr.bf16.gmra.mrb[0].mxu0 %v3741
        %v3896 = vpop.f32.mrb[0].mxu0
        %v3897 = vadd.f32 %v2826, %v3896
        %v3898 = vpop.f32.mrb[0].mxu0
        %v3899 = vpop.f32.mrb[0].mxu0
        %v3900 = vadd.f32 %v2826, %v3899
        %v3901 = vpop.f32.mrb[0].mxu0
        %3902 = vdwg.mxu0
        %v3903 = vmax.f32 %v3777, 0.0
        %v3904 = vmax.f32 %v3780, 0.0
        %v3905 = vmax.f32 %v3785, 0.0
        %v3906 = vmax.f32 %v3788, 0.0
        %v3907 = vmax.f32 %v3793, 0.0
        %v3908 = vmax.f32 %v3796, 0.0
        %v3909 = vmax.f32 %v3801, 0.0
        %v3910 = vmax.f32 %v3804, 0.0
        %v3911 = vmax.f32 %v3809, 0.0
        %v3912 = vmax.f32 %v3812, 0.0
        %v3913 = vmax.f32 %v3817, 0.0
        %v3914 = vmax.f32 %v3820, 0.0
        %v3915 = vmax.f32 %v3825, 0.0
        %v3916 = vmax.f32 %v3828, 0.0
        %v3917 = vmax.f32 %v3833, 0.0
        %v3918 = vmax.f32 %v3836, 0.0
        %v3919 = vmax.f32 %v3841, 0.0
        %v3920 = vmax.f32 %v3844, 0.0
        %v3921 = vmax.f32 %v3849, 0.0
        %v3922 = vmax.f32 %v3852, 0.0
        %v3923 = vmax.f32 %v3857, 0.0
        %v3924 = vmax.f32 %v3860, 0.0
        %v3925 = vmax.f32 %v3865, 0.0
        %v3926 = vmax.f32 %v3868, 0.0
        %v3927 = vmax.f32 %v3873, 0.0
        %v3928 = vmax.f32 %v3876, 0.0
        %v3929 = vmax.f32 %v3881, 0.0
        %v3930 = vmax.f32 %v3884, 0.0
        %v3931 = vmax.f32 %v3889, 0.0
        %v3932 = vmax.f32 %v3892, 0.0
        %v3933 = vmax.f32 %v3897, 0.0
        %v3934 = vmax.f32 %v3900, 0.0
        %v3935 = vpack.c.bf16 %v3904, %v3903
        %v3936 = vpack.c.bf16 %v3906, %v3905
        %v3937 = vpack.c.bf16 %v3908, %v3907
        %v3938 = vpack.c.bf16 %v3910, %v3909
        %v3939 = vpack.c.bf16 %v3912, %v3911
        %v3940 = vpack.c.bf16 %v3914, %v3913
        %v3941 = vpack.c.bf16 %v3916, %v3915
        %v3942 = vpack.c.bf16 %v3918, %v3917
        %v3943 = vpack.c.bf16 %v3920, %v3919
        %v3944 = vpack.c.bf16 %v3922, %v3921
        %v3945 = vpack.c.bf16 %v3924, %v3923
        %v3946 = vpack.c.bf16 %v3926, %v3925
        %v3947 = vpack.c.bf16 %v3928, %v3927
        %v3948 = vpack.c.bf16 %v3930, %v3929
        %v3949 = vpack.c.bf16 %v3932, %v3931
        %v3950 = vpack.c.bf16 %v3934, %v3933
        %v3967 = vunpack.c.l.b16 %v3935
        %v3968 = vunpack.c.h.b16 %v3935
        %v3969 = vunpack.c.l.b16 %v3936
        %v3970 = vunpack.c.h.b16 %v3936
        %v3971 = vunpack.c.l.b16 %v3937
        %v3972 = vunpack.c.h.b16 %v3937
        %v3973 = vunpack.c.l.b16 %v3938
        %v3974 = vunpack.c.h.b16 %v3938
        %v3975 = vunpack.c.l.b16 %v3939
        %v3976 = vunpack.c.h.b16 %v3939
        %v3977 = vunpack.c.l.b16 %v3940
        %v3978 = vunpack.c.h.b16 %v3940
        %v3979 = vunpack.c.l.b16 %v3941
        %v3980 = vunpack.c.h.b16 %v3941
        %v3981 = vunpack.c.l.b16 %v3942
        %v3982 = vunpack.c.h.b16 %v3942
        %v3983 = vunpack.c.l.b16 %v3943
        %v3984 = vunpack.c.h.b16 %v3943
        %v3985 = vunpack.c.l.b16 %v3944
        %v3986 = vunpack.c.h.b16 %v3944
        %v3987 = vunpack.c.l.b16 %v3945
        %v3988 = vunpack.c.h.b16 %v3945
        %v3989 = vunpack.c.l.b16 %v3946
        %v3990 = vunpack.c.h.b16 %v3946
        %v3991 = vunpack.c.l.b16 %v3947
        %v3992 = vunpack.c.h.b16 %v3947
        %v3993 = vunpack.c.l.b16 %v3948
        %v3994 = vunpack.c.h.b16 %v3948
        %v3995 = vunpack.c.l.b16 %v3949
        %v3996 = vunpack.c.h.b16 %v3949
        %v3997 = vunpack.c.l.b16 %v3950
        %v3998 = vunpack.c.h.b16 %v3950
        %v3999 = vpack.c.b16 %v3967, %v3967
        %v4000 = vpack.c.b16 %v3968, %v3968
        %v4001 = vpack.c.b16 %v3969, %v3969
        %v4002 = vpack.c.b16 %v3970, %v3970
        %v4003 = vpack.c.b16 %v3971, %v3971
        %v4004 = vpack.c.b16 %v3972, %v3972
        %v4005 = vpack.c.b16 %v3973, %v3973
        %v4006 = vpack.c.b16 %v3974, %v3974
        %v4007 = vpack.c.b16 %v3975, %v3975
        %v4008 = vpack.c.b16 %v3976, %v3976
        %v4009 = vpack.c.b16 %v3977, %v3977
        %v4010 = vpack.c.b16 %v3978, %v3978
        %v4011 = vpack.c.b16 %v3979, %v3979
        %v4012 = vpack.c.b16 %v3980, %v3980
        %v4013 = vpack.c.b16 %v3981, %v3981
        %v4014 = vpack.c.b16 %v3982, %v3982
        %v4015 = vpack.c.b16 %v3983, %v3983
        %v4016 = vpack.c.b16 %v3984, %v3984
        %v4017 = vpack.c.b16 %v3985, %v3985
        %v4018 = vpack.c.b16 %v3986, %v3986
        %v4019 = vpack.c.b16 %v3987, %v3987
        %v4020 = vpack.c.b16 %v3988, %v3988
        %v4021 = vpack.c.b16 %v3989, %v3989
        %v4022 = vpack.c.b16 %v3990, %v3990
        %v4023 = vpack.c.b16 %v3991, %v3991
        %v4024 = vpack.c.b16 %v3992, %v3992
        %v4025 = vpack.c.b16 %v3993, %v3993
        %v4026 = vpack.c.b16 %v3994, %v3994
        %v4027 = vpack.c.b16 %v3995, %v3995
        %v4028 = vpack.c.b16 %v3996, %v3996
        %v4029 = vpack.c.b16 %v3997, %v3997
        %v4030 = vpack.c.b16 %v3998, %v3998
        %s4063 = scalar_lea.vmem %s471, 16 [#allocation13]
        %4064 = vst [vmem:[%s4063] sm:$0xf] %v3999
        %4065 = vst [vmem:[%s4063 + $0x8] sm:$0xf] %v4000
        %4066 = vst [vmem:[%s4063 + $0x20] sm:$0xf] %v4001
        %4067 = vst [vmem:[%s4063 + $0x28] sm:$0xf] %v4002
        %4068 = vst [vmem:[%s4063 + $0x40] sm:$0xf] %v4003
        %4069 = vst [vmem:[%s4063 + $0x48] sm:$0xf] %v4004
        %4070 = vst [vmem:[%s4063 + $0x60] sm:$0xf] %v4005
        %4071 = vst [vmem:[%s4063 + $0x68] sm:$0xf] %v4006
        %4072 = vst [vmem:[%s4063 + $0x80] sm:$0xf] %v4007
        %4073 = vst [vmem:[%s4063 + $0x88] sm:$0xf] %v4008
        %4074 = vst [vmem:[%s4063 + $0xa0] sm:$0xf] %v4009
        %4075 = vst [vmem:[%s4063 + $0xa8] sm:$0xf] %v4010
        %4076 = vst [vmem:[%s4063 + $0xc0] sm:$0xf] %v4011
        %4077 = vst [vmem:[%s4063 + $0xc8] sm:$0xf] %v4012
        %4078 = vst [vmem:[%s4063 + $0xe0] sm:$0xf] %v4013
        %4079 = vst [vmem:[%s4063 + $0xe8] sm:$0xf] %v4014
        %4080 = vst [vmem:[%s4063 + $0x100] sm:$0xf] %v4015
        %4081 = vst [vmem:[%s4063 + $0x108] sm:$0xf] %v4016
        %4082 = vst [vmem:[%s4063 + $0x120] sm:$0xf] %v4017
        %4083 = vst [vmem:[%s4063 + $0x128] sm:$0xf] %v4018
        %4084 = vst [vmem:[%s4063 + $0x140] sm:$0xf] %v4019
        %4085 = vst [vmem:[%s4063 + $0x148] sm:$0xf] %v4020
        %4086 = vst [vmem:[%s4063 + $0x160] sm:$0xf] %v4021
        %4087 = vst [vmem:[%s4063 + $0x168] sm:$0xf] %v4022
        %4088 = vst [vmem:[%s4063 + $0x180] sm:$0xf] %v4023
        %4089 = vst [vmem:[%s4063 + $0x188] sm:$0xf] %v4024
        %4090 = vst [vmem:[%s4063 + $0x1a0] sm:$0xf] %v4025
        %4091 = vst [vmem:[%s4063 + $0x1a8] sm:$0xf] %v4026
        %4092 = vst [vmem:[%s4063 + $0x1c0] sm:$0xf] %v4027
        %4093 = vst [vmem:[%s4063 + $0x1c8] sm:$0xf] %v4028
        %4094 = vst [vmem:[%s4063 + $0x1e0] sm:$0xf] %v4029
        %4095 = vst [vmem:[%s4063 + $0x1e8] sm:$0xf] %v4030
        %v4096 = vadd.f32 %v2686, %v2740
        %v4097 = vadd.f32 %v2687, %v2740
        %v4098 = vadd.f32 %v2688, %v2740
        %v4099 = vadd.f32 %v2689, %v2740
        %v4100 = vadd.f32 %v2690, %v2740
        %v4101 = vadd.f32 %v2691, %v2740
        %v4102 = vadd.f32 %v2692, %v2740
        %v4103 = vadd.f32 %v2693, %v2740
        %v4104 = vadd.f32 %v2694, %v2740
        %v4105 = vadd.f32 %v2695, %v2740
        %v4106 = vadd.f32 %v2696, %v2740
        %v4107 = vadd.f32 %v2697, %v2740
        %v4108 = vadd.f32 %v2698, %v2740
        %v4109 = vadd.f32 %v2699, %v2740
        %v4110 = vadd.f32 %v2700, %v2740
        %v4111 = vadd.f32 %v2701, %v2740
        %v4112 = vadd.f32 %v2702, %v2740
        %v4113 = vadd.f32 %v2703, %v2740
        %v4114 = vadd.f32 %v2704, %v2740
        %v4115 = vadd.f32 %v2705, %v2740
        %v4116 = vadd.f32 %v2706, %v2740
        %v4117 = vadd.f32 %v2707, %v2740
        %v4118 = vadd.f32 %v2708, %v2740
        %v4119 = vadd.f32 %v2709, %v2740
        %v4120 = vadd.f32 %v2710, %v2740
        %v4121 = vadd.f32 %v2711, %v2740
        %v4122 = vadd.f32 %v2712, %v2740
        %v4123 = vadd.f32 %v2713, %v2740
        %v4124 = vadd.f32 %v2714, %v2740
        %v4125 = vadd.f32 %v2715, %v2740
        %v4126 = vadd.f32 %v2716, %v2740
        %v4127 = vadd.f32 %v2717, %v2740
        %v4128 = vmax.f32 %v4096, 0.0
        %v4129 = vmax.f32 %v4097, 0.0
        %v4130 = vmax.f32 %v4098, 0.0
        %v4131 = vmax.f32 %v4099, 0.0
        %v4132 = vmax.f32 %v4100, 0.0
        %v4133 = vmax.f32 %v4101, 0.0
        %v4134 = vmax.f32 %v4102, 0.0
        %v4135 = vmax.f32 %v4103, 0.0
        %v4136 = vmax.f32 %v4104, 0.0
        %v4137 = vmax.f32 %v4105, 0.0
        %v4138 = vmax.f32 %v4106, 0.0
        %v4139 = vmax.f32 %v4107, 0.0
        %v4140 = vmax.f32 %v4108, 0.0
        %v4141 = vmax.f32 %v4109, 0.0
        %v4142 = vmax.f32 %v4110, 0.0
        %v4143 = vmax.f32 %v4111, 0.0
        %v4144 = vmax.f32 %v4112, 0.0
        %v4145 = vmax.f32 %v4113, 0.0
        %v4146 = vmax.f32 %v4114, 0.0
        %v4147 = vmax.f32 %v4115, 0.0
        %v4148 = vmax.f32 %v4116, 0.0
        %v4149 = vmax.f32 %v4117, 0.0
        %v4150 = vmax.f32 %v4118, 0.0
        %v4151 = vmax.f32 %v4119, 0.0
        %v4152 = vmax.f32 %v4120, 0.0
        %v4153 = vmax.f32 %v4121, 0.0
        %v4154 = vmax.f32 %v4122, 0.0
        %v4155 = vmax.f32 %v4123, 0.0
        %v4156 = vmax.f32 %v4124, 0.0
        %v4157 = vmax.f32 %v4125, 0.0
        %v4158 = vmax.f32 %v4126, 0.0
        %v4159 = vmax.f32 %v4127, 0.0
        %v4160 = vpack.c.bf16 %v4129, %v4128
        %v4161 = vpack.c.bf16 %v4131, %v4130
        %v4162 = vpack.c.bf16 %v4133, %v4132
        %v4163 = vpack.c.bf16 %v4135, %v4134
        %v4164 = vpack.c.bf16 %v4137, %v4136
        %v4165 = vpack.c.bf16 %v4139, %v4138
        %v4166 = vpack.c.bf16 %v4141, %v4140
        %v4167 = vpack.c.bf16 %v4143, %v4142
        %v4168 = vpack.c.bf16 %v4145, %v4144
        %v4169 = vpack.c.bf16 %v4147, %v4146
        %v4170 = vpack.c.bf16 %v4149, %v4148
        %v4171 = vpack.c.bf16 %v4151, %v4150
        %v4172 = vpack.c.bf16 %v4153, %v4152
        %v4173 = vpack.c.bf16 %v4155, %v4154
        %v4174 = vpack.c.bf16 %v4157, %v4156
        %v4175 = vpack.c.bf16 %v4159, %v4158
        %4176 = vmatprep.subr.bf16.mxu0 0
        %4177 = vmatpush1.bf16.msra.mxu0 %v2860
        %4178 = vmatprep.subr.bf16.mxu0 0
        %4179 = vmatpush1.bf16.msra.mxu0 %v2861
        %4180 = vmatprep.subr.bf16.mxu0 0
        %4181 = vmatpush1.bf16.msra.mxu0 %v2862
        %4182 = vmatprep.subr.bf16.mxu0 0
        %4183 = vmatpush1.bf16.msra.mxu0 %v2863
        %4184 = vmatprep.subr.bf16.mxu0 0
        %4185 = vmatpush1.bf16.msra.mxu0 %v2864
        %4186 = vmatprep.subr.bf16.mxu0 0
        %4187 = vmatpush1.bf16.msra.mxu0 %v2865
        %4188 = vmatprep.subr.bf16.mxu0 0
        %4189 = vmatpush1.bf16.msra.mxu0 %v2866
        %4190 = vmatprep.subr.bf16.mxu0 0
        %4191 = vmatpush1.bf16.msra.mxu0 %v2867
        %4192 = vmatprep.subr.bf16.mxu0 0
        %4193 = vmatpush1.bf16.msra.mxu0 0
        %4194 = vmatprep.subr.bf16.mxu0 0
        %4195 = vmatpush1.bf16.msra.mxu0 0
        %4196 = vmatprep.subr.bf16.mxu0 0
        %4197 = vmatpush1.bf16.msra.mxu0 0
        %4198 = vmatprep.subr.bf16.mxu0 0
        %4199 = vmatpush1.bf16.msra.mxu0 0
        %4200 = vmatprep.subr.bf16.mxu0 0
        %4201 = vmatpush1.bf16.msra.mxu0 0
        %4202 = vmatprep.subr.bf16.mxu0 0
        %4203 = vmatpush1.bf16.msra.mxu0 0
        %4204 = vmatprep.subr.bf16.mxu0 0
        %4205 = vmatpush1.bf16.msra.mxu0 0
        %4206 = vmatprep.subr.bf16.mxu0 0
        %4207 = vmatpush1.bf16.msra.mxu0 0
        %4208 = vmatprep.mubr.bf16.mxu0 0
        %4209 = vmatmul.mubr.bf16.gmra.mrb[0].mxu0 %v4160
        %v4210 = vpop.f32.mrb[0].mxu0
        %v4211 = vadd.f32 %v2826, %v4210
        %v4212 = vpop.f32.mrb[0].mxu0
        %v4213 = vpop.f32.mrb[0].mxu0
        %v4214 = vadd.f32 %v2826, %v4213
        %v4215 = vpop.f32.mrb[0].mxu0
        %4216 = vmatprep.mubr.bf16.mxu0 0
        %4217 = vmatmul.mubr.bf16.gmra.mrb[0].mxu0 %v4161
        %v4218 = vpop.f32.mrb[0].mxu0
        %v4219 = vadd.f32 %v2826, %v4218
        %v4220 = vpop.f32.mrb[0].mxu0
        %v4221 = vpop.f32.mrb[0].mxu0
        %v4222 = vadd.f32 %v2826, %v4221
        %v4223 = vpop.f32.mrb[0].mxu0
        %4224 = vmatprep.mubr.bf16.mxu0 0
        %4225 = vmatmul.mubr.bf16.gmra.mrb[0].mxu0 %v4162
        %v4226 = vpop.f32.mrb[0].mxu0
        %v4227 = vadd.f32 %v2826, %v4226
        %v4228 = vpop.f32.mrb[0].mxu0
        %v4229 = vpop.f32.mrb[0].mxu0
        %v4230 = vadd.f32 %v2826, %v4229
        %v4231 = vpop.f32.mrb[0].mxu0
        %4232 = vmatprep.mubr.bf16.mxu0 0
        %4233 = vmatmul.mubr.bf16.gmra.mrb[0].mxu0 %v4163
        %v4234 = vpop.f32.mrb[0].mxu0
        %v4235 = vadd.f32 %v2826, %v4234
        %v4236 = vpop.f32.mrb[0].mxu0
        %v4237 = vpop.f32.mrb[0].mxu0
        %v4238 = vadd.f32 %v2826, %v4237
        %v4239 = vpop.f32.mrb[0].mxu0
        %4240 = vmatprep.mubr.bf16.mxu0 0
        %4241 = vmatmul.mubr.bf16.gmra.mrb[0].mxu0 %v4164
        %v4242 = vpop.f32.mrb[0].mxu0
        %v4243 = vadd.f32 %v2826, %v4242
        %v4244 = vpop.f32.mrb[0].mxu0
        %v4245 = vpop.f32.mrb[0].mxu0
        %v4246 = vadd.f32 %v2826, %v4245
        %v4247 = vpop.f32.mrb[0].mxu0
        %4248 = vmatprep.mubr.bf16.mxu0 0
        %4249 = vmatmul.mubr.bf16.gmra.mrb[0].mxu0 %v4165
        %v4250 = vpop.f32.mrb[0].mxu0
        %v4251 = vadd.f32 %v2826, %v4250
        %v4252 = vpop.f32.mrb[0].mxu0
        %v4253 = vpop.f32.mrb[0].mxu0
        %v4254 = vadd.f32 %v2826, %v4253
        %v4255 = vpop.f32.mrb[0].mxu0
        %4256 = vmatprep.mubr.bf16.mxu0 0
        %4257 = vmatmul.mubr.bf16.gmra.mrb[0].mxu0 %v4166
        %v4258 = vpop.f32.mrb[0].mxu0
        %v4259 = vadd.f32 %v2826, %v4258
        %v4260 = vpop.f32.mrb[0].mxu0
        %v4261 = vpop.f32.mrb[0].mxu0
        %v4262 = vadd.f32 %v2826, %v4261
        %v4263 = vpop.f32.mrb[0].mxu0
        %4264 = vmatprep.mubr.bf16.mxu0 0
        %4265 = vmatmul.mubr.bf16.gmra.mrb[0].mxu0 %v4167
        %v4266 = vpop.f32.mrb[0].mxu0
        %v4267 = vadd.f32 %v2826, %v4266
        %v4268 = vpop.f32.mrb[0].mxu0
        %v4269 = vpop.f32.mrb[0].mxu0
        %v4270 = vadd.f32 %v2826, %v4269
        %v4271 = vpop.f32.mrb[0].mxu0
        %4272 = vmatprep.mubr.bf16.mxu0 0
        %4273 = vmatmul.mubr.bf16.gmra.mrb[0].mxu0 %v4168
        %v4274 = vpop.f32.mrb[0].mxu0
        %v4275 = vadd.f32 %v2826, %v4274
        %v4276 = vpop.f32.mrb[0].mxu0
        %v4277 = vpop.f32.mrb[0].mxu0
        %v4278 = vadd.f32 %v2826, %v4277
        %v4279 = vpop.f32.mrb[0].mxu0
        %4280 = vmatprep.mubr.bf16.mxu0 0
        %4281 = vmatmul.mubr.bf16.gmra.mrb[0].mxu0 %v4169
        %v4282 = vpop.f32.mrb[0].mxu0
        %v4283 = vadd.f32 %v2826, %v4282
        %v4284 = vpop.f32.mrb[0].mxu0
        %v4285 = vpop.f32.mrb[0].mxu0
        %v4286 = vadd.f32 %v2826, %v4285
        %v4287 = vpop.f32.mrb[0].mxu0
        %4288 = vmatprep.mubr.bf16.mxu0 0
        %4289 = vmatmul.mubr.bf16.gmra.mrb[0].mxu0 %v4170
        %v4290 = vpop.f32.mrb[0].mxu0
        %v4291 = vadd.f32 %v2826, %v4290
        %v4292 = vpop.f32.mrb[0].mxu0
        %v4293 = vpop.f32.mrb[0].mxu0
        %v4294 = vadd.f32 %v2826, %v4293
        %v4295 = vpop.f32.mrb[0].mxu0
        %4296 = vmatprep.mubr.bf16.mxu0 0
        %4297 = vmatmul.mubr.bf16.gmra.mrb[0].mxu0 %v4171
        %v4298 = vpop.f32.mrb[0].mxu0
        %v4299 = vadd.f32 %v2826, %v4298
        %v4300 = vpop.f32.mrb[0].mxu0
        %v4301 = vpop.f32.mrb[0].mxu0
        %v4302 = vadd.f32 %v2826, %v4301
        %v4303 = vpop.f32.mrb[0].mxu0
        %4304 = vmatprep.mubr.bf16.mxu0 0
        %4305 = vmatmul.mubr.bf16.gmra.mrb[0].mxu0 %v4172
        %v4306 = vpop.f32.mrb[0].mxu0
        %v4307 = vadd.f32 %v2826, %v4306
        %v4308 = vpop.f32.mrb[0].mxu0
        %v4309 = vpop.f32.mrb[0].mxu0
        %v4310 = vadd.f32 %v2826, %v4309
        %v4311 = vpop.f32.mrb[0].mxu0
        %4312 = vmatprep.mubr.bf16.mxu0 0
        %4313 = vmatmul.mubr.bf16.gmra.mrb[0].mxu0 %v4173
        %v4314 = vpop.f32.mrb[0].mxu0
        %v4315 = vadd.f32 %v2826, %v4314
        %v4316 = vpop.f32.mrb[0].mxu0
        %v4317 = vpop.f32.mrb[0].mxu0
        %v4318 = vadd.f32 %v2826, %v4317
        %v4319 = vpop.f32.mrb[0].mxu0
        %4320 = vmatprep.mubr.bf16.mxu0 0
        %4321 = vmatmul.mubr.bf16.gmra.mrb[0].mxu0 %v4174
        %v4322 = vpop.f32.mrb[0].mxu0
        %v4323 = vadd.f32 %v2826, %v4322
        %v4324 = vpop.f32.mrb[0].mxu0
        %v4325 = vpop.f32.mrb[0].mxu0
        %v4326 = vadd.f32 %v2826, %v4325
        %v4327 = vpop.f32.mrb[0].mxu0
        %4328 = vmatprep.mubr.bf16.mxu0 0
        %4329 = vmatmul.mubr.bf16.gmra.mrb[0].mxu0 %v4175
        %v4330 = vpop.f32.mrb[0].mxu0
        %v4331 = vadd.f32 %v2826, %v4330
        %v4332 = vpop.f32.mrb[0].mxu0
        %v4333 = vpop.f32.mrb[0].mxu0
        %v4334 = vadd.f32 %v2826, %v4333
        %v4335 = vpop.f32.mrb[0].mxu0
        %4336 = vdwg.mxu0
        %v4337 = vmax.f32 %v4211, 0.0
        %v4338 = vmax.f32 %v4214, 0.0
        %v4339 = vmax.f32 %v4219, 0.0
        %v4340 = vmax.f32 %v4222, 0.0
        %v4341 = vmax.f32 %v4227, 0.0
        %v4342 = vmax.f32 %v4230, 0.0
        %v4343 = vmax.f32 %v4235, 0.0
        %v4344 = vmax.f32 %v4238, 0.0
        %v4345 = vmax.f32 %v4243, 0.0
        %v4346 = vmax.f32 %v4246, 0.0
        %v4347 = vmax.f32 %v4251, 0.0
        %v4348 = vmax.f32 %v4254, 0.0
        %v4349 = vmax.f32 %v4259, 0.0
        %v4350 = vmax.f32 %v4262, 0.0
        %v4351 = vmax.f32 %v4267, 0.0
        %v4352 = vmax.f32 %v4270, 0.0
        %v4353 = vmax.f32 %v4275, 0.0
        %v4354 = vmax.f32 %v4278, 0.0
        %v4355 = vmax.f32 %v4283, 0.0
        %v4356 = vmax.f32 %v4286, 0.0
        %v4357 = vmax.f32 %v4291, 0.0
        %v4358 = vmax.f32 %v4294, 0.0
        %v4359 = vmax.f32 %v4299, 0.0
        %v4360 = vmax.f32 %v4302, 0.0
        %v4361 = vmax.f32 %v4307, 0.0
        %v4362 = vmax.f32 %v4310, 0.0
        %v4363 = vmax.f32 %v4315, 0.0
        %v4364 = vmax.f32 %v4318, 0.0
        %v4365 = vmax.f32 %v4323, 0.0
        %v4366 = vmax.f32 %v4326, 0.0
        %v4367 = vmax.f32 %v4331, 0.0
        %v4368 = vmax.f32 %v4334, 0.0
        %v4369 = vpack.c.bf16 %v4338, %v4337
        %v4370 = vpack.c.bf16 %v4340, %v4339
        %v4371 = vpack.c.bf16 %v4342, %v4341
        %v4372 = vpack.c.bf16 %v4344, %v4343
        %v4373 = vpack.c.bf16 %v4346, %v4345
        %v4374 = vpack.c.bf16 %v4348, %v4347
        %v4375 = vpack.c.bf16 %v4350, %v4349
        %v4376 = vpack.c.bf16 %v4352, %v4351
        %v4377 = vpack.c.bf16 %v4354, %v4353
        %v4378 = vpack.c.bf16 %v4356, %v4355
        %v4379 = vpack.c.bf16 %v4358, %v4357
        %v4380 = vpack.c.bf16 %v4360, %v4359
        %v4381 = vpack.c.bf16 %v4362, %v4361
        %v4382 = vpack.c.bf16 %v4364, %v4363
        %v4383 = vpack.c.bf16 %v4366, %v4365
        %v4384 = vpack.c.bf16 %v4368, %v4367
        %v4401 = vunpack.c.l.b16 %v4369
        %v4402 = vunpack.c.h.b16 %v4369
        %v4403 = vunpack.c.l.b16 %v4370
        %v4404 = vunpack.c.h.b16 %v4370
        %v4405 = vunpack.c.l.b16 %v4371
        %v4406 = vunpack.c.h.b16 %v4371
        %v4407 = vunpack.c.l.b16 %v4372
        %v4408 = vunpack.c.h.b16 %v4372
        %v4409 = vunpack.c.l.b16 %v4373
        %v4410 = vunpack.c.h.b16 %v4373
        %v4411 = vunpack.c.l.b16 %v4374
        %v4412 = vunpack.c.h.b16 %v4374
        %v4413 = vunpack.c.l.b16 %v4375
        %v4414 = vunpack.c.h.b16 %v4375
        %v4415 = vunpack.c.l.b16 %v4376
        %v4416 = vunpack.c.h.b16 %v4376
        %v4417 = vunpack.c.l.b16 %v4377
        %v4418 = vunpack.c.h.b16 %v4377
        %v4419 = vunpack.c.l.b16 %v4378
        %v4420 = vunpack.c.h.b16 %v4378
        %v4421 = vunpack.c.l.b16 %v4379
        %v4422 = vunpack.c.h.b16 %v4379
        %v4423 = vunpack.c.l.b16 %v4380
        %v4424 = vunpack.c.h.b16 %v4380
        %v4425 = vunpack.c.l.b16 %v4381
        %v4426 = vunpack.c.h.b16 %v4381
        %v4427 = vunpack.c.l.b16 %v4382
        %v4428 = vunpack.c.h.b16 %v4382
        %v4429 = vunpack.c.l.b16 %v4383
        %v4430 = vunpack.c.h.b16 %v4383
        %v4431 = vunpack.c.l.b16 %v4384
        %v4432 = vunpack.c.h.b16 %v4384
        %v4433 = vpack.c.b16 %v4401, %v4401
        %v4434 = vpack.c.b16 %v4402, %v4402
        %v4435 = vpack.c.b16 %v4403, %v4403
        %v4436 = vpack.c.b16 %v4404, %v4404
        %v4437 = vpack.c.b16 %v4405, %v4405
        %v4438 = vpack.c.b16 %v4406, %v4406
        %v4439 = vpack.c.b16 %v4407, %v4407
        %v4440 = vpack.c.b16 %v4408, %v4408
        %v4441 = vpack.c.b16 %v4409, %v4409
        %v4442 = vpack.c.b16 %v4410, %v4410
        %v4443 = vpack.c.b16 %v4411, %v4411
        %v4444 = vpack.c.b16 %v4412, %v4412
        %v4445 = vpack.c.b16 %v4413, %v4413
        %v4446 = vpack.c.b16 %v4414, %v4414
        %v4447 = vpack.c.b16 %v4415, %v4415
        %v4448 = vpack.c.b16 %v4416, %v4416
        %v4449 = vpack.c.b16 %v4417, %v4417
        %v4450 = vpack.c.b16 %v4418, %v4418
        %v4451 = vpack.c.b16 %v4419, %v4419
        %v4452 = vpack.c.b16 %v4420, %v4420
        %v4453 = vpack.c.b16 %v4421, %v4421
        %v4454 = vpack.c.b16 %v4422, %v4422
        %v4455 = vpack.c.b16 %v4423, %v4423
        %v4456 = vpack.c.b16 %v4424, %v4424
        %v4457 = vpack.c.b16 %v4425, %v4425
        %v4458 = vpack.c.b16 %v4426, %v4426
        %v4459 = vpack.c.b16 %v4427, %v4427
        %v4460 = vpack.c.b16 %v4428, %v4428
        %v4461 = vpack.c.b16 %v4429, %v4429
        %v4462 = vpack.c.b16 %v4430, %v4430
        %v4463 = vpack.c.b16 %v4431, %v4431
        %v4464 = vpack.c.b16 %v4432, %v4432
        %4497 = vst [vmem:[%s4063 + $0x4] sm:$0xf] %v4433
        %4498 = vst [vmem:[%s4063 + $0xc] sm:$0xf] %v4434
        %4499 = vst [vmem:[%s4063 + $0x24] sm:$0xf] %v4435
        %4500 = vst [vmem:[%s4063 + $0x2c] sm:$0xf] %v4436
        %4501 = vst [vmem:[%s4063 + $0x44] sm:$0xf] %v4437
        %4502 = vst [vmem:[%s4063 + $0x4c] sm:$0xf] %v4438
        %4503 = vst [vmem:[%s4063 + $0x64] sm:$0xf] %v4439
        %4504 = vst [vmem:[%s4063 + $0x6c] sm:$0xf] %v4440
        %4505 = vst [vmem:[%s4063 + $0x84] sm:$0xf] %v4441
        %4506 = vst [vmem:[%s4063 + $0x8c] sm:$0xf] %v4442
        %4507 = vst [vmem:[%s4063 + $0xa4] sm:$0xf] %v4443
        %4508 = vst [vmem:[%s4063 + $0xac] sm:$0xf] %v4444
        %4509 = vst [vmem:[%s4063 + $0xc4] sm:$0xf] %v4445
        %4510 = vst [vmem:[%s4063 + $0xcc] sm:$0xf] %v4446
        %4511 = vst [vmem:[%s4063 + $0xe4] sm:$0xf] %v4447
        %4512 = vst [vmem:[%s4063 + $0xec] sm:$0xf] %v4448
        %4513 = vst [vmem:[%s4063 + $0x104] sm:$0xf] %v4449
        %4514 = vst [vmem:[%s4063 + $0x10c] sm:$0xf] %v4450
        %4515 = vst [vmem:[%s4063 + $0x124] sm:$0xf] %v4451
        %4516 = vst [vmem:[%s4063 + $0x12c] sm:$0xf] %v4452
        %4517 = vst [vmem:[%s4063 + $0x144] sm:$0xf] %v4453
        %4518 = vst [vmem:[%s4063 + $0x14c] sm:$0xf] %v4454
        %4519 = vst [vmem:[%s4063 + $0x164] sm:$0xf] %v4455
        %4520 = vst [vmem:[%s4063 + $0x16c] sm:$0xf] %v4456
        %4521 = vst [vmem:[%s4063 + $0x184] sm:$0xf] %v4457
        %4522 = vst [vmem:[%s4063 + $0x18c] sm:$0xf] %v4458
        %4523 = vst [vmem:[%s4063 + $0x1a4] sm:$0xf] %v4459
        %4524 = vst [vmem:[%s4063 + $0x1ac] sm:$0xf] %v4460
        %4525 = vst [vmem:[%s4063 + $0x1c4] sm:$0xf] %v4461
        %4526 = vst [vmem:[%s4063 + $0x1cc] sm:$0xf] %v4462
        %4527 = vst [vmem:[%s4063 + $0x1e4] sm:$0xf] %v4463
        %4528 = vst [vmem:[%s4063 + $0x1ec] sm:$0xf] %v4464
        %s4529 = sand.u32 %s256, 1
        %s4530 = scalar_lea.sflag [#allocation4], %s4529
        %s4531 = sand.u32 %s256, 1
        %s4532 = smul.addr %s4531, 512
        %s4533 = scalar_lea.vmem [#allocation13], %s4532
        // Predicated region
        $region81: #{tpu_custom_call.1} parent=55 // pred_check
          %p4534 = pneg %p266
        $region82: #{tpu_custom_call.1} parent=55 // pred_check_branch
          %4536 = sbr.rel (%p4534) target = $region84
        $region83: #{tpu_custom_call.1} parent=55 // pred_region
          %s4537 = smul.u32 16, %s36
          %s4539 = ssub.s32 8192, 8192
          %4540 = vsyncadd %s4530, %s4539
          %s4541 = smul.addr %s4537, 8
          %s4542 = smul.addr %s35, 128
          %s4543 = sadd.s32 %s4541, %s4542
          %s4544 = smul.addr %s4543, 64
          %s4545 = scalar_lea.hbm %s9, %s4544
          %s4546 = sshll.u32 %s4533, 4
          %s4547 = int_to_ptr.vmem [resolvable:$true] %s4546
          %4552 = dma.vmem_to_hbm [thread:$0]  %s4547, 8192, %s4545, %s4530, 128, 128, 8
        $region84: #{tpu_custom_call.1} parent=55 // pred_fallthru
          _
      $region56: #{tpu_custom_call.1} parent=5 // pred_fallthru
        _
      %p4553 = scmp.le.s32.totalorder 2, %s26
      // Predicated region
      $region85: #{tpu_custom_call.1} parent=5 // pred_check
        %p4554 = pneg %p4553
      $region86: #{tpu_custom_call.1} parent=5 // pred_check_branch
        %4556 = sbr.rel (%p4554) target = $region88
      $region87: #{tpu_custom_call.1} parent=5 // pred_region
        %s4557 = ssub.s32 %s26, 2
        // Predicated region
        $region89: #{tpu_custom_call.1} parent=87 // pred_check
          %p4558 = pneg %p272
        $region90: #{tpu_custom_call.1} parent=87 // pred_check_branch
          %4560 = sbr.rel (%p4558) target = $region92
        $region91: #{tpu_custom_call.1} parent=87 // pred_region
          %s4561 = sand.u32 %s257, 1
          %s4562 = scalar_lea.sflag [#allocation4], %s4561
          %s4563 = sand.u32 %s257, 1
          %s4564 = smul.addr %s4563, 512
          %s4565 = scalar_lea.vmem [#allocation13], %s4564
          %4566 = dma.done %s4562, 8192
        $region92: #{tpu_custom_call.1} parent=87 // pred_fallthru
          _
      $region88: #{tpu_custom_call.1} parent=5 // pred_fallthru
        _
    $region6: #{tpu_custom_call.1} parent=1 // loop_footer
      %s30 = sadd.s32 1, %s26
    $region7: #{tpu_custom_call.1} parent=1 // loop_footer_branch
      %25 = sbr.rel target = $region3
    $region8: #{tpu_custom_call.1} parent=1 // loop_exit
      _
    %4567 = vsyncpa [#allocation3], 1
    %s4568 = scalar_lea.sflag [#allocation3], 1
    %4569 = vsyncpa %s4568, 1
    %4570 = vsyncpa [#allocation6], 1
    %s4571 = scalar_lea.sflag [#allocation6], 1
    %4572 = vsyncpa %s4571, 1
    %4573 = vsyncpa [#allocation9], 1
    %4574 = vsyncpa [#allocation12], 1
    %4575 = vsyncpa [#allocation4], 1
    %s4576 = scalar_lea.sflag [#allocation4], 1
    %4577 = vsyncpa %s4576, 1

</llo_original>
